<compile_context>
chip_gen: v7x
topology: tpu7x:2x2x1
jax: 0.10.0
libtpu: 0.0.40
codegen_flags: <defaults>
</compile_context>

<pallas_src>
import numpy as np
import jax
import jax.numpy as jnp
from jax import lax
from jax.experimental import pallas as pl
from jax.experimental.pallas import tpu as pltpu


def _round_up(x, m):
    return ((x + m - 1) // m) * m


def _pick_chunk(T, Bp, max_rows=512):
    """Largest divisor of T such that the per-chunk row count TC*Bp <= max_rows."""
    cap = max(1, max_rows // Bp)
    tc = 1
    for d in range(1, min(T, cap) + 1):
        if T % d == 0:
            tc = d
    return tc


# ----------------------------------------------------------------------------
# Fused Pallas kernel: (actor LSTM || critic LSTM) + both MLP heads, per chunk
# ----------------------------------------------------------------------------
def _make_kernel(TC, Bp, HH):
    """Kernel processing one chunk of TC timesteps; (h,c) carried in scratch."""

    def kernel(obs_ref, h0_ref, c0_ref, wih_ref, whh_ref, bl_ref,
               w1_ref, b1_ref, w2_ref, b2_ref, w3_ref, b3_ref,
               out_ref, hT_ref, cT_ref,
               h_carry, c_carry, gx_scr, h_scr):
        ci = pl.program_id(0)

        # Initialize the cross-chunk carry from the incoming state.
        @pl.when(ci == 0)
        def _():
            h_carry[...] = h0_ref[...]
            c_carry[...] = c0_ref[...]

        # (1) Input projection + fused bias for ALL steps of this chunk:
        #     one batched matmul off the serial chain.
        gx_scr[...] = (jnp.dot(obs_ref[...], wih_ref[...],
                               preferred_element_type=jnp.float32)
                       + bl_ref[...])

        # (2) Serial recurrence: only h @ W_hh + gated elementwise per step.
        #     Gate block layout: [i | f | g | o], each HH lanes wide, with
        #     actor in lanes [0,H) and critic in lanes [H,2H) of every block.
        def step(t, carry):
            h, c = carry
            r = pl.multiple_of(t * Bp, Bp)
            gates = gx_scr[pl.ds(r, Bp), :] + jnp.dot(
                h, whh_ref[...], preferred_element_type=jnp.float32)
            i = jax.nn.sigmoid(gates[:, 0 * HH:1 * HH])
            f = jax.nn.sigmoid(gates[:, 1 * HH:2 * HH])
            g = jnp.tanh(gates[:, 2 * HH:3 * HH])
            o = jax.nn.sigmoid(gates[:, 3 * HH:4 * HH])
            c_new = f * c + i * g
            h_new = o * jnp.tanh(c_new)
            h_scr[pl.ds(r, Bp), :] = h_new
            return h_new, c_new

        h_fin, c_fin = lax.fori_loop(0, TC, step,
                                     (h_carry[...], c_carry[...]),
                                     unroll=min(TC, 8))
        h_carry[...] = h_fin
        c_carry[...] = c_fin
        hT_ref[...] = h_fin        # resident output block; last chunk wins
        cT_ref[...] = c_fin

        # (3) Actor+critic heads: block-diagonal batched matmuls over the
        #     chunk's TC*Bp rows (bounded vreg/VMEM pressure per chunk).
        h_all = h_scr[...]
        z1 = jnp.maximum(
            jnp.dot(h_all, w1_ref[...], preferred_element_type=jnp.float32)
            + b1_ref[...], 0.0)
        z2 = jnp.maximum(
            jnp.dot(z1, w2_ref[...], preferred_element_type=jnp.float32)
            + b2_ref[...], 0.0)
        out_ref[...] = (jnp.dot(z2, w3_ref[...],
                                preferred_element_type=jnp.float32)
                        + b3_ref[...])

    return kernel


def _fused_forward(obs2d, h0, c0, packed, T, TC, Bp, HH, out_w):
    D = obs2d.shape[-1]
    G = 4 * HH
    Z = packed["w2"].shape[0]
    nchunks = T // TC
    rows = TC * Bp

    # Per-grid-step VMEM footprint estimate (double-buffered ins/outs +
    # weights + scratch), with margin; capped safely below physical VMEM.
    est = 4 * (
        2 * rows * (D + out_w)                             # obs + out chunks
        + 2 * 2 * 3 * Bp * HH                              # h0/c0/hT/cT blocks
        + 2 * (D * G + HH * G + G + HH * Z + 2 * Z + Z * Z + Z * out_w + out_w)
        + 2 * Bp * HH + rows * G + rows * HH               # scratch
    )
    vmem_limit = int(min(max(2 * est, 8 << 20), 64 << 20))

    full = lambda i: (0, 0)
    chunk = lambda i: (i, 0)

    grid_spec = pltpu.PrefetchScalarGridSpec(
        num_scalar_prefetch=0,
        grid=(nchunks,),
        in_specs=[
            pl.BlockSpec((rows, D), chunk),                # obs chunk
            pl.BlockSpec((Bp, HH), full),                  # h0
            pl.BlockSpec((Bp, HH), full),                  # c0
            pl.BlockSpec(packed["wih"].shape, full),
            pl.BlockSpec(packed["whh"].shape, full),
            pl.BlockSpec(packed["bl"].shape, full),
            pl.BlockSpec(packed["w1"].shape, full),
            pl.BlockSpec(packed["b1"].shape, full),
            pl.BlockSpec(packed["w2"].shape, full),
            pl.BlockSpec(packed["b2"].shape, full),
            pl.BlockSpec(packed["w3"].shape, full),
            pl.BlockSpec(packed["b3"].shape, full),
        ],
        out_specs=(
            pl.BlockSpec((rows, out_w), chunk),            # logits|value slab
            pl.BlockSpec((Bp, HH), full),                  # final h
            pl.BlockSpec((Bp, HH), full),                  # final c
        ),
        scratch_shapes=[
            pltpu.VMEM((Bp, HH), jnp.float32),             # h carry (x-chunk)
            pltpu.VMEM((Bp, HH), jnp.float32),             # c carry (x-chunk)
            pltpu.VMEM((rows, G), jnp.float32),            # x-projection chunk
            pltpu.VMEM((rows, HH), jnp.float32),           # hidden-state chunk
        ],
    )

    return pl.pallas_call(
        _make_kernel(TC, Bp, HH),
        out_shape=(
            jax.ShapeDtypeStruct((T * Bp, out_w), jnp.float32),
            jax.ShapeDtypeStruct((Bp, HH), jnp.float32),
            jax.ShapeDtypeStruct((Bp, HH), jnp.float32),
        ),
        grid_spec=grid_spec,
        compiler_params=pltpu.CompilerParams(
            dimension_semantics=("arbitrary",),
            vmem_limit_bytes=vmem_limit),
    )(obs2d, h0, c0,
      packed["wih"], packed["whh"], packed["bl"],
      packed["w1"], packed["b1"], packed["w2"], packed["b2"],
      packed["w3"], packed["b3"])


# ----------------------------------------------------------------------------
# Parameter construction (deterministic, PyTorch-default-style uniform init)
# ----------------------------------------------------------------------------
def _init_linear(key, in_dim, out_dim):
    k1, k2 = jax.random.split(key)
    bound = 1.0 / np.sqrt(in_dim)
    w = jax.random.uniform(k1, (in_dim, out_dim), jnp.float32, -bound, bound)
    b = jax.random.uniform(k2, (1, out_dim), jnp.float32, -bound, bound)
    return w, b


def _init_lstm(key, in_dim, hidden):
    k1, k2, k3, k4 = jax.random.split(key, 4)
    bound = 1.0 / np.sqrt(hidden)
    # Stored transposed relative to PyTorch (weight_ih_l0 is (4H, D) there).
    wih = jax.random.uniform(k1, (in_dim, 4 * hidden), jnp.float32, -bound, bound)
    whh = jax.random.uniform(k2, (hidden, 4 * hidden), jnp.float32, -bound, bound)
    b_ih = jax.random.uniform(k3, (1, 4 * hidden), jnp.float32, -bound, bound)
    b_hh = jax.random.uniform(k4, (1, 4 * hidden), jnp.float32, -bound, bound)
    return wih, whh, b_ih + b_hh


def _init_mlp(key, in_dim, hidden, out_dim):
    k1, k2, k3 = jax.random.split(key, 3)
    w1, b1 = _init_linear(k1, in_dim, hidden)
    w2, b2 = _init_linear(k2, hidden, hidden)
    w3, b3 = _init_linear(k3, hidden, out_dim)
    return w1, b1, w2, b2, w3, b3


def _pack_fused_params(actor_lstm, actor_mlp, critic_lstm, critic_mlp,
                       obs_dim, H, HA, HC, A):
    """Interleaved lane packing of actor+critic into one block-diagonal set.

    Combined hidden block: HH = round_up(2H, 128); actor occupies lanes [0,H),
    critic lanes [H,2H). Each of the 4 gate blocks (i,f,g,o) is HH lanes wide
    with the same actor/critic interleave, so all gating elementwise ops act
    on full 128-lane vregs and the recurrent matmul is (HH, 4*HH).
    Any padded lanes (only when 2H < HH) stay exactly zero because the padded
    wih/whh/bias columns and the padded h0/c0 lanes are zero
    (sigmoid(0)*tanh(0) = 0 invariant); for the default H=64 there are none.
    """
    HH = _round_up(2 * H, 128)
    G = 4 * HH
    HAp = _round_up(HA, 128)
    HCp = _round_up(HC, 128)
    Z = HAp + HCp
    out_w = _round_up(A + 1, 128)            # lane-dense output slab
    D = obs_dim

    wih_a, whh_a, bl_a = [np.asarray(x, np.float32) for x in actor_lstm]
    wih_c, whh_c, bl_c = [np.asarray(x, np.float32) for x in critic_lstm]
    w1a, b1a, w2a, b2a, w3a, b3a = [np.asarray(x, np.float32) for x in actor_mlp]
    w1c, b1c, w2c, b2c, w3c, b3c = [np.asarray(x, np.float32) for x in critic_mlp]

    wih = np.zeros((D, G), np.float32)
    whh = np.zeros((HH, G), np.float32)
    bl = np.zeros((1, G), np.float32)
    for k in range(4):                       # gate order i, f, g, o
        c0 = k * HH
        wih[:, c0:c0 + H] = wih_a[:, k * H:(k + 1) * H]
        wih[:, c0 + H:c0 + 2 * H] = wih_c[:, k * H:(k + 1) * H]
        whh[0:H, c0:c0 + H] = whh_a[:, k * H:(k + 1) * H]
        whh[H:2 * H, c0 + H:c0 + 2 * H] = whh_c[:, k * H:(k + 1) * H]
        bl[0, c0:c0 + H] = bl_a[0, k * H:(k + 1) * H]
        bl[0, c0 + H:c0 + 2 * H] = bl_c[0, k * H:(k + 1) * H]

    w1 = np.zeros((HH, Z), np.float32)
    w1[0:H, 0:HA] = w1a
    w1[H:2 * H, HAp:HAp + HC] = w1c
    b1 = np.zeros((1, Z), np.float32)
    b1[0, 0:HA] = b1a[0]
    b1[0, HAp:HAp + HC] = b1c[0]

    w2 = np.zeros((Z, Z), np.float32)
    w2[0:HA, 0:HA] = w2a
    w2[HAp:HAp + HC, HAp:HAp + HC] = w2c
    b2 = np.zeros((1, Z), np.float32)
    b2[0, 0:HA] = b2a[0]
    b2[0, HAp:HAp + HC] = b2c[0]

    w3 = np.zeros((Z, out_w), np.float32)
    w3[0:HA, 0:A] = w3a                      # actor logits -> cols [0, A)
    w3[HAp:HAp + HC, A:A + 1] = w3c          # critic value -> col A
    b3 = np.zeros((1, out_w), np.float32)
    b3[0, 0:A] = b3a[0]
    b3[0, A] = b3c[0, 0]

    packed = dict(
        wih=jnp.asarray(wih), whh=jnp.asarray(whh), bl=jnp.asarray(bl),
        w1=jnp.asarray(w1), b1=jnp.asarray(b1),
        w2=jnp.asarray(w2), b2=jnp.asarray(b2),
        w3=jnp.asarray(w3), b3=jnp.asarray(b3),
    )
    dims = dict(HH=HH, G=G, HAp=HAp, HCp=HCp, Z=Z, out_w=out_w)
    return packed, dims


class RecurrentPPOAgentPallas:
    def __init__(self, observation_dim, action_dim, lstm_hidden_size=64,
                 actor_hidden_size=128, critic_hidden_size=128, num_envs=1,
                 max_rows_per_chunk=512, key=jax.random.PRNGKey(0)):
        self.observation_dim = observation_dim
        self.action_dim = action_dim
        self.lstm_hidden_size = lstm_hidden_size
        self.num_envs = num_envs
        self.max_rows_per_chunk = max_rows_per_chunk
        ka, kal, kc, kcv = jax.random.split(key, 4)
        # actor_pre_lstm_hidden_size / critic_pre_lstm_hidden_size default to
        # None -> Flatten(start_dim=2), lstm_input_size = observation_dim.
        self.actor_lstm = _init_lstm(ka, observation_dim, lstm_hidden_size)
        self.actor_mlp = _init_mlp(kal, lstm_hidden_size, actor_hidden_size,
                                   action_dim)
        self.critic_lstm = _init_lstm(kc, observation_dim, lstm_hidden_size)
        self.critic_mlp = _init_mlp(kcv, lstm_hidden_size, critic_hidden_size, 1)

        self._packed, self._dims = _pack_fused_params(
            self.actor_lstm, self.actor_mlp, self.critic_lstm, self.critic_mlp,
            observation_dim, lstm_hidden_size, actor_hidden_size,
            critic_hidden_size, action_dim)

    def reset_hidden_states(self):
        z = jnp.zeros((1, self.num_envs, self.lstm_hidden_size), jnp.float32)
        return ((z, z), (z, z))

    def forward(self, obs, state):
        # Flatten(start_dim=2): (T, B, *obs_shape) -> (T, B, obs_dim)
        T, B = obs.shape[0], obs.shape[1]
        obs = obs.reshape(T, B, -1).astype(jnp.float32)
        D = obs.shape[-1]
        # NOTE: obs feature dim is kept as-is (D=obs_dim, last axis); pad/pack
        # it to a multiple of 128 only if observation_dim becomes non-trivial.
        H = self.lstm_hidden_size
        HH = self._dims["HH"]
        out_w = self._dims["out_w"]
        A = self.action_dim
        Bp = _round_up(B, 8)                           # sublane-aligned batch
        TC = _pick_chunk(T, Bp, self.max_rows_per_chunk)

        (ah, ac), (ch, cc) = state
        h0 = jnp.zeros((Bp, HH), jnp.float32)
        h0 = h0.at[:B, :H].set(ah[0]).at[:B, H:2 * H].set(ch[0])
        c0 = jnp.zeros((Bp, HH), jnp.float32)
        c0 = c0.at[:B, :H].set(ac[0]).at[:B, H:2 * H].set(cc[0])

        obs_p = jnp.zeros((T, Bp, D), jnp.float32).at[:, :B, :].set(obs)
        obs2d = obs_p.reshape(T * Bp, D)

        out2d, hT, cT = _fused_forward(obs2d, h0, c0, self._packed,
                                       T, TC, Bp, HH, out_w)

        out3 = out2d.reshape(T, Bp, out_w)
        logits = out3[:, :B, :A]
        values = out3[:, :B, A:A + 1]
        actor_state = (hT[:B, :H][None], cT[:B, :H][None])          # (1, B, H)
        critic_state = (hT[:B, H:2 * H][None], cT[:B, H:2 * H][None])
        return logits, values, (actor_state, critic_state)


# ----------------------------------------------------------------------------
# Pure-JAX reference (mirrors PyTorch semantics) for correctness check
# ----------------------------------------------------------------------------
def _branch_ref(obs, h0, c0, lstm_params, mlp_params):
    wih, whh, bl = lstm_params
    w1, b1, w2, b2, w3, b3 = mlp_params
    H = h0.shape[-1]

    def step(carry, x_t):
        h, c = carry
        gates = x_t @ wih + h @ whh + bl
        i = jax.nn.sigmoid(gates[:, 0 * H:1 * H])
        f = jax.nn.sigmoid(gates[:, 1 * H:2 * H])
        g = jnp.tanh(gates[:, 2 * H:3 * H])
        o = jax.nn.sigmoid(gates[:, 3 * H:4 * H])
        c = f * c + i * g
        h = o * jnp.tanh(c)
        return (h, c), h

    (hT, cT), hs = lax.scan(step, (h0, c0), obs)
    z1 = jnp.maximum(hs @ w1 + b1, 0.0)
    z2 = jnp.maximum(z1 @ w2 + b2, 0.0)
    return z2 @ w3 + b3, hT, cT


if __name__ == "__main__":
    T, B = 8, 2               # seq_len, num_envs
    obs_dim, action_dim = 16, 6
    H = 64                    # lstm_hidden_size

    agent = RecurrentPPOAgentPallas(obs_dim, action_dim, lstm_hidden_size=H,
                                    num_envs=B, key=jax.random.PRNGKey(0))

    obs = jax.random.normal(jax.random.PRNGKey(1), (T, B, obs_dim), jnp.float32)
    state = agent.reset_hidden_states()

    # Reference.
    ref_logits, ref_ah, ref_ac = _branch_ref(
        obs, state[0][0][0], state[0][1][0], agent.actor_lstm, agent.actor_mlp)
    ref_values, ref_ch, ref_cc = _branch_ref(
        obs, state[1][0][0], state[1][1][0], agent.critic_lstm, agent.critic_mlp)

    def check(logits, values, actor_state, critic_state):
        np.testing.assert_allclose(np.asarray(logits), np.asarray(ref_logits),
                                   rtol=1e-5, atol=1e-5)
        np.testing.assert_allclose(np.asarray(values), np.asarray(ref_values),
                                   rtol=1e-5, atol=1e-5)
        np.testing.assert_allclose(np.asarray(actor_state[0][0]),
                                   np.asarray(ref_ah), rtol=1e-5, atol=1e-5)
        np.testing.assert_allclose(np.asarray(actor_state[1][0]),
                                   np.asarray(ref_ac), rtol=1e-5, atol=1e-5)
        np.testing.assert_allclose(np.asarray(critic_state[0][0]),
                                   np.asarray(ref_ch), rtol=1e-5, atol=1e-5)
        np.testing.assert_allclose(np.asarray(critic_state[1][0]),
                                   np.asarray(ref_cc), rtol=1e-5, atol=1e-5)

    # 1) single-chunk path (TC = T).
    logits, values, (actor_state, critic_state) = agent.forward(obs, state)
    jax.block_until_ready((logits, values, actor_state, critic_state))
    check(logits, values, actor_state, critic_state)
    assert logits.shape == (T, B, action_dim)
    assert values.shape == (T, B, 1)
    assert actor_state[0].shape == (1, B, H)

    # 2) multi-chunk path (force TC=2 -> 4 chunks) to exercise the cross-chunk
    #    (h, c) carry and the chunked output writeback.
    agent.max_rows_per_chunk = 16
    logits2, values2, (actor_state2, critic_state2) = agent.forward(obs, state)
    jax.block_until_ready((logits2, values2, actor_state2, critic_state2))
    check(logits2, values2, actor_state2, critic_state2)

    print("KERNEL_OK")
</pallas_src>

<mosaic_0001>
module attributes {stable_mosaic.version = 11 : i64} {
  func.func @kernel(%arg0: i32, %arg1: memref<64x16xf32, #tpu.memory_space<vmem>>, %arg2: memref<8x128xf32, #tpu.memory_space<vmem>>, %arg3: memref<8x128xf32, #tpu.memory_space<vmem>>, %arg4: memref<16x512xf32, #tpu.memory_space<vmem>>, %arg5: memref<128x512xf32, #tpu.memory_space<vmem>>, %arg6: memref<1x512xf32, #tpu.memory_space<vmem>>, %arg7: memref<128x256xf32, #tpu.memory_space<vmem>>, %arg8: memref<1x256xf32, #tpu.memory_space<vmem>>, %arg9: memref<256x256xf32, #tpu.memory_space<vmem>>, %arg10: memref<1x256xf32, #tpu.memory_space<vmem>>, %arg11: memref<256x128xf32, #tpu.memory_space<vmem>>, %arg12: memref<1x128xf32, #tpu.memory_space<vmem>>, %arg13: memref<64x128xf32, #tpu.memory_space<vmem>>, %arg14: memref<8x128xf32, #tpu.memory_space<vmem>>, %arg15: memref<8x128xf32, #tpu.memory_space<vmem>>, %arg16: memref<8x128xf32, #tpu.memory_space<vmem>>, %arg17: memref<8x128xf32, #tpu.memory_space<vmem>>, %arg18: memref<64x512xf32, #tpu.memory_space<vmem>>, %arg19: memref<64x128xf32, #tpu.memory_space<vmem>>) attributes {dimension_semantics = [#tpu.dimension_semantics<arbitrary>], iteration_bounds = array<i64: 1>, scalar_prefetch = 0 : i64, scratch_operands = 4 : i64, tpu.core_type = #tpu.core_type<tc>, window_params = [{transform_indices = @transform_0, window_bounds = array<i64: 64, 16>}, {pipeline_mode = #tpu.pipeline_mode<synchronous>, transform_indices = @transform_1, window_bounds = array<i64: 8, 128>}, {pipeline_mode = #tpu.pipeline_mode<synchronous>, transform_indices = @transform_2, window_bounds = array<i64: 8, 128>}, {pipeline_mode = #tpu.pipeline_mode<synchronous>, transform_indices = @transform_3, window_bounds = array<i64: 16, 512>}, {pipeline_mode = #tpu.pipeline_mode<synchronous>, transform_indices = @transform_4, window_bounds = array<i64: 128, 512>}, {pipeline_mode = #tpu.pipeline_mode<synchronous>, transform_indices = @transform_5, window_bounds = array<i64: 1, 512>}, {pipeline_mode = #tpu.pipeline_mode<synchronous>, transform_indices = @transform_6, window_bounds = array<i64: 128, 256>}, {pipeline_mode = #tpu.pipeline_mode<synchronous>, transform_indices = @transform_7, window_bounds = array<i64: 1, 256>}, {pipeline_mode = #tpu.pipeline_mode<synchronous>, transform_indices = @transform_8, window_bounds = array<i64: 256, 256>}, {pipeline_mode = #tpu.pipeline_mode<synchronous>, transform_indices = @transform_9, window_bounds = array<i64: 1, 256>}, {pipeline_mode = #tpu.pipeline_mode<synchronous>, transform_indices = @transform_10, window_bounds = array<i64: 256, 128>}, {pipeline_mode = #tpu.pipeline_mode<synchronous>, transform_indices = @transform_11, window_bounds = array<i64: 1, 128>}, {transform_indices = @transform_12, window_bounds = array<i64: 64, 128>}, {pipeline_mode = #tpu.pipeline_mode<synchronous>, transform_indices = @transform_13, window_bounds = array<i64: 8, 128>}, {pipeline_mode = #tpu.pipeline_mode<synchronous>, transform_indices = @transform_14, window_bounds = array<i64: 8, 128>}]} {
    %c0_i32 = arith.constant 0 : i32
    %0 = arith.cmpi eq, %arg0, %c0_i32 : i32
    %1 = arith.extui %0 : i1 to i32
    %c0_i32_0 = arith.constant 0 : i32
    %2 = arith.cmpi ne, %1, %c0_i32_0 : i32
    scf.if %2 {
      %c0_114 = arith.constant 0 : index
      %c0_115 = arith.constant 0 : index
      %309 = vector.load %arg2[%c0_114, %c0_115] : memref<8x128xf32, #tpu.memory_space<vmem>>, vector<8x128xf32>
      %c0_116 = arith.constant 0 : index
      %c0_117 = arith.constant 0 : index
      %310 = vector.load %arg16[%c0_116, %c0_117] : memref<8x128xf32, #tpu.memory_space<vmem>>, vector<8x128xf32>
      tpu.vector_store %arg16[%c0_116, %c0_117], %309 {strides = array<i32>} : memref<8x128xf32, #tpu.memory_space<vmem>>, vector<8x128xf32>,
      %c0_118 = arith.constant 0 : index
      %c0_119 = arith.constant 0 : index
      %311 = vector.load %arg3[%c0_118, %c0_119] : memref<8x128xf32, #tpu.memory_space<vmem>>, vector<8x128xf32>
      %c0_120 = arith.constant 0 : index
      %c0_121 = arith.constant 0 : index
      %312 = vector.load %arg17[%c0_120, %c0_121] : memref<8x128xf32, #tpu.memory_space<vmem>>, vector<8x128xf32>
      tpu.vector_store %arg17[%c0_120, %c0_121], %311 {strides = array<i32>} : memref<8x128xf32, #tpu.memory_space<vmem>>, vector<8x128xf32>,
    } else {
    }
    %c0 = arith.constant 0 : index
    %c0_1 = arith.constant 0 : index
    %3 = vector.load %arg1[%c0, %c0_1] : memref<64x16xf32, #tpu.memory_space<vmem>>, vector<64x16xf32>
    %c0_2 = arith.constant 0 : index
    %c0_3 = arith.constant 0 : index
    %4 = vector.load %arg4[%c0_2, %c0_3] : memref<16x512xf32, #tpu.memory_space<vmem>>, vector<16x512xf32>
    %cst = arith.constant dense<0.000000e+00> : vector<64x512xf32>
    %5 = tpu.matmul %3, %4, %cst {dimension_numbers = #tpu.dot_dimension_numbers<[1], [0], [0], [1], [0, 0, 1, 1], [], []>} : vector<64x16xf32>, vector<16x512xf32>, vector<64x512xf32> -> vector<64x512xf32>
    %c0_4 = arith.constant 0 : index
    %c0_5 = arith.constant 0 : index
    %6 = vector.load %arg6[%c0_4, %c0_5] : memref<1x512xf32, #tpu.memory_space<vmem>>, vector<1x512xf32>
    %7 = vector.broadcast %6 : vector<1x512xf32> to vector<64x512xf32>
    %8 = arith.addf %5, %7 : vector<64x512xf32>
    %c0_6 = arith.constant 0 : index
    %c0_7 = arith.constant 0 : index
    %9 = vector.load %arg18[%c0_6, %c0_7] : memref<64x512xf32, #tpu.memory_space<vmem>>, vector<64x512xf32>
    tpu.vector_store %arg18[%c0_6, %c0_7], %8 {strides = array<i32>} : memref<64x512xf32, #tpu.memory_space<vmem>>, vector<64x512xf32>,
    %c0_8 = arith.constant 0 : index
    %c0_9 = arith.constant 0 : index
    %10 = vector.load %arg16[%c0_8, %c0_9] : memref<8x128xf32, #tpu.memory_space<vmem>>, vector<8x128xf32>
    %c0_10 = arith.constant 0 : index
    %c0_11 = arith.constant 0 : index
    %11 = vector.load %arg17[%c0_10, %c0_11] : memref<8x128xf32, #tpu.memory_space<vmem>>, vector<8x128xf32>
    %c0_i32_12 = arith.constant 0 : i32
    %c8_i32 = arith.constant 8 : i32
    %12 = arith.muli %c0_i32_12, %c8_i32 : i32
    %13 = tpu.assume_multiple %12, 8 : i32
    %14 = arith.index_cast %13 : i32 to index
    %c0_13 = arith.constant 0 : index
    %15 = vector.load %arg18[%14, %c0_13] : memref<64x512xf32, #tpu.memory_space<vmem>>, vector<8x512xf32>
    %c0_14 = arith.constant 0 : index
    %c0_15 = arith.constant 0 : index
    %16 = vector.load %arg5[%c0_14, %c0_15] : memref<128x512xf32, #tpu.memory_space<vmem>>, vector<128x512xf32>
    %cst_16 = arith.constant dense<0.000000e+00> : vector<8x512xf32>
    %17 = tpu.matmul %10, %16, %cst_16 {dimension_numbers = #tpu.dot_dimension_numbers<[1], [0], [0], [1], [0, 0, 1, 1], [], []>} : vector<8x128xf32>, vector<128x512xf32>, vector<8x512xf32> -> vector<8x512xf32>
    %18 = arith.addf %15, %17 : vector<8x512xf32>
    %19 = vector.extract_strided_slice %18 {offsets = [0, 0], sizes = [8, 128], strides = [1, 1]} : vector<8x512xf32> to vector<8x128xf32>
    %20 = arith.negf %19 : vector<8x128xf32>
    %21 = math.exp %20 : vector<8x128xf32>
    %cst_17 = arith.constant 1.000000e+00 : f32
    %22 = vector.broadcast %cst_17 : f32 to vector<8x128xf32>
    %23 = arith.addf %22, %21 : vector<8x128xf32>
    %24 = arith.divf %22, %23 : vector<8x128xf32>
    %25 = vector.extract_strided_slice %18 {offsets = [0, 128], sizes = [8, 128], strides = [1, 1]} : vector<8x512xf32> to vector<8x128xf32>
    %26 = arith.negf %25 : vector<8x128xf32>
    %27 = math.exp %26 : vector<8x128xf32>
    %cst_18 = arith.constant 1.000000e+00 : f32
    %28 = vector.broadcast %cst_18 : f32 to vector<8x128xf32>
    %29 = arith.addf %28, %27 : vector<8x128xf32>
    %30 = arith.divf %28, %29 : vector<8x128xf32>
    %31 = vector.extract_strided_slice %18 {offsets = [0, 256], sizes = [8, 128], strides = [1, 1]} : vector<8x512xf32> to vector<8x128xf32>
    %32 = math.tanh %31 : vector<8x128xf32>
    %33 = vector.extract_strided_slice %18 {offsets = [0, 384], sizes = [8, 128], strides = [1, 1]} : vector<8x512xf32> to vector<8x128xf32>
    %34 = arith.negf %33 : vector<8x128xf32>
    %35 = math.exp %34 : vector<8x128xf32>
    %cst_19 = arith.constant 1.000000e+00 : f32
    %36 = vector.broadcast %cst_19 : f32 to vector<8x128xf32>
    %37 = arith.addf %36, %35 : vector<8x128xf32>
    %38 = arith.divf %36, %37 : vector<8x128xf32>
    %39 = arith.mulf %30, %11 : vector<8x128xf32>
    %40 = arith.mulf %24, %32 : vector<8x128xf32>
    %41 = arith.addf %39, %40 : vector<8x128xf32>
    %42 = math.tanh %41 : vector<8x128xf32>
    %43 = arith.mulf %38, %42 : vector<8x128xf32>
    %44 = arith.index_cast %13 : i32 to index
    %c0_20 = arith.constant 0 : index
    %45 = vector.load %arg19[%44, %c0_20] : memref<64x128xf32, #tpu.memory_space<vmem>>, vector<8x128xf32>
    tpu.vector_store %arg19[%44, %c0_20], %43 {strides = array<i32>} : memref<64x128xf32, #tpu.memory_space<vmem>>, vector<8x128xf32>,
    %c1_i32 = arith.constant 1 : i32
    %c8_i32_21 = arith.constant 8 : i32
    %46 = arith.muli %c1_i32, %c8_i32_21 : i32
    %47 = tpu.assume_multiple %46, 8 : i32
    %48 = arith.index_cast %47 : i32 to index
    %c0_22 = arith.constant 0 : index
    %49 = vector.load %arg18[%48, %c0_22] : memref<64x512xf32, #tpu.memory_space<vmem>>, vector<8x512xf32>
    %c0_23 = arith.constant 0 : index
    %c0_24 = arith.constant 0 : index
    %50 = vector.load %arg5[%c0_23, %c0_24] : memref<128x512xf32, #tpu.memory_space<vmem>>, vector<128x512xf32>
    %cst_25 = arith.constant dense<0.000000e+00> : vector<8x512xf32>
    %51 = tpu.matmul %43, %50, %cst_25 {dimension_numbers = #tpu.dot_dimension_numbers<[1], [0], [0], [1], [0, 0, 1, 1], [], []>} : vector<8x128xf32>, vector<128x512xf32>, vector<8x512xf32> -> vector<8x512xf32>
    %52 = arith.addf %49, %51 : vector<8x512xf32>
    %53 = vector.extract_strided_slice %52 {offsets = [0, 0], sizes = [8, 128], strides = [1, 1]} : vector<8x512xf32> to vector<8x128xf32>
    %54 = arith.negf %53 : vector<8x128xf32>
    %55 = math.exp %54 : vector<8x128xf32>
    %cst_26 = arith.constant 1.000000e+00 : f32
    %56 = vector.broadcast %cst_26 : f32 to vector<8x128xf32>
    %57 = arith.addf %56, %55 : vector<8x128xf32>
    %58 = arith.divf %56, %57 : vector<8x128xf32>
    %59 = vector.extract_strided_slice %52 {offsets = [0, 128], sizes = [8, 128], strides = [1, 1]} : vector<8x512xf32> to vector<8x128xf32>
    %60 = arith.negf %59 : vector<8x128xf32>
    %61 = math.exp %60 : vector<8x128xf32>
    %cst_27 = arith.constant 1.000000e+00 : f32
    %62 = vector.broadcast %cst_27 : f32 to vector<8x128xf32>
    %63 = arith.addf %62, %61 : vector<8x128xf32>
    %64 = arith.divf %62, %63 : vector<8x128xf32>
    %65 = vector.extract_strided_slice %52 {offsets = [0, 256], sizes = [8, 128], strides = [1, 1]} : vector<8x512xf32> to vector<8x128xf32>
    %66 = math.tanh %65 : vector<8x128xf32>
    %67 = vector.extract_strided_slice %52 {offsets = [0, 384], sizes = [8, 128], strides = [1, 1]} : vector<8x512xf32> to vector<8x128xf32>
    %68 = arith.negf %67 : vector<8x128xf32>
    %69 = math.exp %68 : vector<8x128xf32>
    %cst_28 = arith.constant 1.000000e+00 : f32
    %70 = vector.broadcast %cst_28 : f32 to vector<8x128xf32>
    %71 = arith.addf %70, %69 : vector<8x128xf32>
    %72 = arith.divf %70, %71 : vector<8x128xf32>
    %73 = arith.mulf %64, %41 : vector<8x128xf32>
    %74 = arith.mulf %58, %66 : vector<8x128xf32>
    %75 = arith.addf %73, %74 : vector<8x128xf32>
    %76 = math.tanh %75 : vector<8x128xf32>
    %77 = arith.mulf %72, %76 : vector<8x128xf32>
    %78 = arith.index_cast %47 : i32 to index
    %c0_29 = arith.constant 0 : index
    %79 = vector.load %arg19[%78, %c0_29] : memref<64x128xf32, #tpu.memory_space<vmem>>, vector<8x128xf32>
    tpu.vector_store %arg19[%78, %c0_29], %77 {strides = array<i32>} : memref<64x128xf32, #tpu.memory_space<vmem>>, vector<8x128xf32>,
    %c2_i32 = arith.constant 2 : i32
    %c8_i32_30 = arith.constant 8 : i32
    %80 = arith.muli %c2_i32, %c8_i32_30 : i32
    %81 = tpu.assume_multiple %80, 8 : i32
    %82 = arith.index_cast %81 : i32 to index
    %c0_31 = arith.constant 0 : index
    %83 = vector.load %arg18[%82, %c0_31] : memref<64x512xf32, #tpu.memory_space<vmem>>, vector<8x512xf32>
    %c0_32 = arith.constant 0 : index
    %c0_33 = arith.constant 0 : index
    %84 = vector.load %arg5[%c0_32, %c0_33] : memref<128x512xf32, #tpu.memory_space<vmem>>, vector<128x512xf32>
    %cst_34 = arith.constant dense<0.000000e+00> : vector<8x512xf32>
    %85 = tpu.matmul %77, %84, %cst_34 {dimension_numbers = #tpu.dot_dimension_numbers<[1], [0], [0], [1], [0, 0, 1, 1], [], []>} : vector<8x128xf32>, vector<128x512xf32>, vector<8x512xf32> -> vector<8x512xf32>
    %86 = arith.addf %83, %85 : vector<8x512xf32>
    %87 = vector.extract_strided_slice %86 {offsets = [0, 0], sizes = [8, 128], strides = [1, 1]} : vector<8x512xf32> to vector<8x128xf32>
    %88 = arith.negf %87 : vector<8x128xf32>
    %89 = math.exp %88 : vector<8x128xf32>
    %cst_35 = arith.constant 1.000000e+00 : f32
    %90 = vector.broadcast %cst_35 : f32 to vector<8x128xf32>
    %91 = arith.addf %90, %89 : vector<8x128xf32>
    %92 = arith.divf %90, %91 : vector<8x128xf32>
    %93 = vector.extract_strided_slice %86 {offsets = [0, 128], sizes = [8, 128], strides = [1, 1]} : vector<8x512xf32> to vector<8x128xf32>
    %94 = arith.negf %93 : vector<8x128xf32>
    %95 = math.exp %94 : vector<8x128xf32>
    %cst_36 = arith.constant 1.000000e+00 : f32
    %96 = vector.broadcast %cst_36 : f32 to vector<8x128xf32>
    %97 = arith.addf %96, %95 : vector<8x128xf32>
    %98 = arith.divf %96, %97 : vector<8x128xf32>
    %99 = vector.extract_strided_slice %86 {offsets = [0, 256], sizes = [8, 128], strides = [1, 1]} : vector<8x512xf32> to vector<8x128xf32>
    %100 = math.tanh %99 : vector<8x128xf32>
    %101 = vector.extract_strided_slice %86 {offsets = [0, 384], sizes = [8, 128], strides = [1, 1]} : vector<8x512xf32> to vector<8x128xf32>
    %102 = arith.negf %101 : vector<8x128xf32>
    %103 = math.exp %102 : vector<8x128xf32>
    %cst_37 = arith.constant 1.000000e+00 : f32
    %104 = vector.broadcast %cst_37 : f32 to vector<8x128xf32>
    %105 = arith.addf %104, %103 : vector<8x128xf32>
    %106 = arith.divf %104, %105 : vector<8x128xf32>
    %107 = arith.mulf %98, %75 : vector<8x128xf32>
    %108 = arith.mulf %92, %100 : vector<8x128xf32>
    %109 = arith.addf %107, %108 : vector<8x128xf32>
    %110 = math.tanh %109 : vector<8x128xf32>
    %111 = arith.mulf %106, %110 : vector<8x128xf32>
    %112 = arith.index_cast %81 : i32 to index
    %c0_38 = arith.constant 0 : index
    %113 = vector.load %arg19[%112, %c0_38] : memref<64x128xf32, #tpu.memory_space<vmem>>, vector<8x128xf32>
    tpu.vector_store %arg19[%112, %c0_38], %111 {strides = array<i32>} : memref<64x128xf32, #tpu.memory_space<vmem>>, vector<8x128xf32>,
    %c3_i32 = arith.constant 3 : i32
    %c8_i32_39 = arith.constant 8 : i32
    %114 = arith.muli %c3_i32, %c8_i32_39 : i32
    %115 = tpu.assume_multiple %114, 8 : i32
    %116 = arith.index_cast %115 : i32 to index
    %c0_40 = arith.constant 0 : index
    %117 = vector.load %arg18[%116, %c0_40] : memref<64x512xf32, #tpu.memory_space<vmem>>, vector<8x512xf32>
    %c0_41 = arith.constant 0 : index
    %c0_42 = arith.constant 0 : index
    %118 = vector.load %arg5[%c0_41, %c0_42] : memref<128x512xf32, #tpu.memory_space<vmem>>, vector<128x512xf32>
    %cst_43 = arith.constant dense<0.000000e+00> : vector<8x512xf32>
    %119 = tpu.matmul %111, %118, %cst_43 {dimension_numbers = #tpu.dot_dimension_numbers<[1], [0], [0], [1], [0, 0, 1, 1], [], []>} : vector<8x128xf32>, vector<128x512xf32>, vector<8x512xf32> -> vector<8x512xf32>
    %120 = arith.addf %117, %119 : vector<8x512xf32>
    %121 = vector.extract_strided_slice %120 {offsets = [0, 0], sizes = [8, 128], strides = [1, 1]} : vector<8x512xf32> to vector<8x128xf32>
    %122 = arith.negf %121 : vector<8x128xf32>
    %123 = math.exp %122 : vector<8x128xf32>
    %cst_44 = arith.constant 1.000000e+00 : f32
    %124 = vector.broadcast %cst_44 : f32 to vector<8x128xf32>
    %125 = arith.addf %124, %123 : vector<8x128xf32>
    %126 = arith.divf %124, %125 : vector<8x128xf32>
    %127 = vector.extract_strided_slice %120 {offsets = [0, 128], sizes = [8, 128], strides = [1, 1]} : vector<8x512xf32> to vector<8x128xf32>
    %128 = arith.negf %127 : vector<8x128xf32>
    %129 = math.exp %128 : vector<8x128xf32>
    %cst_45 = arith.constant 1.000000e+00 : f32
    %130 = vector.broadcast %cst_45 : f32 to vector<8x128xf32>
    %131 = arith.addf %130, %129 : vector<8x128xf32>
    %132 = arith.divf %130, %131 : vector<8x128xf32>
    %133 = vector.extract_strided_slice %120 {offsets = [0, 256], sizes = [8, 128], strides = [1, 1]} : vector<8x512xf32> to vector<8x128xf32>
    %134 = math.tanh %133 : vector<8x128xf32>
    %135 = vector.extract_strided_slice %120 {offsets = [0, 384], sizes = [8, 128], strides = [1, 1]} : vector<8x512xf32> to vector<8x128xf32>
    %136 = arith.negf %135 : vector<8x128xf32>
    %137 = math.exp %136 : vector<8x128xf32>
    %cst_46 = arith.constant 1.000000e+00 : f32
    %138 = vector.broadcast %cst_46 : f32 to vector<8x128xf32>
    %139 = arith.addf %138, %137 : vector<8x128xf32>
    %140 = arith.divf %138, %139 : vector<8x128xf32>
    %141 = arith.mulf %132, %109 : vector<8x128xf32>
    %142 = arith.mulf %126, %134 : vector<8x128xf32>
    %143 = arith.addf %141, %142 : vector<8x128xf32>
    %144 = math.tanh %143 : vector<8x128xf32>
    %145 = arith.mulf %140, %144 : vector<8x128xf32>
    %146 = arith.index_cast %115 : i32 to index
    %c0_47 = arith.constant 0 : index
    %147 = vector.load %arg19[%146, %c0_47] : memref<64x128xf32, #tpu.memory_space<vmem>>, vector<8x128xf32>
    tpu.vector_store %arg19[%146, %c0_47], %145 {strides = array<i32>} : memref<64x128xf32, #tpu.memory_space<vmem>>, vector<8x128xf32>,
    %c4_i32 = arith.constant 4 : i32
    %c8_i32_48 = arith.constant 8 : i32
    %148 = arith.muli %c4_i32, %c8_i32_48 : i32
    %149 = tpu.assume_multiple %148, 8 : i32
    %150 = arith.index_cast %149 : i32 to index
    %c0_49 = arith.constant 0 : index
    %151 = vector.load %arg18[%150, %c0_49] : memref<64x512xf32, #tpu.memory_space<vmem>>, vector<8x512xf32>
    %c0_50 = arith.constant 0 : index
    %c0_51 = arith.constant 0 : index
    %152 = vector.load %arg5[%c0_50, %c0_51] : memref<128x512xf32, #tpu.memory_space<vmem>>, vector<128x512xf32>
    %cst_52 = arith.constant dense<0.000000e+00> : vector<8x512xf32>
    %153 = tpu.matmul %145, %152, %cst_52 {dimension_numbers = #tpu.dot_dimension_numbers<[1], [0], [0], [1], [0, 0, 1, 1], [], []>} : vector<8x128xf32>, vector<128x512xf32>, vector<8x512xf32> -> vector<8x512xf32>
    %154 = arith.addf %151, %153 : vector<8x512xf32>
    %155 = vector.extract_strided_slice %154 {offsets = [0, 0], sizes = [8, 128], strides = [1, 1]} : vector<8x512xf32> to vector<8x128xf32>
    %156 = arith.negf %155 : vector<8x128xf32>
    %157 = math.exp %156 : vector<8x128xf32>
    %cst_53 = arith.constant 1.000000e+00 : f32
    %158 = vector.broadcast %cst_53 : f32 to vector<8x128xf32>
    %159 = arith.addf %158, %157 : vector<8x128xf32>
    %160 = arith.divf %158, %159 : vector<8x128xf32>
    %161 = vector.extract_strided_slice %154 {offsets = [0, 128], sizes = [8, 128], strides = [1, 1]} : vector<8x512xf32> to vector<8x128xf32>
    %162 = arith.negf %161 : vector<8x128xf32>
    %163 = math.exp %162 : vector<8x128xf32>
    %cst_54 = arith.constant 1.000000e+00 : f32
    %164 = vector.broadcast %cst_54 : f32 to vector<8x128xf32>
    %165 = arith.addf %164, %163 : vector<8x128xf32>
    %166 = arith.divf %164, %165 : vector<8x128xf32>
    %167 = vector.extract_strided_slice %154 {offsets = [0, 256], sizes = [8, 128], strides = [1, 1]} : vector<8x512xf32> to vector<8x128xf32>
    %168 = math.tanh %167 : vector<8x128xf32>
    %169 = vector.extract_strided_slice %154 {offsets = [0, 384], sizes = [8, 128], strides = [1, 1]} : vector<8x512xf32> to vector<8x128xf32>
    %170 = arith.negf %169 : vector<8x128xf32>
    %171 = math.exp %170 : vector<8x128xf32>
    %cst_55 = arith.constant 1.000000e+00 : f32
    %172 = vector.broadcast %cst_55 : f32 to vector<8x128xf32>
    %173 = arith.addf %172, %171 : vector<8x128xf32>
    %174 = arith.divf %172, %173 : vector<8x128xf32>
    %175 = arith.mulf %166, %143 : vector<8x128xf32>
    %176 = arith.mulf %160, %168 : vector<8x128xf32>
    %177 = arith.addf %175, %176 : vector<8x128xf32>
    %178 = math.tanh %177 : vector<8x128xf32>
    %179 = arith.mulf %174, %178 : vector<8x128xf32>
    %180 = arith.index_cast %149 : i32 to index
    %c0_56 = arith.constant 0 : index
    %181 = vector.load %arg19[%180, %c0_56] : memref<64x128xf32, #tpu.memory_space<vmem>>, vector<8x128xf32>
    tpu.vector_store %arg19[%180, %c0_56], %179 {strides = array<i32>} : memref<64x128xf32, #tpu.memory_space<vmem>>, vector<8x128xf32>,
    %c5_i32 = arith.constant 5 : i32
    %c8_i32_57 = arith.constant 8 : i32
    %182 = arith.muli %c5_i32, %c8_i32_57 : i32
    %183 = tpu.assume_multiple %182, 8 : i32
    %184 = arith.index_cast %183 : i32 to index
    %c0_58 = arith.constant 0 : index
    %185 = vector.load %arg18[%184, %c0_58] : memref<64x512xf32, #tpu.memory_space<vmem>>, vector<8x512xf32>
    %c0_59 = arith.constant 0 : index
    %c0_60 = arith.constant 0 : index
    %186 = vector.load %arg5[%c0_59, %c0_60] : memref<128x512xf32, #tpu.memory_space<vmem>>, vector<128x512xf32>
    %cst_61 = arith.constant dense<0.000000e+00> : vector<8x512xf32>
    %187 = tpu.matmul %179, %186, %cst_61 {dimension_numbers = #tpu.dot_dimension_numbers<[1], [0], [0], [1], [0, 0, 1, 1], [], []>} : vector<8x128xf32>, vector<128x512xf32>, vector<8x512xf32> -> vector<8x512xf32>
    %188 = arith.addf %185, %187 : vector<8x512xf32>
    %189 = vector.extract_strided_slice %188 {offsets = [0, 0], sizes = [8, 128], strides = [1, 1]} : vector<8x512xf32> to vector<8x128xf32>
    %190 = arith.negf %189 : vector<8x128xf32>
    %191 = math.exp %190 : vector<8x128xf32>
    %cst_62 = arith.constant 1.000000e+00 : f32
    %192 = vector.broadcast %cst_62 : f32 to vector<8x128xf32>
    %193 = arith.addf %192, %191 : vector<8x128xf32>
    %194 = arith.divf %192, %193 : vector<8x128xf32>
    %195 = vector.extract_strided_slice %188 {offsets = [0, 128], sizes = [8, 128], strides = [1, 1]} : vector<8x512xf32> to vector<8x128xf32>
    %196 = arith.negf %195 : vector<8x128xf32>
    %197 = math.exp %196 : vector<8x128xf32>
    %cst_63 = arith.constant 1.000000e+00 : f32
    %198 = vector.broadcast %cst_63 : f32 to vector<8x128xf32>
    %199 = arith.addf %198, %197 : vector<8x128xf32>
    %200 = arith.divf %198, %199 : vector<8x128xf32>
    %201 = vector.extract_strided_slice %188 {offsets = [0, 256], sizes = [8, 128], strides = [1, 1]} : vector<8x512xf32> to vector<8x128xf32>
    %202 = math.tanh %201 : vector<8x128xf32>
    %203 = vector.extract_strided_slice %188 {offsets = [0, 384], sizes = [8, 128], strides = [1, 1]} : vector<8x512xf32> to vector<8x128xf32>
    %204 = arith.negf %203 : vector<8x128xf32>
    %205 = math.exp %204 : vector<8x128xf32>
    %cst_64 = arith.constant 1.000000e+00 : f32
    %206 = vector.broadcast %cst_64 : f32 to vector<8x128xf32>
    %207 = arith.addf %206, %205 : vector<8x128xf32>
    %208 = arith.divf %206, %207 : vector<8x128xf32>
    %209 = arith.mulf %200, %177 : vector<8x128xf32>
    %210 = arith.mulf %194, %202 : vector<8x128xf32>
    %211 = arith.addf %209, %210 : vector<8x128xf32>
    %212 = math.tanh %211 : vector<8x128xf32>
    %213 = arith.mulf %208, %212 : vector<8x128xf32>
    %214 = arith.index_cast %183 : i32 to index
    %c0_65 = arith.constant 0 : index
    %215 = vector.load %arg19[%214, %c0_65] : memref<64x128xf32, #tpu.memory_space<vmem>>, vector<8x128xf32>
    tpu.vector_store %arg19[%214, %c0_65], %213 {strides = array<i32>} : memref<64x128xf32, #tpu.memory_space<vmem>>, vector<8x128xf32>,
    %c6_i32 = arith.constant 6 : i32
    %c8_i32_66 = arith.constant 8 : i32
    %216 = arith.muli %c6_i32, %c8_i32_66 : i32
    %217 = tpu.assume_multiple %216, 8 : i32
    %218 = arith.index_cast %217 : i32 to index
    %c0_67 = arith.constant 0 : index
    %219 = vector.load %arg18[%218, %c0_67] : memref<64x512xf32, #tpu.memory_space<vmem>>, vector<8x512xf32>
    %c0_68 = arith.constant 0 : index
    %c0_69 = arith.constant 0 : index
    %220 = vector.load %arg5[%c0_68, %c0_69] : memref<128x512xf32, #tpu.memory_space<vmem>>, vector<128x512xf32>
    %cst_70 = arith.constant dense<0.000000e+00> : vector<8x512xf32>
    %221 = tpu.matmul %213, %220, %cst_70 {dimension_numbers = #tpu.dot_dimension_numbers<[1], [0], [0], [1], [0, 0, 1, 1], [], []>} : vector<8x128xf32>, vector<128x512xf32>, vector<8x512xf32> -> vector<8x512xf32>
    %222 = arith.addf %219, %221 : vector<8x512xf32>
    %223 = vector.extract_strided_slice %222 {offsets = [0, 0], sizes = [8, 128], strides = [1, 1]} : vector<8x512xf32> to vector<8x128xf32>
    %224 = arith.negf %223 : vector<8x128xf32>
    %225 = math.exp %224 : vector<8x128xf32>
    %cst_71 = arith.constant 1.000000e+00 : f32
    %226 = vector.broadcast %cst_71 : f32 to vector<8x128xf32>
    %227 = arith.addf %226, %225 : vector<8x128xf32>
    %228 = arith.divf %226, %227 : vector<8x128xf32>
    %229 = vector.extract_strided_slice %222 {offsets = [0, 128], sizes = [8, 128], strides = [1, 1]} : vector<8x512xf32> to vector<8x128xf32>
    %230 = arith.negf %229 : vector<8x128xf32>
    %231 = math.exp %230 : vector<8x128xf32>
    %cst_72 = arith.constant 1.000000e+00 : f32
    %232 = vector.broadcast %cst_72 : f32 to vector<8x128xf32>
    %233 = arith.addf %232, %231 : vector<8x128xf32>
    %234 = arith.divf %232, %233 : vector<8x128xf32>
    %235 = vector.extract_strided_slice %222 {offsets = [0, 256], sizes = [8, 128], strides = [1, 1]} : vector<8x512xf32> to vector<8x128xf32>
    %236 = math.tanh %235 : vector<8x128xf32>
    %237 = vector.extract_strided_slice %222 {offsets = [0, 384], sizes = [8, 128], strides = [1, 1]} : vector<8x512xf32> to vector<8x128xf32>
    %238 = arith.negf %237 : vector<8x128xf32>
    %239 = math.exp %238 : vector<8x128xf32>
    %cst_73 = arith.constant 1.000000e+00 : f32
    %240 = vector.broadcast %cst_73 : f32 to vector<8x128xf32>
    %241 = arith.addf %240, %239 : vector<8x128xf32>
    %242 = arith.divf %240, %241 : vector<8x128xf32>
    %243 = arith.mulf %234, %211 : vector<8x128xf32>
    %244 = arith.mulf %228, %236 : vector<8x128xf32>
    %245 = arith.addf %243, %244 : vector<8x128xf32>
    %246 = math.tanh %245 : vector<8x128xf32>
    %247 = arith.mulf %242, %246 : vector<8x128xf32>
    %248 = arith.index_cast %217 : i32 to index
    %c0_74 = arith.constant 0 : index
    %249 = vector.load %arg19[%248, %c0_74] : memref<64x128xf32, #tpu.memory_space<vmem>>, vector<8x128xf32>
    tpu.vector_store %arg19[%248, %c0_74], %247 {strides = array<i32>} : memref<64x128xf32, #tpu.memory_space<vmem>>, vector<8x128xf32>,
    %c7_i32 = arith.constant 7 : i32
    %c8_i32_75 = arith.constant 8 : i32
    %250 = arith.muli %c7_i32, %c8_i32_75 : i32
    %251 = tpu.assume_multiple %250, 8 : i32
    %252 = arith.index_cast %251 : i32 to index
    %c0_76 = arith.constant 0 : index
    %253 = vector.load %arg18[%252, %c0_76] : memref<64x512xf32, #tpu.memory_space<vmem>>, vector<8x512xf32>
    %c0_77 = arith.constant 0 : index
    %c0_78 = arith.constant 0 : index
    %254 = vector.load %arg5[%c0_77, %c0_78] : memref<128x512xf32, #tpu.memory_space<vmem>>, vector<128x512xf32>
    %cst_79 = arith.constant dense<0.000000e+00> : vector<8x512xf32>
    %255 = tpu.matmul %247, %254, %cst_79 {dimension_numbers = #tpu.dot_dimension_numbers<[1], [0], [0], [1], [0, 0, 1, 1], [], []>} : vector<8x128xf32>, vector<128x512xf32>, vector<8x512xf32> -> vector<8x512xf32>
    %256 = arith.addf %253, %255 : vector<8x512xf32>
    %257 = vector.extract_strided_slice %256 {offsets = [0, 0], sizes = [8, 128], strides = [1, 1]} : vector<8x512xf32> to vector<8x128xf32>
    %258 = arith.negf %257 : vector<8x128xf32>
    %259 = math.exp %258 : vector<8x128xf32>
    %cst_80 = arith.constant 1.000000e+00 : f32
    %260 = vector.broadcast %cst_80 : f32 to vector<8x128xf32>
    %261 = arith.addf %260, %259 : vector<8x128xf32>
    %262 = arith.divf %260, %261 : vector<8x128xf32>
    %263 = vector.extract_strided_slice %256 {offsets = [0, 128], sizes = [8, 128], strides = [1, 1]} : vector<8x512xf32> to vector<8x128xf32>
    %264 = arith.negf %263 : vector<8x128xf32>
    %265 = math.exp %264 : vector<8x128xf32>
    %cst_81 = arith.constant 1.000000e+00 : f32
    %266 = vector.broadcast %cst_81 : f32 to vector<8x128xf32>
    %267 = arith.addf %266, %265 : vector<8x128xf32>
    %268 = arith.divf %266, %267 : vector<8x128xf32>
    %269 = vector.extract_strided_slice %256 {offsets = [0, 256], sizes = [8, 128], strides = [1, 1]} : vector<8x512xf32> to vector<8x128xf32>
    %270 = math.tanh %269 : vector<8x128xf32>
    %271 = vector.extract_strided_slice %256 {offsets = [0, 384], sizes = [8, 128], strides = [1, 1]} : vector<8x512xf32> to vector<8x128xf32>
    %272 = arith.negf %271 : vector<8x128xf32>
    %273 = math.exp %272 : vector<8x128xf32>
    %cst_82 = arith.constant 1.000000e+00 : f32
    %274 = vector.broadcast %cst_82 : f32 to vector<8x128xf32>
    %275 = arith.addf %274, %273 : vector<8x128xf32>
    %276 = arith.divf %274, %275 : vector<8x128xf32>
    %277 = arith.mulf %268, %245 : vector<8x128xf32>
    %278 = arith.mulf %262, %270 : vector<8x128xf32>
    %279 = arith.addf %277, %278 : vector<8x128xf32>
    %280 = math.tanh %279 : vector<8x128xf32>
    %281 = arith.mulf %276, %280 : vector<8x128xf32>
    %282 = arith.index_cast %251 : i32 to index
    %c0_83 = arith.constant 0 : index
    %283 = vector.load %arg19[%282, %c0_83] : memref<64x128xf32, #tpu.memory_space<vmem>>, vector<8x128xf32>
    tpu.vector_store %arg19[%282, %c0_83], %281 {strides = array<i32>} : memref<64x128xf32, #tpu.memory_space<vmem>>, vector<8x128xf32>,
    %c8_i32_84 = arith.constant 8 : i32
    %c0_85 = arith.constant 0 : index
    %c0_86 = arith.constant 0 : index
    %284 = vector.load %arg16[%c0_85, %c0_86] : memref<8x128xf32, #tpu.memory_space<vmem>>, vector<8x128xf32>
    tpu.vector_store %arg16[%c0_85, %c0_86], %281 {strides = array<i32>} : memref<8x128xf32, #tpu.memory_space<vmem>>, vector<8x128xf32>,
    %c0_87 = arith.constant 0 : index
    %c0_88 = arith.constant 0 : index
    %285 = vector.load %arg17[%c0_87, %c0_88] : memref<8x128xf32, #tpu.memory_space<vmem>>, vector<8x128xf32>
    tpu.vector_store %arg17[%c0_87, %c0_88], %279 {strides = array<i32>} : memref<8x128xf32, #tpu.memory_space<vmem>>, vector<8x128xf32>,
    %c0_89 = arith.constant 0 : index
    %c0_90 = arith.constant 0 : index
    %286 = vector.load %arg14[%c0_89, %c0_90] : memref<8x128xf32, #tpu.memory_space<vmem>>, vector<8x128xf32>
    tpu.vector_store %arg14[%c0_89, %c0_90], %281 {strides = array<i32>} : memref<8x128xf32, #tpu.memory_space<vmem>>, vector<8x128xf32>,
    %c0_91 = arith.constant 0 : index
    %c0_92 = arith.constant 0 : index
    %287 = vector.load %arg15[%c0_91, %c0_92] : memref<8x128xf32, #tpu.memory_space<vmem>>, vector<8x128xf32>
    tpu.vector_store %arg15[%c0_91, %c0_92], %279 {strides = array<i32>} : memref<8x128xf32, #tpu.memory_space<vmem>>, vector<8x128xf32>,
    %c0_93 = arith.constant 0 : index
    %c0_94 = arith.constant 0 : index
    %288 = vector.load %arg19[%c0_93, %c0_94] : memref<64x128xf32, #tpu.memory_space<vmem>>, vector<64x128xf32>
    %c0_95 = arith.constant 0 : index
    %c0_96 = arith.constant 0 : index
    %289 = vector.load %arg7[%c0_95, %c0_96] : memref<128x256xf32, #tpu.memory_space<vmem>>, vector<128x256xf32>
    %cst_97 = arith.constant dense<0.000000e+00> : vector<64x256xf32>
    %290 = tpu.matmul %288, %289, %cst_97 {dimension_numbers = #tpu.dot_dimension_numbers<[1], [0], [0], [1], [0, 0, 1, 1], [], []>} : vector<64x128xf32>, vector<128x256xf32>, vector<64x256xf32> -> vector<64x256xf32>
    %c0_98 = arith.constant 0 : index
    %c0_99 = arith.constant 0 : index
    %291 = vector.load %arg8[%c0_98, %c0_99] : memref<1x256xf32, #tpu.memory_space<vmem>>, vector<1x256xf32>
    %292 = vector.broadcast %291 : vector<1x256xf32> to vector<64x256xf32>
    %293 = arith.addf %290, %292 : vector<64x256xf32>
    %cst_100 = arith.constant 0.000000e+00 : f32
    %294 = vector.broadcast %cst_100 : f32 to vector<64x256xf32>
    %295 = arith.maximumf %293, %294 : vector<64x256xf32>
    %c0_101 = arith.constant 0 : index
    %c0_102 = arith.constant 0 : index
    %296 = vector.load %arg9[%c0_101, %c0_102] : memref<256x256xf32, #tpu.memory_space<vmem>>, vector<256x256xf32>
    %cst_103 = arith.constant dense<0.000000e+00> : vector<64x256xf32>
    %297 = tpu.matmul %295, %296, %cst_103 {dimension_numbers = #tpu.dot_dimension_numbers<[1], [0], [0], [1], [0, 0, 1, 1], [], []>} : vector<64x256xf32>, vector<256x256xf32>, vector<64x256xf32> -> vector<64x256xf32>
    %c0_104 = arith.constant 0 : index
    %c0_105 = arith.constant 0 : index
    %298 = vector.load %arg10[%c0_104, %c0_105] : memref<1x256xf32, #tpu.memory_space<vmem>>, vector<1x256xf32>
    %299 = vector.broadcast %298 : vector<1x256xf32> to vector<64x256xf32>
    %300 = arith.addf %297, %299 : vector<64x256xf32>
    %cst_106 = arith.constant 0.000000e+00 : f32
    %301 = vector.broadcast %cst_106 : f32 to vector<64x256xf32>
    %302 = arith.maximumf %300, %301 : vector<64x256xf32>
    %c0_107 = arith.constant 0 : index
    %c0_108 = arith.constant 0 : index
    %303 = vector.load %arg11[%c0_107, %c0_108] : memref<256x128xf32, #tpu.memory_space<vmem>>, vector<256x128xf32>
    %cst_109 = arith.constant dense<0.000000e+00> : vector<64x128xf32>
    %304 = tpu.matmul %302, %303, %cst_109 {dimension_numbers = #tpu.dot_dimension_numbers<[1], [0], [0], [1], [0, 0, 1, 1], [], []>} : vector<64x256xf32>, vector<256x128xf32>, vector<64x128xf32> -> vector<64x128xf32>
    %c0_110 = arith.constant 0 : index
    %c0_111 = arith.constant 0 : index
    %305 = vector.load %arg12[%c0_110, %c0_111] : memref<1x128xf32, #tpu.memory_space<vmem>>, vector<1x128xf32>
    %306 = vector.broadcast %305 : vector<1x128xf32> to vector<64x128xf32>
    %307 = arith.addf %304, %306 : vector<64x128xf32>
    %c0_112 = arith.constant 0 : index
    %c0_113 = arith.constant 0 : index
    %308 = vector.load %arg13[%c0_112, %c0_113] : memref<64x128xf32, #tpu.memory_space<vmem>>, vector<64x128xf32>
    tpu.vector_store %arg13[%c0_112, %c0_113], %307 {strides = array<i32>} : memref<64x128xf32, #tpu.memory_space<vmem>>, vector<64x128xf32>,
    return
  }
  func.func @transform_0(%arg0: i32) -> (i32, i32) {
    %c0_i32 = arith.constant 0 : i32
    %c0_i32_0 = arith.constant 0 : i32
    return %arg0, %c0_i32 : i32, i32
  }
  func.func @transform_1(%arg0: i32) -> (i32, i32) {
    %c0_i32 = arith.constant 0 : i32
    %c0_i32_0 = arith.constant 0 : i32
    %c0_i32_1 = arith.constant 0 : i32
    return %c0_i32, %c0_i32_0 : i32, i32
  }
  func.func @transform_2(%arg0: i32) -> (i32, i32) {
    %c0_i32 = arith.constant 0 : i32
    %c0_i32_0 = arith.constant 0 : i32
    %c0_i32_1 = arith.constant 0 : i32
    return %c0_i32, %c0_i32_0 : i32, i32
  }
  func.func @transform_3(%arg0: i32) -> (i32, i32) {
    %c0_i32 = arith.constant 0 : i32
    %c0_i32_0 = arith.constant 0 : i32
    %c0_i32_1 = arith.constant 0 : i32
    return %c0_i32, %c0_i32_0 : i32, i32
  }
  func.func @transform_4(%arg0: i32) -> (i32, i32) {
    %c0_i32 = arith.constant 0 : i32
    %c0_i32_0 = arith.constant 0 : i32
    %c0_i32_1 = arith.constant 0 : i32
    return %c0_i32, %c0_i32_0 : i32, i32
  }
  func.func @transform_5(%arg0: i32) -> (i32, i32) {
    %c0_i32 = arith.constant 0 : i32
    %c0_i32_0 = arith.constant 0 : i32
    %c0_i32_1 = arith.constant 0 : i32
    return %c0_i32, %c0_i32_0 : i32, i32
  }
  func.func @transform_6(%arg0: i32) -> (i32, i32) {
    %c0_i32 = arith.constant 0 : i32
    %c0_i32_0 = arith.constant 0 : i32
    %c0_i32_1 = arith.constant 0 : i32
    return %c0_i32, %c0_i32_0 : i32, i32
  }
  func.func @transform_7(%arg0: i32) -> (i32, i32) {
    %c0_i32 = arith.constant 0 : i32
    %c0_i32_0 = arith.constant 0 : i32
    %c0_i32_1 = arith.constant 0 : i32
    return %c0_i32, %c0_i32_0 : i32, i32
  }
  func.func @transform_8(%arg0: i32) -> (i32, i32) {
    %c0_i32 = arith.constant 0 : i32
    %c0_i32_0 = arith.constant 0 : i32
    %c0_i32_1 = arith.constant 0 : i32
    return %c0_i32, %c0_i32_0 : i32, i32
  }
  func.func @transform_9(%arg0: i32) -> (i32, i32) {
    %c0_i32 = arith.constant 0 : i32
    %c0_i32_0 = arith.constant 0 : i32
    %c0_i32_1 = arith.constant 0 : i32
    return %c0_i32, %c0_i32_0 : i32, i32
  }
  func.func @transform_10(%arg0: i32) -> (i32, i32) {
    %c0_i32 = arith.constant 0 : i32
    %c0_i32_0 = arith.constant 0 : i32
    %c0_i32_1 = arith.constant 0 : i32
    return %c0_i32, %c0_i32_0 : i32, i32
  }
  func.func @transform_11(%arg0: i32) -> (i32, i32) {
    %c0_i32 = arith.constant 0 : i32
    %c0_i32_0 = arith.constant 0 : i32
    %c0_i32_1 = arith.constant 0 : i32
    return %c0_i32, %c0_i32_0 : i32, i32
  }
  func.func @transform_12(%arg0: i32) -> (i32, i32) {
    %c0_i32 = arith.constant 0 : i32
    %c0_i32_0 = arith.constant 0 : i32
    return %arg0, %c0_i32 : i32, i32
  }
  func.func @transform_13(%arg0: i32) -> (i32, i32) {
    %c0_i32 = arith.constant 0 : i32
    %c0_i32_0 = arith.constant 0 : i32
    %c0_i32_1 = arith.constant 0 : i32
    return %c0_i32, %c0_i32_0 : i32, i32
  }
  func.func @transform_14(%arg0: i32) -> (i32, i32) {
    %c0_i32 = arith.constant 0 : i32
    %c0_i32_0 = arith.constant 0 : i32
    %c0_i32_1 = arith.constant 0 : i32
    return %c0_i32, %c0_i32_0 : i32, i32
  }
}

</mosaic_0001>

<llo_original>
// kernel: tpu_custom_call.1
$region0: #{tpu_custom_call.1}
  #allocation0 [shape = 'u32[]', space=smem, size = 0x4, offset = 0x4, fixed_abs, tag = 'smem constant byte address 0x4 - core index']
  #allocation1 [shape = 'u32[144,128]{1,0:T(1,128)}', space=vmem, size = 0x12000, scoped, tag = 'internal scratch']
  #allocation2 [shape = 'f32[8,128]{1,0:T(8,128)}', space=vmem, size = 0x1000, scoped, tag = 'scratch operand']
  #allocation3 [shape = 'f32[8,128]{1,0:T(8,128)}', space=vmem, size = 0x1000, scoped, tag = 'scratch operand']
  #allocation4 [shape = 'f32[64,512]{1,0:T(8,128)}', space=vmem, size = 0x20000, scoped, tag = 'scratch operand']
  #allocation5 [shape = 'f32[64,128]{1,0:T(8,128)}', space=vmem, size = 0x8000, scoped, tag = 'scratch operand']
  %s0 = inlined_call_operand.vmem [shape: f32[64,16], index: 0, kind: input, shape index: {}]
  %s1 = inlined_call_operand.vmem [shape: f32[8,128], index: 1, kind: input, shape index: {}]
  %s2 = inlined_call_operand.vmem [shape: f32[8,128], index: 2, kind: input, shape index: {}]
  %s3 = inlined_call_operand.vmem [shape: f32[16,512], index: 3, kind: input, shape index: {}]
  %s4 = inlined_call_operand.hbm [shape: f32[128,512], index: 4, kind: input, shape index: {}]
  %s5 = inlined_call_operand.vmem [shape: f32[1,512], index: 5, kind: input, shape index: {}]
  %s6 = inlined_call_operand.hbm [shape: f32[128,256], index: 6, kind: input, shape index: {}]
  %s7 = inlined_call_operand.vmem [shape: f32[1,256], index: 7, kind: input, shape index: {}]
  %s8 = inlined_call_operand.hbm [shape: f32[256,256], index: 8, kind: input, shape index: {}]
  %s9 = inlined_call_operand.vmem [shape: f32[1,256], index: 9, kind: input, shape index: {}]
  %s10 = inlined_call_operand.hbm [shape: f32[256,128], index: 10, kind: input, shape index: {}]
  %s11 = inlined_call_operand.vmem [shape: f32[1,128], index: 11, kind: input, shape index: {}]
  %s12 = inlined_call_operand.hbm [shape: f32[64,128], index: 12, kind: output, shape index: {0}]
  %s13 = inlined_call_operand.hbm [shape: f32[8,128], index: 13, kind: output, shape index: {1}]
  %s14 = inlined_call_operand.hbm [shape: f32[8,128], index: 14, kind: output, shape index: {2}]
  %15 = xla_tuple %s12, %s13, %s14
  %s16 = sld [smem:[#allocation0]]
  $region94: #{tpu_custom_call.1} parent=0
    _
  %s18 = ssub.s32 1, %s16
  %s19 = scalar_select 0, %s18, %s16
  $region1: #{tpu_custom_call.1} parent=0
    #allocation6 [shape = 'u8[262144]{0}', space=vmem, size = 0x40000, scoped, tag = 'input window, operand 4, single buffered']
    #allocation7 [shape = 's32[1]{0}', space=sflag, size = 0x4, scoped, tag = 'scoped memory for tpu_custom_call.1']
    #allocation8 [shape = 's32[1]{0}', space=sflag, size = 0x4, scoped, tag = 'scoped memory for tpu_custom_call.1']
    #allocation9 [shape = 'u8[131072]{0}', space=vmem, size = 0x20000, scoped, tag = 'input window, operand 6, single buffered']
    #allocation10 [shape = 's32[1]{0}', space=sflag, size = 0x4, scoped, tag = 'scoped memory for tpu_custom_call.1']
    #allocation11 [shape = 'u8[262144]{0}', space=vmem, size = 0x40000, scoped, tag = 'input window, operand 8, single buffered']
    #allocation12 [shape = 'u8[131072]{0}', space=vmem, size = 0x20000, scoped, tag = 'input window, operand 10, single buffered']
    #allocation13 [shape = 's32[1]{0}', space=sflag, size = 0x4, scoped, tag = 'scoped memory for tpu_custom_call.1']
    #allocation14 [shape = 'u8[32768]{0}', space=vmem, size = 0x8000, scoped, tag = 'output window, operand 0, single buffered']
    #allocation15 [shape = 'u8[4096]{0}', space=vmem, size = 0x1000, scoped, tag = 'output window, operand 1, single buffered']
    #allocation16 [shape = 's32[1]{0}', space=sflag, size = 0x4, scoped, tag = 'scoped memory for tpu_custom_call.1']
    #allocation17 [shape = 'u8[4096]{0}', space=vmem, size = 0x1000, scoped, tag = 'output window, operand 2, single buffered']
    %20 = vsyncpa [#allocation7], 0
    %21 = vsyncpa [#allocation10], 0
    %22 = vsyncpa [#allocation13], 0
    %23 = vsyncpa [#allocation8], 0
    %24 = vsyncpa [#allocation16], 0
    // Predicated region
    $region2: #{tpu_custom_call.1} parent=1 // pred_check
      _
    $region3: #{tpu_custom_call.1} parent=1 // pred_check_branch
      %26 = sbr.rel (0) target = $region5
    $region4: #{tpu_custom_call.1} parent=1 // pred_region
      _
    $region5: #{tpu_custom_call.1} parent=1 // pred_fallthru
      _
    // Predicated region
    $region6: #{tpu_custom_call.1} parent=1 // pred_check
      _
    $region7: #{tpu_custom_call.1} parent=1 // pred_check_branch
      %28 = sbr.rel (0) target = $region9
    $region8: #{tpu_custom_call.1} parent=1 // pred_region
      _
    $region9: #{tpu_custom_call.1} parent=1 // pred_fallthru
      _
    // Predicated region
    $region10: #{tpu_custom_call.1} parent=1 // pred_check
      _
    $region11: #{tpu_custom_call.1} parent=1 // pred_check_branch
      %30 = sbr.rel (0) target = $region13
    $region12: #{tpu_custom_call.1} parent=1 // pred_region
      _
    $region13: #{tpu_custom_call.1} parent=1 // pred_fallthru
      _
    // Predicated region
    $region14: #{tpu_custom_call.1} parent=1 // pred_check
      _
    $region15: #{tpu_custom_call.1} parent=1 // pred_check_branch
      %32 = sbr.rel (0) target = $region17
    $region16: #{tpu_custom_call.1} parent=1 // pred_region
      _
    $region17: #{tpu_custom_call.1} parent=1 // pred_fallthru
      _
    // Predicated region
    $region18: #{tpu_custom_call.1} parent=1 // pred_check
      _
    $region19: #{tpu_custom_call.1} parent=1 // pred_check_branch
      %34 = sbr.rel (0) target = $region21
    $region20: #{tpu_custom_call.1} parent=1 // pred_region
      %s36 = ssub.s32 8192, 8192
      %37 = vsyncadd [#allocation7], %s36
      %s38 = sshll.u32 [#allocation6], 4
      %s39 = int_to_ptr.vmem [resolvable:$true] %s38
      %44 = dma.hbm_to_vmem [thread:$0]  %s4, 8192, %s39, [#allocation7], 512, 512, 32
    $region21: #{tpu_custom_call.1} parent=1 // pred_fallthru
      _
    // Predicated region
    $region22: #{tpu_custom_call.1} parent=1 // pred_check
      _
    $region23: #{tpu_custom_call.1} parent=1 // pred_check_branch
      %46 = sbr.rel (0) target = $region25
    $region24: #{tpu_custom_call.1} parent=1 // pred_region
      _
    $region25: #{tpu_custom_call.1} parent=1 // pred_fallthru
      _
    // Predicated region
    $region26: #{tpu_custom_call.1} parent=1 // pred_check
      _
    $region27: #{tpu_custom_call.1} parent=1 // pred_check_branch
      %48 = sbr.rel (0) target = $region29
    $region28: #{tpu_custom_call.1} parent=1 // pred_region
      %s50 = ssub.s32 4096, 4096
      %51 = vsyncadd [#allocation10], %s50
      %s52 = sshll.u32 [#allocation9], 4
      %s53 = int_to_ptr.vmem [resolvable:$true] %s52
      %58 = dma.hbm_to_vmem [thread:$0]  %s6, 4096, %s53, [#allocation10], 256, 256, 16
    $region29: #{tpu_custom_call.1} parent=1 // pred_fallthru
      _
    // Predicated region
    $region30: #{tpu_custom_call.1} parent=1 // pred_check
      _
    $region31: #{tpu_custom_call.1} parent=1 // pred_check_branch
      %60 = sbr.rel (0) target = $region33
    $region32: #{tpu_custom_call.1} parent=1 // pred_region
      _
    $region33: #{tpu_custom_call.1} parent=1 // pred_fallthru
      _
    // Predicated region
    $region34: #{tpu_custom_call.1} parent=1 // pred_check
      _
    $region35: #{tpu_custom_call.1} parent=1 // pred_check_branch
      %62 = sbr.rel (0) target = $region37
    $region36: #{tpu_custom_call.1} parent=1 // pred_region
      %s64 = ssub.s32 8192, 8192
      %65 = vsyncadd [#allocation10], %s64
      %s66 = sshll.u32 [#allocation11], 4
      %s67 = int_to_ptr.vmem [resolvable:$true] %s66
      %72 = dma.hbm_to_vmem [thread:$0]  %s8, 8192, %s67, [#allocation10], 256, 256, 16
    $region37: #{tpu_custom_call.1} parent=1 // pred_fallthru
      _
    // Predicated region
    $region38: #{tpu_custom_call.1} parent=1 // pred_check
      _
    $region39: #{tpu_custom_call.1} parent=1 // pred_check_branch
      %74 = sbr.rel (0) target = $region41
    $region40: #{tpu_custom_call.1} parent=1 // pred_region
      _
    $region41: #{tpu_custom_call.1} parent=1 // pred_fallthru
      _
    // Predicated region
    $region42: #{tpu_custom_call.1} parent=1 // pred_check
      _
    $region43: #{tpu_custom_call.1} parent=1 // pred_check_branch
      %76 = sbr.rel (0) target = $region45
    $region44: #{tpu_custom_call.1} parent=1 // pred_region
      %s78 = ssub.s32 4096, 4096
      %79 = vsyncadd [#allocation13], %s78
      %s80 = sshll.u32 [#allocation12], 4
      %s81 = int_to_ptr.vmem [resolvable:$true] %s80
      %86 = dma.hbm_to_vmem [thread:$0]  %s10, 4096, %s81, [#allocation13], 128, 128, 8
    $region45: #{tpu_custom_call.1} parent=1 // pred_fallthru
      _
    // Predicated region
    $region46: #{tpu_custom_call.1} parent=1 // pred_check
      _
    $region47: #{tpu_custom_call.1} parent=1 // pred_check_branch
      %88 = sbr.rel (0) target = $region49
    $region48: #{tpu_custom_call.1} parent=1 // pred_region
      _
    $region49: #{tpu_custom_call.1} parent=1 // pred_fallthru
      _
    // Predicated region
    $region50: #{tpu_custom_call.1} parent=1 // pred_check
      _
    $region51: #{tpu_custom_call.1} parent=1 // pred_check_branch
      %90 = sbr.rel (0) target = $region53
    $region52: #{tpu_custom_call.1} parent=1 // pred_region
      %91 = dma.done [#allocation7], 8192
    $region53: #{tpu_custom_call.1} parent=1 // pred_fallthru
      _
    // Predicated region
    $region54: #{tpu_custom_call.1} parent=1 // pred_check
      _
    $region55: #{tpu_custom_call.1} parent=1 // pred_check_branch
      %93 = sbr.rel (0) target = $region57
    $region56: #{tpu_custom_call.1} parent=1 // pred_region
      %94 = dma.done [#allocation10], 4096
    $region57: #{tpu_custom_call.1} parent=1 // pred_fallthru
      _
    // Predicated region
    $region58: #{tpu_custom_call.1} parent=1 // pred_check
      _
    $region59: #{tpu_custom_call.1} parent=1 // pred_check_branch
      %96 = sbr.rel (0) target = $region61
    $region60: #{tpu_custom_call.1} parent=1 // pred_region
      %97 = dma.done [#allocation10], 8192
    $region61: #{tpu_custom_call.1} parent=1 // pred_fallthru
      _
    // Predicated region
    $region62: #{tpu_custom_call.1} parent=1 // pred_check
      _
    $region63: #{tpu_custom_call.1} parent=1 // pred_check_branch
      %99 = sbr.rel (0) target = $region65
    $region64: #{tpu_custom_call.1} parent=1 // pred_region
      %100 = dma.done [#allocation13], 4096
    $region65: #{tpu_custom_call.1} parent=1 // pred_fallthru
      _
    %p101 = scmp.eq.s32.totalorder 0, 0
    // Predicated region
    $region66: #{tpu_custom_call.1} parent=1 // pred_check
      %p102 = pneg %p101
    $region67: #{tpu_custom_call.1} parent=1 // pred_check_branch
      %104 = sbr.rel (%p102) target = $region69
    $region68: #{tpu_custom_call.1} parent=1 // pred_region
      %v105 = vld [vmem:[%s1] sm:$0xff]
      %106 = vst [vmem:[#allocation2] sm:$0xff] %v105
      %v107 = vld [vmem:[%s2] sm:$0xff]
      %108 = vst [vmem:[#allocation3] sm:$0xff] %v107
    $region69: #{tpu_custom_call.1} parent=1 // pred_fallthru
      _
    %v109 = vld [vmem:[%s0] sm:$0xff]
    %v110 = vld [vmem:[%s0 + $0x8] sm:$0xff]
    %v111 = vld [vmem:[%s0 + $0x10] sm:$0xff]
    %v112 = vld [vmem:[%s0 + $0x18] sm:$0xff]
    %v113 = vld [vmem:[%s0 + $0x20] sm:$0xff]
    %v114 = vld [vmem:[%s0 + $0x28] sm:$0xff]
    %v115 = vld [vmem:[%s0 + $0x30] sm:$0xff]
    %v116 = vld [vmem:[%s0 + $0x38] sm:$0xff]
    %v117 = vld [vmem:[%s3] sm:$0xff]
    %v118 = vld [vmem:[%s3 + $0x8] sm:$0xff]
    %v119 = vld [vmem:[%s3 + $0x10] sm:$0xff]
    %v120 = vld [vmem:[%s3 + $0x18] sm:$0xff]
    %v121 = vld [vmem:[%s3 + $0x20] sm:$0xff]
    %v122 = vld [vmem:[%s3 + $0x28] sm:$0xff]
    %v123 = vld [vmem:[%s3 + $0x30] sm:$0xff]
    %v124 = vld [vmem:[%s3 + $0x38] sm:$0xff]
    %v125 = vld [vmem:[%s5] sm:$0xf]
    %v127 = vlaneseq
    %v128 = vshrl.u32 %v127, 7
    %v129 = vsub.s32 0, %v128
    %v130 = vrot.slane %v125, %v129
    %v131 = vlaneseq
    %v132 = vshrl.u32 %v131, 7
    %v133 = vsub.s32 1, %v132
    %v134 = vrot.slane %v125, %v133
    %v135 = vlaneseq
    %v136 = vshrl.u32 %v135, 7
    %v137 = vsub.s32 2, %v136
    %v138 = vrot.slane %v125, %v137
    %v139 = vlaneseq
    %v140 = vshrl.u32 %v139, 7
    %v141 = vsub.s32 3, %v140
    %v142 = vrot.slane %v125, %v141
    %vm147 = vcmask 130048
    %v149 = vsel %vm147, %v109, 0
    %v152 = vsel %vm147, %v110, 0
    %v155 = vsel %vm147, %v111, 0
    %v158 = vsel %vm147, %v112, 0
    %v161 = vsel %vm147, %v113, 0
    %v164 = vsel %vm147, %v114, 0
    %v167 = vsel %vm147, %v115, 0
    %v170 = vsel %vm147, %v116, 0
    %172 = vmatprep.subr.mxu0 %v118
    %173 = vmatpush1.msra.mxu0 %v117
    %174 = vmatprep.subr.mxu0 %v122
    %175 = vmatpush1.msra.mxu0 %v121
    %176 = vmatprep.subr.mxu0 0.0
    %177 = vmatpush1.msra.mxu0 0.0
    %178 = vmatprep.subr.mxu0 0.0
    %179 = vmatpush1.msra.mxu0 0.0
    %180 = vmatprep.subr.mxu0 0.0
    %181 = vmatpush1.msra.mxu0 0.0
    %182 = vmatprep.subr.mxu0 0.0
    %183 = vmatpush1.msra.mxu0 0.0
    %184 = vmatprep.subr.mxu0 0.0
    %185 = vmatpush1.msra.mxu0 0.0
    %186 = vmatprep.subr.mxu0 0.0
    %187 = vmatpush1.msra.mxu0 0.0
    %188 = vmatprep.subr.mxu0 0.0
    %189 = vmatpush1.msra.mxu0 0.0
    %190 = vmatprep.subr.mxu0 0.0
    %191 = vmatpush1.msra.mxu0 0.0
    %192 = vmatprep.subr.mxu0 0.0
    %193 = vmatpush1.msra.mxu0 0.0
    %194 = vmatprep.subr.mxu0 0.0
    %195 = vmatpush1.msra.mxu0 0.0
    %196 = vmatprep.subr.mxu0 0.0
    %197 = vmatpush1.msra.mxu0 0.0
    %198 = vmatprep.subr.mxu0 0.0
    %199 = vmatpush1.msra.mxu0 0.0
    %200 = vmatprep.subr.mxu0 0.0
    %201 = vmatpush1.msra.mxu0 0.0
    %202 = vmatprep.subr.mxu0 0.0
    %203 = vmatpush1.msra.mxu0 0.0
    %204 = vmatprep.subr.mxu0 0.0
    %205 = vmatpush1.msra.mxu0 0.0
    %206 = vmatprep.subr.mxu0 0.0
    %207 = vmatpush1.msra.mxu0 0.0
    %208 = vmatprep.subr.mxu0 0.0
    %209 = vmatpush1.msra.mxu0 0.0
    %210 = vmatprep.subr.mxu0 0.0
    %211 = vmatpush1.msra.mxu0 0.0
    %212 = vmatprep.subr.mxu0 0.0
    %213 = vmatpush1.msra.mxu0 0.0
    %214 = vmatprep.subr.mxu0 0.0
    %215 = vmatpush1.msra.mxu0 0.0
    %216 = vmatprep.subr.mxu0 0.0
    %217 = vmatpush1.msra.mxu0 0.0
    %218 = vmatprep.subr.mxu0 0.0
    %219 = vmatpush1.msra.mxu0 0.0
    %220 = vmatprep.subr.mxu0 0.0
    %221 = vmatpush1.msra.mxu0 0.0
    %222 = vmatprep.subr.mxu0 0.0
    %223 = vmatpush1.msra.mxu0 0.0
    %224 = vmatprep.subr.mxu0 0.0
    %225 = vmatpush1.msra.mxu0 0.0
    %226 = vmatprep.subr.mxu0 0.0
    %227 = vmatpush1.msra.mxu0 0.0
    %228 = vmatprep.subr.mxu0 0.0
    %229 = vmatpush1.msra.mxu0 0.0
    %230 = vmatprep.subr.mxu0 0.0
    %231 = vmatpush1.msra.mxu0 0.0
    %232 = vmatprep.subr.mxu0 0.0
    %233 = vmatpush1.msra.mxu0 0.0
    %234 = vmatprep.subr.mxu0 0.0
    %235 = vmatpush1.msra.mxu0 0.0
    %236 = vmatprep.mubr.f32.mxu0 0.0
    %237 = vmatmul.mubr.f32.gmra.mrb[0].mxu0 %v149
    %v238 = vpop.f32.mrb[0].mxu0
    %v239 = vadd.f32 %v130, %v238
    %v240 = vpop.f32.mrb[0].mxu0
    %v241 = vadd.f32 %v134, %v240
    %242 = vmatprep.mubr.f32.mxu0 0.0
    %243 = vmatmul.mubr.f32.gmra.mrb[0].mxu0 %v152
    %v244 = vpop.f32.mrb[0].mxu0
    %v245 = vadd.f32 %v130, %v244
    %v246 = vpop.f32.mrb[0].mxu0
    %v247 = vadd.f32 %v134, %v246
    %248 = vmatprep.mubr.f32.mxu0 0.0
    %249 = vmatmul.mubr.f32.gmra.mrb[0].mxu0 %v155
    %v250 = vpop.f32.mrb[0].mxu0
    %v251 = vadd.f32 %v130, %v250
    %v252 = vpop.f32.mrb[0].mxu0
    %v253 = vadd.f32 %v134, %v252
    %254 = vmatprep.mubr.f32.mxu0 0.0
    %255 = vmatmul.mubr.f32.gmra.mrb[0].mxu0 %v158
    %v256 = vpop.f32.mrb[0].mxu0
    %v257 = vadd.f32 %v130, %v256
    %v258 = vpop.f32.mrb[0].mxu0
    %v259 = vadd.f32 %v134, %v258
    %260 = vmatprep.mubr.f32.mxu0 0.0
    %261 = vmatmul.mubr.f32.gmra.mrb[0].mxu0 %v161
    %v262 = vpop.f32.mrb[0].mxu0
    %v263 = vadd.f32 %v130, %v262
    %v264 = vpop.f32.mrb[0].mxu0
    %v265 = vadd.f32 %v134, %v264
    %266 = vmatprep.mubr.f32.mxu0 0.0
    %267 = vmatmul.mubr.f32.gmra.mrb[0].mxu0 %v164
    %v268 = vpop.f32.mrb[0].mxu0
    %v269 = vadd.f32 %v130, %v268
    %v270 = vpop.f32.mrb[0].mxu0
    %v271 = vadd.f32 %v134, %v270
    %272 = vmatprep.mubr.f32.mxu0 0.0
    %273 = vmatmul.mubr.f32.gmra.mrb[0].mxu0 %v167
    %v274 = vpop.f32.mrb[0].mxu0
    %v275 = vadd.f32 %v130, %v274
    %v276 = vpop.f32.mrb[0].mxu0
    %v277 = vadd.f32 %v134, %v276
    %278 = vmatprep.mubr.f32.mxu0 0.0
    %279 = vmatmul.mubr.f32.gmra.mrb[0].mxu0 %v170
    %v280 = vpop.f32.mrb[0].mxu0
    %v281 = vadd.f32 %v130, %v280
    %v282 = vpop.f32.mrb[0].mxu0
    %v283 = vadd.f32 %v134, %v282
    %284 = vdwg.mxu0
    %285 = vmatprep.subr.mxu0 %v120
    %286 = vmatpush1.msra.mxu0 %v119
    %287 = vmatprep.subr.mxu0 %v124
    %288 = vmatpush1.msra.mxu0 %v123
    %289 = vmatprep.subr.mxu0 0.0
    %290 = vmatpush1.msra.mxu0 0.0
    %291 = vmatprep.subr.mxu0 0.0
    %292 = vmatpush1.msra.mxu0 0.0
    %293 = vmatprep.subr.mxu0 0.0
    %294 = vmatpush1.msra.mxu0 0.0
    %295 = vmatprep.subr.mxu0 0.0
    %296 = vmatpush1.msra.mxu0 0.0
    %297 = vmatprep.subr.mxu0 0.0
    %298 = vmatpush1.msra.mxu0 0.0
    %299 = vmatprep.subr.mxu0 0.0
    %300 = vmatpush1.msra.mxu0 0.0
    %301 = vmatprep.subr.mxu0 0.0
    %302 = vmatpush1.msra.mxu0 0.0
    %303 = vmatprep.subr.mxu0 0.0
    %304 = vmatpush1.msra.mxu0 0.0
    %305 = vmatprep.subr.mxu0 0.0
    %306 = vmatpush1.msra.mxu0 0.0
    %307 = vmatprep.subr.mxu0 0.0
    %308 = vmatpush1.msra.mxu0 0.0
    %309 = vmatprep.subr.mxu0 0.0
    %310 = vmatpush1.msra.mxu0 0.0
    %311 = vmatprep.subr.mxu0 0.0
    %312 = vmatpush1.msra.mxu0 0.0
    %313 = vmatprep.subr.mxu0 0.0
    %314 = vmatpush1.msra.mxu0 0.0
    %315 = vmatprep.subr.mxu0 0.0
    %316 = vmatpush1.msra.mxu0 0.0
    %317 = vmatprep.subr.mxu0 0.0
    %318 = vmatpush1.msra.mxu0 0.0
    %319 = vmatprep.subr.mxu0 0.0
    %320 = vmatpush1.msra.mxu0 0.0
    %321 = vmatprep.subr.mxu0 0.0
    %322 = vmatpush1.msra.mxu0 0.0
    %323 = vmatprep.subr.mxu0 0.0
    %324 = vmatpush1.msra.mxu0 0.0
    %325 = vmatprep.subr.mxu0 0.0
    %326 = vmatpush1.msra.mxu0 0.0
    %327 = vmatprep.subr.mxu0 0.0
    %328 = vmatpush1.msra.mxu0 0.0
    %329 = vmatprep.subr.mxu0 0.0
    %330 = vmatpush1.msra.mxu0 0.0
    %331 = vmatprep.subr.mxu0 0.0
    %332 = vmatpush1.msra.mxu0 0.0
    %333 = vmatprep.subr.mxu0 0.0
    %334 = vmatpush1.msra.mxu0 0.0
    %335 = vmatprep.subr.mxu0 0.0
    %336 = vmatpush1.msra.mxu0 0.0
    %337 = vmatprep.subr.mxu0 0.0
    %338 = vmatpush1.msra.mxu0 0.0
    %339 = vmatprep.subr.mxu0 0.0
    %340 = vmatpush1.msra.mxu0 0.0
    %341 = vmatprep.subr.mxu0 0.0
    %342 = vmatpush1.msra.mxu0 0.0
    %343 = vmatprep.subr.mxu0 0.0
    %344 = vmatpush1.msra.mxu0 0.0
    %345 = vmatprep.subr.mxu0 0.0
    %346 = vmatpush1.msra.mxu0 0.0
    %347 = vmatprep.subr.mxu0 0.0
    %348 = vmatpush1.msra.mxu0 0.0
    %349 = vmatprep.mubr.f32.mxu0 0.0
    %350 = vmatmul.mubr.f32.gmra.mrb[0].mxu0 %v149
    %v351 = vpop.f32.mrb[0].mxu0
    %v352 = vadd.f32 %v138, %v351
    %v353 = vpop.f32.mrb[0].mxu0
    %v354 = vadd.f32 %v142, %v353
    %355 = vmatprep.mubr.f32.mxu0 0.0
    %356 = vmatmul.mubr.f32.gmra.mrb[0].mxu0 %v152
    %v357 = vpop.f32.mrb[0].mxu0
    %v358 = vadd.f32 %v138, %v357
    %v359 = vpop.f32.mrb[0].mxu0
    %v360 = vadd.f32 %v142, %v359
    %361 = vmatprep.mubr.f32.mxu0 0.0
    %362 = vmatmul.mubr.f32.gmra.mrb[0].mxu0 %v155
    %v363 = vpop.f32.mrb[0].mxu0
    %v364 = vadd.f32 %v138, %v363
    %v365 = vpop.f32.mrb[0].mxu0
    %v366 = vadd.f32 %v142, %v365
    %367 = vmatprep.mubr.f32.mxu0 0.0
    %368 = vmatmul.mubr.f32.gmra.mrb[0].mxu0 %v158
    %v369 = vpop.f32.mrb[0].mxu0
    %v370 = vadd.f32 %v138, %v369
    %v371 = vpop.f32.mrb[0].mxu0
    %v372 = vadd.f32 %v142, %v371
    %373 = vmatprep.mubr.f32.mxu0 0.0
    %374 = vmatmul.mubr.f32.gmra.mrb[0].mxu0 %v161
    %v375 = vpop.f32.mrb[0].mxu0
    %v376 = vadd.f32 %v138, %v375
    %v377 = vpop.f32.mrb[0].mxu0
    %v378 = vadd.f32 %v142, %v377
    %379 = vmatprep.mubr.f32.mxu0 0.0
    %380 = vmatmul.mubr.f32.gmra.mrb[0].mxu0 %v164
    %v381 = vpop.f32.mrb[0].mxu0
    %v382 = vadd.f32 %v138, %v381
    %v383 = vpop.f32.mrb[0].mxu0
    %v384 = vadd.f32 %v142, %v383
    %385 = vmatprep.mubr.f32.mxu0 0.0
    %386 = vmatmul.mubr.f32.gmra.mrb[0].mxu0 %v167
    %v387 = vpop.f32.mrb[0].mxu0
    %v388 = vadd.f32 %v138, %v387
    %v389 = vpop.f32.mrb[0].mxu0
    %v390 = vadd.f32 %v142, %v389
    %391 = vmatprep.mubr.f32.mxu0 0.0
    %392 = vmatmul.mubr.f32.gmra.mrb[0].mxu0 %v170
    %v393 = vpop.f32.mrb[0].mxu0
    %v394 = vadd.f32 %v138, %v393
    %v395 = vpop.f32.mrb[0].mxu0
    %v396 = vadd.f32 %v142, %v395
    %397 = vdwg.mxu0
    %398 = vst [vmem:[#allocation4] sm:$0xff] %v239
    %399 = vst [vmem:[#allocation4 + $0x8] sm:$0xff] %v241
    %400 = vst [vmem:[#allocation4 + $0x10] sm:$0xff] %v352
    %401 = vst [vmem:[#allocation4 + $0x18] sm:$0xff] %v354
    %402 = vst [vmem:[#allocation4 + $0x20] sm:$0xff] %v245
    %403 = vst [vmem:[#allocation4 + $0x28] sm:$0xff] %v247
    %404 = vst [vmem:[#allocation4 + $0x30] sm:$0xff] %v358
    %405 = vst [vmem:[#allocation4 + $0x38] sm:$0xff] %v360
    %406 = vst [vmem:[#allocation4 + $0x40] sm:$0xff] %v251
    %407 = vst [vmem:[#allocation4 + $0x48] sm:$0xff] %v253
    %408 = vst [vmem:[#allocation4 + $0x50] sm:$0xff] %v364
    %409 = vst [vmem:[#allocation4 + $0x58] sm:$0xff] %v366
    %410 = vst [vmem:[#allocation4 + $0x60] sm:$0xff] %v257
    %411 = vst [vmem:[#allocation4 + $0x68] sm:$0xff] %v259
    %412 = vst [vmem:[#allocation4 + $0x70] sm:$0xff] %v370
    %413 = vst [vmem:[#allocation4 + $0x78] sm:$0xff] %v372
    %414 = vst [vmem:[#allocation4 + $0x80] sm:$0xff] %v263
    %415 = vst [vmem:[#allocation4 + $0x88] sm:$0xff] %v265
    %416 = vst [vmem:[#allocation4 + $0x90] sm:$0xff] %v376
    %417 = vst [vmem:[#allocation4 + $0x98] sm:$0xff] %v378
    %418 = vst [vmem:[#allocation4 + $0xa0] sm:$0xff] %v269
    %419 = vst [vmem:[#allocation4 + $0xa8] sm:$0xff] %v271
    %420 = vst [vmem:[#allocation4 + $0xb0] sm:$0xff] %v382
    %421 = vst [vmem:[#allocation4 + $0xb8] sm:$0xff] %v384
    %422 = vst [vmem:[#allocation4 + $0xc0] sm:$0xff] %v275
    %423 = vst [vmem:[#allocation4 + $0xc8] sm:$0xff] %v277
    %424 = vst [vmem:[#allocation4 + $0xd0] sm:$0xff] %v388
    %425 = vst [vmem:[#allocation4 + $0xd8] sm:$0xff] %v390
    %426 = vst [vmem:[#allocation4 + $0xe0] sm:$0xff] %v281
    %427 = vst [vmem:[#allocation4 + $0xe8] sm:$0xff] %v283
    %428 = vst [vmem:[#allocation4 + $0xf0] sm:$0xff] %v394
    %429 = vst [vmem:[#allocation4 + $0xf8] sm:$0xff] %v396
    %v430 = vld [vmem:[#allocation2] sm:$0xff]
    %v431 = vld [vmem:[#allocation3] sm:$0xff]
    %s432 = smul.u32 0, 4
    %s433 = smul.addr %s432, 8
    %s434 = scalar_lea.vmem [#allocation4], %s433
    %v435 = vld [vmem:[%s434] sm:$0xff]
    %v436 = vld [vmem:[%s434 + $0x8] sm:$0xff]
    %v437 = vld [vmem:[%s434 + $0x10] sm:$0xff]
    %v438 = vld [vmem:[%s434 + $0x18] sm:$0xff]
    %v439 = vld [vmem:[#allocation6] sm:$0xff]
    %v440 = vld [vmem:[#allocation6 + $0x8] sm:$0xff]
    %v441 = vld [vmem:[#allocation6 + $0x10] sm:$0xff]
    %v442 = vld [vmem:[#allocation6 + $0x18] sm:$0xff]
    %v443 = vld [vmem:[#allocation6 + $0x20] sm:$0xff]
    %v444 = vld [vmem:[#allocation6 + $0x28] sm:$0xff]
    %v445 = vld [vmem:[#allocation6 + $0x30] sm:$0xff]
    %v446 = vld [vmem:[#allocation6 + $0x38] sm:$0xff]
    %v447 = vld [vmem:[#allocation6 + $0x40] sm:$0xff]
    %v448 = vld [vmem:[#allocation6 + $0x48] sm:$0xff]
    %v449 = vld [vmem:[#allocation6 + $0x50] sm:$0xff]
    %v450 = vld [vmem:[#allocation6 + $0x58] sm:$0xff]
    %v451 = vld [vmem:[#allocation6 + $0x60] sm:$0xff]
    %v452 = vld [vmem:[#allocation6 + $0x68] sm:$0xff]
    %v453 = vld [vmem:[#allocation6 + $0x70] sm:$0xff]
    %v454 = vld [vmem:[#allocation6 + $0x78] sm:$0xff]
    %v455 = vld [vmem:[#allocation6 + $0x80] sm:$0xff]
    %v456 = vld [vmem:[#allocation6 + $0x88] sm:$0xff]
    %v457 = vld [vmem:[#allocation6 + $0x90] sm:$0xff]
    %v458 = vld [vmem:[#allocation6 + $0x98] sm:$0xff]
    %v459 = vld [vmem:[#allocation6 + $0xa0] sm:$0xff]
    %v460 = vld [vmem:[#allocation6 + $0xa8] sm:$0xff]
    %v461 = vld [vmem:[#allocation6 + $0xb0] sm:$0xff]
    %v462 = vld [vmem:[#allocation6 + $0xb8] sm:$0xff]
    %v463 = vld [vmem:[#allocation6 + $0xc0] sm:$0xff]
    %v464 = vld [vmem:[#allocation6 + $0xc8] sm:$0xff]
    %v465 = vld [vmem:[#allocation6 + $0xd0] sm:$0xff]
    %v466 = vld [vmem:[#allocation6 + $0xd8] sm:$0xff]
    %v467 = vld [vmem:[#allocation6 + $0xe0] sm:$0xff]
    %v468 = vld [vmem:[#allocation6 + $0xe8] sm:$0xff]
    %v469 = vld [vmem:[#allocation6 + $0xf0] sm:$0xff]
    %v470 = vld [vmem:[#allocation6 + $0xf8] sm:$0xff]
    %v471 = vld [vmem:[#allocation6 + $0x100] sm:$0xff]
    %v472 = vld [vmem:[#allocation6 + $0x108] sm:$0xff]
    %v473 = vld [vmem:[#allocation6 + $0x110] sm:$0xff]
    %v474 = vld [vmem:[#allocation6 + $0x118] sm:$0xff]
    %v475 = vld [vmem:[#allocation6 + $0x120] sm:$0xff]
    %v476 = vld [vmem:[#allocation6 + $0x128] sm:$0xff]
    %v477 = vld [vmem:[#allocation6 + $0x130] sm:$0xff]
    %v478 = vld [vmem:[#allocation6 + $0x138] sm:$0xff]
    %v479 = vld [vmem:[#allocation6 + $0x140] sm:$0xff]
    %v480 = vld [vmem:[#allocation6 + $0x148] sm:$0xff]
    %v481 = vld [vmem:[#allocation6 + $0x150] sm:$0xff]
    %v482 = vld [vmem:[#allocation6 + $0x158] sm:$0xff]
    %v483 = vld [vmem:[#allocation6 + $0x160] sm:$0xff]
    %v484 = vld [vmem:[#allocation6 + $0x168] sm:$0xff]
    %v485 = vld [vmem:[#allocation6 + $0x170] sm:$0xff]
    %v486 = vld [vmem:[#allocation6 + $0x178] sm:$0xff]
    %v487 = vld [vmem:[#allocation6 + $0x180] sm:$0xff]
    %v488 = vld [vmem:[#allocation6 + $0x188] sm:$0xff]
    %v489 = vld [vmem:[#allocation6 + $0x190] sm:$0xff]
    %v490 = vld [vmem:[#allocation6 + $0x198] sm:$0xff]
    %v491 = vld [vmem:[#allocation6 + $0x1a0] sm:$0xff]
    %v492 = vld [vmem:[#allocation6 + $0x1a8] sm:$0xff]
    %v493 = vld [vmem:[#allocation6 + $0x1b0] sm:$0xff]
    %v494 = vld [vmem:[#allocation6 + $0x1b8] sm:$0xff]
    %v495 = vld [vmem:[#allocation6 + $0x1c0] sm:$0xff]
    %v496 = vld [vmem:[#allocation6 + $0x1c8] sm:$0xff]
    %v497 = vld [vmem:[#allocation6 + $0x1d0] sm:$0xff]
    %v498 = vld [vmem:[#allocation6 + $0x1d8] sm:$0xff]
    %v499 = vld [vmem:[#allocation6 + $0x1e0] sm:$0xff]
    %v500 = vld [vmem:[#allocation6 + $0x1e8] sm:$0xff]
    %v501 = vld [vmem:[#allocation6 + $0x1f0] sm:$0xff]
    %v502 = vld [vmem:[#allocation6 + $0x1f8] sm:$0xff]
    %503 = vmatprep.subr.mxu0 %v440
    %504 = vmatpush1.msra.mxu0 %v439
    %505 = vmatprep.subr.mxu0 %v444
    %506 = vmatpush1.msra.mxu0 %v443
    %507 = vmatprep.subr.mxu0 %v448
    %508 = vmatpush1.msra.mxu0 %v447
    %509 = vmatprep.subr.mxu0 %v452
    %510 = vmatpush1.msra.mxu0 %v451
    %511 = vmatprep.subr.mxu0 %v456
    %512 = vmatpush1.msra.mxu0 %v455
    %513 = vmatprep.subr.mxu0 %v460
    %514 = vmatpush1.msra.mxu0 %v459
    %515 = vmatprep.subr.mxu0 %v464
    %516 = vmatpush1.msra.mxu0 %v463
    %517 = vmatprep.subr.mxu0 %v468
    %518 = vmatpush1.msra.mxu0 %v467
    %519 = vmatprep.subr.mxu0 %v472
    %520 = vmatpush1.msra.mxu0 %v471
    %521 = vmatprep.subr.mxu0 %v476
    %522 = vmatpush1.msra.mxu0 %v475
    %523 = vmatprep.subr.mxu0 %v480
    %524 = vmatpush1.msra.mxu0 %v479
    %525 = vmatprep.subr.mxu0 %v484
    %526 = vmatpush1.msra.mxu0 %v483
    %527 = vmatprep.subr.mxu0 %v488
    %528 = vmatpush1.msra.mxu0 %v487
    %529 = vmatprep.subr.mxu0 %v492
    %530 = vmatpush1.msra.mxu0 %v491
    %531 = vmatprep.subr.mxu0 %v496
    %532 = vmatpush1.msra.mxu0 %v495
    %533 = vmatprep.subr.mxu0 %v500
    %534 = vmatpush1.msra.mxu0 %v499
    %535 = vmatprep.subr.mxu0 0.0
    %536 = vmatpush1.msra.mxu0 0.0
    %537 = vmatprep.subr.mxu0 0.0
    %538 = vmatpush1.msra.mxu0 0.0
    %539 = vmatprep.subr.mxu0 0.0
    %540 = vmatpush1.msra.mxu0 0.0
    %541 = vmatprep.subr.mxu0 0.0
    %542 = vmatpush1.msra.mxu0 0.0
    %543 = vmatprep.subr.mxu0 0.0
    %544 = vmatpush1.msra.mxu0 0.0
    %545 = vmatprep.subr.mxu0 0.0
    %546 = vmatpush1.msra.mxu0 0.0
    %547 = vmatprep.subr.mxu0 0.0
    %548 = vmatpush1.msra.mxu0 0.0
    %549 = vmatprep.subr.mxu0 0.0
    %550 = vmatpush1.msra.mxu0 0.0
    %551 = vmatprep.subr.mxu0 0.0
    %552 = vmatpush1.msra.mxu0 0.0
    %553 = vmatprep.subr.mxu0 0.0
    %554 = vmatpush1.msra.mxu0 0.0
    %555 = vmatprep.subr.mxu0 0.0
    %556 = vmatpush1.msra.mxu0 0.0
    %557 = vmatprep.subr.mxu0 0.0
    %558 = vmatpush1.msra.mxu0 0.0
    %559 = vmatprep.subr.mxu0 0.0
    %560 = vmatpush1.msra.mxu0 0.0
    %561 = vmatprep.subr.mxu0 0.0
    %562 = vmatpush1.msra.mxu0 0.0
    %563 = vmatprep.subr.mxu0 0.0
    %564 = vmatpush1.msra.mxu0 0.0
    %565 = vmatprep.subr.mxu0 0.0
    %566 = vmatpush1.msra.mxu0 0.0
    %567 = vmatprep.mubr.f32.mxu0 0.0
    %568 = vmatmul.mubr.f32.gmra.mrb[0].mxu0 %v430
    %v569 = vpop.f32.mrb[0].mxu0
    %v570 = vadd.f32 0.0, %v569
    %v571 = vpop.f32.mrb[0].mxu0
    %v572 = vadd.f32 0.0, %v571
    %573 = vdwg.mxu0
    %574 = vmatprep.subr.mxu0 %v442
    %575 = vmatpush1.msra.mxu0 %v441
    %576 = vmatprep.subr.mxu0 %v446
    %577 = vmatpush1.msra.mxu0 %v445
    %578 = vmatprep.subr.mxu0 %v450
    %579 = vmatpush1.msra.mxu0 %v449
    %580 = vmatprep.subr.mxu0 %v454
    %581 = vmatpush1.msra.mxu0 %v453
    %582 = vmatprep.subr.mxu0 %v458
    %583 = vmatpush1.msra.mxu0 %v457
    %584 = vmatprep.subr.mxu0 %v462
    %585 = vmatpush1.msra.mxu0 %v461
    %586 = vmatprep.subr.mxu0 %v466
    %587 = vmatpush1.msra.mxu0 %v465
    %588 = vmatprep.subr.mxu0 %v470
    %589 = vmatpush1.msra.mxu0 %v469
    %590 = vmatprep.subr.mxu0 %v474
    %591 = vmatpush1.msra.mxu0 %v473
    %592 = vmatprep.subr.mxu0 %v478
    %593 = vmatpush1.msra.mxu0 %v477
    %594 = vmatprep.subr.mxu0 %v482
    %595 = vmatpush1.msra.mxu0 %v481
    %596 = vmatprep.subr.mxu0 %v486
    %597 = vmatpush1.msra.mxu0 %v485
    %598 = vmatprep.subr.mxu0 %v490
    %599 = vmatpush1.msra.mxu0 %v489
    %600 = vmatprep.subr.mxu0 %v494
    %601 = vmatpush1.msra.mxu0 %v493
    %602 = vmatprep.subr.mxu0 %v498
    %603 = vmatpush1.msra.mxu0 %v497
    %604 = vmatprep.subr.mxu0 %v502
    %605 = vmatpush1.msra.mxu0 %v501
    %606 = vmatprep.subr.mxu0 0.0
    %607 = vmatpush1.msra.mxu0 0.0
    %608 = vmatprep.subr.mxu0 0.0
    %609 = vmatpush1.msra.mxu0 0.0
    %610 = vmatprep.subr.mxu0 0.0
    %611 = vmatpush1.msra.mxu0 0.0
    %612 = vmatprep.subr.mxu0 0.0
    %613 = vmatpush1.msra.mxu0 0.0
    %614 = vmatprep.subr.mxu0 0.0
    %615 = vmatpush1.msra.mxu0 0.0
    %616 = vmatprep.subr.mxu0 0.0
    %617 = vmatpush1.msra.mxu0 0.0
    %618 = vmatprep.subr.mxu0 0.0
    %619 = vmatpush1.msra.mxu0 0.0
    %620 = vmatprep.subr.mxu0 0.0
    %621 = vmatpush1.msra.mxu0 0.0
    %622 = vmatprep.subr.mxu0 0.0
    %623 = vmatpush1.msra.mxu0 0.0
    %624 = vmatprep.subr.mxu0 0.0
    %625 = vmatpush1.msra.mxu0 0.0
    %626 = vmatprep.subr.mxu0 0.0
    %627 = vmatpush1.msra.mxu0 0.0
    %628 = vmatprep.subr.mxu0 0.0
    %629 = vmatpush1.msra.mxu0 0.0
    %630 = vmatprep.subr.mxu0 0.0
    %631 = vmatpush1.msra.mxu0 0.0
    %632 = vmatprep.subr.mxu0 0.0
    %633 = vmatpush1.msra.mxu0 0.0
    %634 = vmatprep.subr.mxu0 0.0
    %635 = vmatpush1.msra.mxu0 0.0
    %636 = vmatprep.subr.mxu0 0.0
    %637 = vmatpush1.msra.mxu0 0.0
    %638 = vmatprep.mubr.f32.mxu0 0.0
    %639 = vmatmul.mubr.f32.gmra.mrb[0].mxu0 %v430
    %v640 = vpop.f32.mrb[0].mxu0
    %v641 = vadd.f32 0.0, %v640
    %v642 = vpop.f32.mrb[0].mxu0
    %v643 = vadd.f32 0.0, %v642
    %644 = vdwg.mxu0
    %v645 = vadd.f32 %v435, %v570
    %v646 = vadd.f32 %v436, %v572
    %v647 = vadd.f32 %v437, %v641
    %v648 = vadd.f32 %v438, %v643
    %v649 = vxor.u32 %v645, 2147483648
    %v650 = vmul.f32 %v649, 1.442695
    %v651 = vpow.pop %v650
    %v652 = vadd.f32 %v651, 1.0
    %v653 = vrcp.pop %v652
    %v654 = vmul.f32 1.0, %v653
    %v655 = vxor.u32 %v646, 2147483648
    %v656 = vmul.f32 %v655, 1.442695
    %v657 = vpow.pop %v656
    %v658 = vadd.f32 %v657, 1.0
    %v659 = vrcp.pop %v658
    %v660 = vmul.f32 1.0, %v659
    %v661 = vtanh.pop %v647
    %v662 = vxor.u32 %v648, 2147483648
    %v663 = vmul.f32 %v662, 1.442695
    %v664 = vpow.pop %v663
    %v665 = vadd.f32 %v664, 1.0
    %v666 = vrcp.pop %v665
    %v667 = vmul.f32 1.0, %v666
    %v668 = vmul.f32 %v660, %v431
    %v669 = vmul.f32 %v654, %v661
    %v670 = vadd.f32 %v668, %v669
    %v671 = vtanh.pop %v670
    %v672 = vmul.f32 %v667, %v671
    %673 = vst [vmem:[#allocation5] sm:$0xff] %v672
    %s674 = smul.u32 1, 4
    %s675 = smul.addr %s674, 8
    %s676 = scalar_lea.vmem [#allocation4], %s675
    %v677 = vld [vmem:[%s676] sm:$0xff]
    %v678 = vld [vmem:[%s676 + $0x8] sm:$0xff]
    %v679 = vld [vmem:[%s676 + $0x10] sm:$0xff]
    %v680 = vld [vmem:[%s676 + $0x18] sm:$0xff]
    %v681 = vld [vmem:[#allocation6] sm:$0xff]
    %v682 = vld [vmem:[#allocation6 + $0x8] sm:$0xff]
    %v683 = vld [vmem:[#allocation6 + $0x10] sm:$0xff]
    %v684 = vld [vmem:[#allocation6 + $0x18] sm:$0xff]
    %v685 = vld [vmem:[#allocation6 + $0x20] sm:$0xff]
    %v686 = vld [vmem:[#allocation6 + $0x28] sm:$0xff]
    %v687 = vld [vmem:[#allocation6 + $0x30] sm:$0xff]
    %v688 = vld [vmem:[#allocation6 + $0x38] sm:$0xff]
    %v689 = vld [vmem:[#allocation6 + $0x40] sm:$0xff]
    %v690 = vld [vmem:[#allocation6 + $0x48] sm:$0xff]
    %v691 = vld [vmem:[#allocation6 + $0x50] sm:$0xff]
    %v692 = vld [vmem:[#allocation6 + $0x58] sm:$0xff]
    %v693 = vld [vmem:[#allocation6 + $0x60] sm:$0xff]
    %v694 = vld [vmem:[#allocation6 + $0x68] sm:$0xff]
    %v695 = vld [vmem:[#allocation6 + $0x70] sm:$0xff]
    %v696 = vld [vmem:[#allocation6 + $0x78] sm:$0xff]
    %v697 = vld [vmem:[#allocation6 + $0x80] sm:$0xff]
    %v698 = vld [vmem:[#allocation6 + $0x88] sm:$0xff]
    %v699 = vld [vmem:[#allocation6 + $0x90] sm:$0xff]
    %v700 = vld [vmem:[#allocation6 + $0x98] sm:$0xff]
    %v701 = vld [vmem:[#allocation6 + $0xa0] sm:$0xff]
    %v702 = vld [vmem:[#allocation6 + $0xa8] sm:$0xff]
    %v703 = vld [vmem:[#allocation6 + $0xb0] sm:$0xff]
    %v704 = vld [vmem:[#allocation6 + $0xb8] sm:$0xff]
    %v705 = vld [vmem:[#allocation6 + $0xc0] sm:$0xff]
    %v706 = vld [vmem:[#allocation6 + $0xc8] sm:$0xff]
    %v707 = vld [vmem:[#allocation6 + $0xd0] sm:$0xff]
    %v708 = vld [vmem:[#allocation6 + $0xd8] sm:$0xff]
    %v709 = vld [vmem:[#allocation6 + $0xe0] sm:$0xff]
    %v710 = vld [vmem:[#allocation6 + $0xe8] sm:$0xff]
    %v711 = vld [vmem:[#allocation6 + $0xf0] sm:$0xff]
    %v712 = vld [vmem:[#allocation6 + $0xf8] sm:$0xff]
    %v713 = vld [vmem:[#allocation6 + $0x100] sm:$0xff]
    %v714 = vld [vmem:[#allocation6 + $0x108] sm:$0xff]
    %v715 = vld [vmem:[#allocation6 + $0x110] sm:$0xff]
    %v716 = vld [vmem:[#allocation6 + $0x118] sm:$0xff]
    %v717 = vld [vmem:[#allocation6 + $0x120] sm:$0xff]
    %v718 = vld [vmem:[#allocation6 + $0x128] sm:$0xff]
    %v719 = vld [vmem:[#allocation6 + $0x130] sm:$0xff]
    %v720 = vld [vmem:[#allocation6 + $0x138] sm:$0xff]
    %v721 = vld [vmem:[#allocation6 + $0x140] sm:$0xff]
    %v722 = vld [vmem:[#allocation6 + $0x148] sm:$0xff]
    %v723 = vld [vmem:[#allocation6 + $0x150] sm:$0xff]
    %v724 = vld [vmem:[#allocation6 + $0x158] sm:$0xff]
    %v725 = vld [vmem:[#allocation6 + $0x160] sm:$0xff]
    %v726 = vld [vmem:[#allocation6 + $0x168] sm:$0xff]
    %v727 = vld [vmem:[#allocation6 + $0x170] sm:$0xff]
    %v728 = vld [vmem:[#allocation6 + $0x178] sm:$0xff]
    %v729 = vld [vmem:[#allocation6 + $0x180] sm:$0xff]
    %v730 = vld [vmem:[#allocation6 + $0x188] sm:$0xff]
    %v731 = vld [vmem:[#allocation6 + $0x190] sm:$0xff]
    %v732 = vld [vmem:[#allocation6 + $0x198] sm:$0xff]
    %v733 = vld [vmem:[#allocation6 + $0x1a0] sm:$0xff]
    %v734 = vld [vmem:[#allocation6 + $0x1a8] sm:$0xff]
    %v735 = vld [vmem:[#allocation6 + $0x1b0] sm:$0xff]
    %v736 = vld [vmem:[#allocation6 + $0x1b8] sm:$0xff]
    %v737 = vld [vmem:[#allocation6 + $0x1c0] sm:$0xff]
    %v738 = vld [vmem:[#allocation6 + $0x1c8] sm:$0xff]
    %v739 = vld [vmem:[#allocation6 + $0x1d0] sm:$0xff]
    %v740 = vld [vmem:[#allocation6 + $0x1d8] sm:$0xff]
    %v741 = vld [vmem:[#allocation6 + $0x1e0] sm:$0xff]
    %v742 = vld [vmem:[#allocation6 + $0x1e8] sm:$0xff]
    %v743 = vld [vmem:[#allocation6 + $0x1f0] sm:$0xff]
    %v744 = vld [vmem:[#allocation6 + $0x1f8] sm:$0xff]
    %745 = vmatprep.subr.mxu0 %v682
    %746 = vmatpush1.msra.mxu0 %v681
    %747 = vmatprep.subr.mxu0 %v686
    %748 = vmatpush1.msra.mxu0 %v685
    %749 = vmatprep.subr.mxu0 %v690
    %750 = vmatpush1.msra.mxu0 %v689
    %751 = vmatprep.subr.mxu0 %v694
    %752 = vmatpush1.msra.mxu0 %v693
    %753 = vmatprep.subr.mxu0 %v698
    %754 = vmatpush1.msra.mxu0 %v697
    %755 = vmatprep.subr.mxu0 %v702
    %756 = vmatpush1.msra.mxu0 %v701
    %757 = vmatprep.subr.mxu0 %v706
    %758 = vmatpush1.msra.mxu0 %v705
    %759 = vmatprep.subr.mxu0 %v710
    %760 = vmatpush1.msra.mxu0 %v709
    %761 = vmatprep.subr.mxu0 %v714
    %762 = vmatpush1.msra.mxu0 %v713
    %763 = vmatprep.subr.mxu0 %v718
    %764 = vmatpush1.msra.mxu0 %v717
    %765 = vmatprep.subr.mxu0 %v722
    %766 = vmatpush1.msra.mxu0 %v721
    %767 = vmatprep.subr.mxu0 %v726
    %768 = vmatpush1.msra.mxu0 %v725
    %769 = vmatprep.subr.mxu0 %v730
    %770 = vmatpush1.msra.mxu0 %v729
    %771 = vmatprep.subr.mxu0 %v734
    %772 = vmatpush1.msra.mxu0 %v733
    %773 = vmatprep.subr.mxu0 %v738
    %774 = vmatpush1.msra.mxu0 %v737
    %775 = vmatprep.subr.mxu0 %v742
    %776 = vmatpush1.msra.mxu0 %v741
    %777 = vmatprep.subr.mxu0 0.0
    %778 = vmatpush1.msra.mxu0 0.0
    %779 = vmatprep.subr.mxu0 0.0
    %780 = vmatpush1.msra.mxu0 0.0
    %781 = vmatprep.subr.mxu0 0.0
    %782 = vmatpush1.msra.mxu0 0.0
    %783 = vmatprep.subr.mxu0 0.0
    %784 = vmatpush1.msra.mxu0 0.0
    %785 = vmatprep.subr.mxu0 0.0
    %786 = vmatpush1.msra.mxu0 0.0
    %787 = vmatprep.subr.mxu0 0.0
    %788 = vmatpush1.msra.mxu0 0.0
    %789 = vmatprep.subr.mxu0 0.0
    %790 = vmatpush1.msra.mxu0 0.0
    %791 = vmatprep.subr.mxu0 0.0
    %792 = vmatpush1.msra.mxu0 0.0
    %793 = vmatprep.subr.mxu0 0.0
    %794 = vmatpush1.msra.mxu0 0.0
    %795 = vmatprep.subr.mxu0 0.0
    %796 = vmatpush1.msra.mxu0 0.0
    %797 = vmatprep.subr.mxu0 0.0
    %798 = vmatpush1.msra.mxu0 0.0
    %799 = vmatprep.subr.mxu0 0.0
    %800 = vmatpush1.msra.mxu0 0.0
    %801 = vmatprep.subr.mxu0 0.0
    %802 = vmatpush1.msra.mxu0 0.0
    %803 = vmatprep.subr.mxu0 0.0
    %804 = vmatpush1.msra.mxu0 0.0
    %805 = vmatprep.subr.mxu0 0.0
    %806 = vmatpush1.msra.mxu0 0.0
    %807 = vmatprep.subr.mxu0 0.0
    %808 = vmatpush1.msra.mxu0 0.0
    %809 = vmatprep.mubr.f32.mxu0 0.0
    %810 = vmatmul.mubr.f32.gmra.mrb[0].mxu0 %v672
    %v811 = vpop.f32.mrb[0].mxu0
    %v812 = vadd.f32 0.0, %v811
    %v813 = vpop.f32.mrb[0].mxu0
    %v814 = vadd.f32 0.0, %v813
    %815 = vdwg.mxu0
    %816 = vmatprep.subr.mxu0 %v684
    %817 = vmatpush1.msra.mxu0 %v683
    %818 = vmatprep.subr.mxu0 %v688
    %819 = vmatpush1.msra.mxu0 %v687
    %820 = vmatprep.subr.mxu0 %v692
    %821 = vmatpush1.msra.mxu0 %v691
    %822 = vmatprep.subr.mxu0 %v696
    %823 = vmatpush1.msra.mxu0 %v695
    %824 = vmatprep.subr.mxu0 %v700
    %825 = vmatpush1.msra.mxu0 %v699
    %826 = vmatprep.subr.mxu0 %v704
    %827 = vmatpush1.msra.mxu0 %v703
    %828 = vmatprep.subr.mxu0 %v708
    %829 = vmatpush1.msra.mxu0 %v707
    %830 = vmatprep.subr.mxu0 %v712
    %831 = vmatpush1.msra.mxu0 %v711
    %832 = vmatprep.subr.mxu0 %v716
    %833 = vmatpush1.msra.mxu0 %v715
    %834 = vmatprep.subr.mxu0 %v720
    %835 = vmatpush1.msra.mxu0 %v719
    %836 = vmatprep.subr.mxu0 %v724
    %837 = vmatpush1.msra.mxu0 %v723
    %838 = vmatprep.subr.mxu0 %v728
    %839 = vmatpush1.msra.mxu0 %v727
    %840 = vmatprep.subr.mxu0 %v732
    %841 = vmatpush1.msra.mxu0 %v731
    %842 = vmatprep.subr.mxu0 %v736
    %843 = vmatpush1.msra.mxu0 %v735
    %844 = vmatprep.subr.mxu0 %v740
    %845 = vmatpush1.msra.mxu0 %v739
    %846 = vmatprep.subr.mxu0 %v744
    %847 = vmatpush1.msra.mxu0 %v743
    %848 = vmatprep.subr.mxu0 0.0
    %849 = vmatpush1.msra.mxu0 0.0
    %850 = vmatprep.subr.mxu0 0.0
    %851 = vmatpush1.msra.mxu0 0.0
    %852 = vmatprep.subr.mxu0 0.0
    %853 = vmatpush1.msra.mxu0 0.0
    %854 = vmatprep.subr.mxu0 0.0
    %855 = vmatpush1.msra.mxu0 0.0
    %856 = vmatprep.subr.mxu0 0.0
    %857 = vmatpush1.msra.mxu0 0.0
    %858 = vmatprep.subr.mxu0 0.0
    %859 = vmatpush1.msra.mxu0 0.0
    %860 = vmatprep.subr.mxu0 0.0
    %861 = vmatpush1.msra.mxu0 0.0
    %862 = vmatprep.subr.mxu0 0.0
    %863 = vmatpush1.msra.mxu0 0.0
    %864 = vmatprep.subr.mxu0 0.0
    %865 = vmatpush1.msra.mxu0 0.0
    %866 = vmatprep.subr.mxu0 0.0
    %867 = vmatpush1.msra.mxu0 0.0
    %868 = vmatprep.subr.mxu0 0.0
    %869 = vmatpush1.msra.mxu0 0.0
    %870 = vmatprep.subr.mxu0 0.0
    %871 = vmatpush1.msra.mxu0 0.0
    %872 = vmatprep.subr.mxu0 0.0
    %873 = vmatpush1.msra.mxu0 0.0
    %874 = vmatprep.subr.mxu0 0.0
    %875 = vmatpush1.msra.mxu0 0.0
    %876 = vmatprep.subr.mxu0 0.0
    %877 = vmatpush1.msra.mxu0 0.0
    %878 = vmatprep.subr.mxu0 0.0
    %879 = vmatpush1.msra.mxu0 0.0
    %880 = vmatprep.mubr.f32.mxu0 0.0
    %881 = vmatmul.mubr.f32.gmra.mrb[0].mxu0 %v672
    %v882 = vpop.f32.mrb[0].mxu0
    %v883 = vadd.f32 0.0, %v882
    %v884 = vpop.f32.mrb[0].mxu0
    %v885 = vadd.f32 0.0, %v884
    %886 = vdwg.mxu0
    %v887 = vadd.f32 %v677, %v812
    %v888 = vadd.f32 %v678, %v814
    %v889 = vadd.f32 %v679, %v883
    %v890 = vadd.f32 %v680, %v885
    %v891 = vxor.u32 %v887, 2147483648
    %v892 = vmul.f32 %v891, 1.442695
    %v893 = vpow.pop %v892
    %v894 = vadd.f32 %v893, 1.0
    %v895 = vrcp.pop %v894
    %v896 = vmul.f32 1.0, %v895
    %v897 = vxor.u32 %v888, 2147483648
    %v898 = vmul.f32 %v897, 1.442695
    %v899 = vpow.pop %v898
    %v900 = vadd.f32 %v899, 1.0
    %v901 = vrcp.pop %v900
    %v902 = vmul.f32 1.0, %v901
    %v903 = vtanh.pop %v889
    %v904 = vxor.u32 %v890, 2147483648
    %v905 = vmul.f32 %v904, 1.442695
    %v906 = vpow.pop %v905
    %v907 = vadd.f32 %v906, 1.0
    %v908 = vrcp.pop %v907
    %v909 = vmul.f32 1.0, %v908
    %v910 = vmul.f32 %v902, %v670
    %v911 = vmul.f32 %v896, %v903
    %v912 = vadd.f32 %v910, %v911
    %v913 = vtanh.pop %v912
    %v914 = vmul.f32 %v909, %v913
    %s915 = scalar_lea.vmem [#allocation5], 8
    %916 = vst [vmem:[%s915] sm:$0xff] %v914
    %s917 = smul.u32 2, 4
    %s918 = smul.addr %s917, 8
    %s919 = scalar_lea.vmem [#allocation4], %s918
    %v920 = vld [vmem:[%s919] sm:$0xff]
    %v921 = vld [vmem:[%s919 + $0x8] sm:$0xff]
    %v922 = vld [vmem:[%s919 + $0x10] sm:$0xff]
    %v923 = vld [vmem:[%s919 + $0x18] sm:$0xff]
    %v924 = vld [vmem:[#allocation6] sm:$0xff]
    %v925 = vld [vmem:[#allocation6 + $0x8] sm:$0xff]
    %v926 = vld [vmem:[#allocation6 + $0x10] sm:$0xff]
    %v927 = vld [vmem:[#allocation6 + $0x18] sm:$0xff]
    %v928 = vld [vmem:[#allocation6 + $0x20] sm:$0xff]
    %v929 = vld [vmem:[#allocation6 + $0x28] sm:$0xff]
    %v930 = vld [vmem:[#allocation6 + $0x30] sm:$0xff]
    %v931 = vld [vmem:[#allocation6 + $0x38] sm:$0xff]
    %v932 = vld [vmem:[#allocation6 + $0x40] sm:$0xff]
    %v933 = vld [vmem:[#allocation6 + $0x48] sm:$0xff]
    %v934 = vld [vmem:[#allocation6 + $0x50] sm:$0xff]
    %v935 = vld [vmem:[#allocation6 + $0x58] sm:$0xff]
    %v936 = vld [vmem:[#allocation6 + $0x60] sm:$0xff]
    %v937 = vld [vmem:[#allocation6 + $0x68] sm:$0xff]
    %v938 = vld [vmem:[#allocation6 + $0x70] sm:$0xff]
    %v939 = vld [vmem:[#allocation6 + $0x78] sm:$0xff]
    %v940 = vld [vmem:[#allocation6 + $0x80] sm:$0xff]
    %v941 = vld [vmem:[#allocation6 + $0x88] sm:$0xff]
    %v942 = vld [vmem:[#allocation6 + $0x90] sm:$0xff]
    %v943 = vld [vmem:[#allocation6 + $0x98] sm:$0xff]
    %v944 = vld [vmem:[#allocation6 + $0xa0] sm:$0xff]
    %v945 = vld [vmem:[#allocation6 + $0xa8] sm:$0xff]
    %v946 = vld [vmem:[#allocation6 + $0xb0] sm:$0xff]
    %v947 = vld [vmem:[#allocation6 + $0xb8] sm:$0xff]
    %v948 = vld [vmem:[#allocation6 + $0xc0] sm:$0xff]
    %v949 = vld [vmem:[#allocation6 + $0xc8] sm:$0xff]
    %v950 = vld [vmem:[#allocation6 + $0xd0] sm:$0xff]
    %v951 = vld [vmem:[#allocation6 + $0xd8] sm:$0xff]
    %v952 = vld [vmem:[#allocation6 + $0xe0] sm:$0xff]
    %v953 = vld [vmem:[#allocation6 + $0xe8] sm:$0xff]
    %v954 = vld [vmem:[#allocation6 + $0xf0] sm:$0xff]
    %v955 = vld [vmem:[#allocation6 + $0xf8] sm:$0xff]
    %v956 = vld [vmem:[#allocation6 + $0x100] sm:$0xff]
    %v957 = vld [vmem:[#allocation6 + $0x108] sm:$0xff]
    %v958 = vld [vmem:[#allocation6 + $0x110] sm:$0xff]
    %v959 = vld [vmem:[#allocation6 + $0x118] sm:$0xff]
    %v960 = vld [vmem:[#allocation6 + $0x120] sm:$0xff]
    %v961 = vld [vmem:[#allocation6 + $0x128] sm:$0xff]
    %v962 = vld [vmem:[#allocation6 + $0x130] sm:$0xff]
    %v963 = vld [vmem:[#allocation6 + $0x138] sm:$0xff]
    %v964 = vld [vmem:[#allocation6 + $0x140] sm:$0xff]
    %v965 = vld [vmem:[#allocation6 + $0x148] sm:$0xff]
    %v966 = vld [vmem:[#allocation6 + $0x150] sm:$0xff]
    %v967 = vld [vmem:[#allocation6 + $0x158] sm:$0xff]
    %v968 = vld [vmem:[#allocation6 + $0x160] sm:$0xff]
    %v969 = vld [vmem:[#allocation6 + $0x168] sm:$0xff]
    %v970 = vld [vmem:[#allocation6 + $0x170] sm:$0xff]
    %v971 = vld [vmem:[#allocation6 + $0x178] sm:$0xff]
    %v972 = vld [vmem:[#allocation6 + $0x180] sm:$0xff]
    %v973 = vld [vmem:[#allocation6 + $0x188] sm:$0xff]
    %v974 = vld [vmem:[#allocation6 + $0x190] sm:$0xff]
    %v975 = vld [vmem:[#allocation6 + $0x198] sm:$0xff]
    %v976 = vld [vmem:[#allocation6 + $0x1a0] sm:$0xff]
    %v977 = vld [vmem:[#allocation6 + $0x1a8] sm:$0xff]
    %v978 = vld [vmem:[#allocation6 + $0x1b0] sm:$0xff]
    %v979 = vld [vmem:[#allocation6 + $0x1b8] sm:$0xff]
    %v980 = vld [vmem:[#allocation6 + $0x1c0] sm:$0xff]
    %v981 = vld [vmem:[#allocation6 + $0x1c8] sm:$0xff]
    %v982 = vld [vmem:[#allocation6 + $0x1d0] sm:$0xff]
    %v983 = vld [vmem:[#allocation6 + $0x1d8] sm:$0xff]
    %v984 = vld [vmem:[#allocation6 + $0x1e0] sm:$0xff]
    %v985 = vld [vmem:[#allocation6 + $0x1e8] sm:$0xff]
    %v986 = vld [vmem:[#allocation6 + $0x1f0] sm:$0xff]
    %v987 = vld [vmem:[#allocation6 + $0x1f8] sm:$0xff]
    %988 = vmatprep.subr.mxu0 %v925
    %989 = vmatpush1.msra.mxu0 %v924
    %990 = vmatprep.subr.mxu0 %v929
    %991 = vmatpush1.msra.mxu0 %v928
    %992 = vmatprep.subr.mxu0 %v933
    %993 = vmatpush1.msra.mxu0 %v932
    %994 = vmatprep.subr.mxu0 %v937
    %995 = vmatpush1.msra.mxu0 %v936
    %996 = vmatprep.subr.mxu0 %v941
    %997 = vmatpush1.msra.mxu0 %v940
    %998 = vmatprep.subr.mxu0 %v945
    %999 = vmatpush1.msra.mxu0 %v944
    %1000 = vmatprep.subr.mxu0 %v949
    %1001 = vmatpush1.msra.mxu0 %v948
    %1002 = vmatprep.subr.mxu0 %v953
    %1003 = vmatpush1.msra.mxu0 %v952
    %1004 = vmatprep.subr.mxu0 %v957
    %1005 = vmatpush1.msra.mxu0 %v956
    %1006 = vmatprep.subr.mxu0 %v961
    %1007 = vmatpush1.msra.mxu0 %v960
    %1008 = vmatprep.subr.mxu0 %v965
    %1009 = vmatpush1.msra.mxu0 %v964
    %1010 = vmatprep.subr.mxu0 %v969
    %1011 = vmatpush1.msra.mxu0 %v968
    %1012 = vmatprep.subr.mxu0 %v973
    %1013 = vmatpush1.msra.mxu0 %v972
    %1014 = vmatprep.subr.mxu0 %v977
    %1015 = vmatpush1.msra.mxu0 %v976
    %1016 = vmatprep.subr.mxu0 %v981
    %1017 = vmatpush1.msra.mxu0 %v980
    %1018 = vmatprep.subr.mxu0 %v985
    %1019 = vmatpush1.msra.mxu0 %v984
    %1020 = vmatprep.subr.mxu0 0.0
    %1021 = vmatpush1.msra.mxu0 0.0
    %1022 = vmatprep.subr.mxu0 0.0
    %1023 = vmatpush1.msra.mxu0 0.0
    %1024 = vmatprep.subr.mxu0 0.0
    %1025 = vmatpush1.msra.mxu0 0.0
    %1026 = vmatprep.subr.mxu0 0.0
    %1027 = vmatpush1.msra.mxu0 0.0
    %1028 = vmatprep.subr.mxu0 0.0
    %1029 = vmatpush1.msra.mxu0 0.0
    %1030 = vmatprep.subr.mxu0 0.0
    %1031 = vmatpush1.msra.mxu0 0.0
    %1032 = vmatprep.subr.mxu0 0.0
    %1033 = vmatpush1.msra.mxu0 0.0
    %1034 = vmatprep.subr.mxu0 0.0
    %1035 = vmatpush1.msra.mxu0 0.0
    %1036 = vmatprep.subr.mxu0 0.0
    %1037 = vmatpush1.msra.mxu0 0.0
    %1038 = vmatprep.subr.mxu0 0.0
    %1039 = vmatpush1.msra.mxu0 0.0
    %1040 = vmatprep.subr.mxu0 0.0
    %1041 = vmatpush1.msra.mxu0 0.0
    %1042 = vmatprep.subr.mxu0 0.0
    %1043 = vmatpush1.msra.mxu0 0.0
    %1044 = vmatprep.subr.mxu0 0.0
    %1045 = vmatpush1.msra.mxu0 0.0
    %1046 = vmatprep.subr.mxu0 0.0
    %1047 = vmatpush1.msra.mxu0 0.0
    %1048 = vmatprep.subr.mxu0 0.0
    %1049 = vmatpush1.msra.mxu0 0.0
    %1050 = vmatprep.subr.mxu0 0.0
    %1051 = vmatpush1.msra.mxu0 0.0
    %1052 = vmatprep.mubr.f32.mxu0 0.0
    %1053 = vmatmul.mubr.f32.gmra.mrb[0].mxu0 %v914
    %v1054 = vpop.f32.mrb[0].mxu0
    %v1055 = vadd.f32 0.0, %v1054
    %v1056 = vpop.f32.mrb[0].mxu0
    %v1057 = vadd.f32 0.0, %v1056
    %1058 = vdwg.mxu0
    %1059 = vmatprep.subr.mxu0 %v927
    %1060 = vmatpush1.msra.mxu0 %v926
    %1061 = vmatprep.subr.mxu0 %v931
    %1062 = vmatpush1.msra.mxu0 %v930
    %1063 = vmatprep.subr.mxu0 %v935
    %1064 = vmatpush1.msra.mxu0 %v934
    %1065 = vmatprep.subr.mxu0 %v939
    %1066 = vmatpush1.msra.mxu0 %v938
    %1067 = vmatprep.subr.mxu0 %v943
    %1068 = vmatpush1.msra.mxu0 %v942
    %1069 = vmatprep.subr.mxu0 %v947
    %1070 = vmatpush1.msra.mxu0 %v946
    %1071 = vmatprep.subr.mxu0 %v951
    %1072 = vmatpush1.msra.mxu0 %v950
    %1073 = vmatprep.subr.mxu0 %v955
    %1074 = vmatpush1.msra.mxu0 %v954
    %1075 = vmatprep.subr.mxu0 %v959
    %1076 = vmatpush1.msra.mxu0 %v958
    %1077 = vmatprep.subr.mxu0 %v963
    %1078 = vmatpush1.msra.mxu0 %v962
    %1079 = vmatprep.subr.mxu0 %v967
    %1080 = vmatpush1.msra.mxu0 %v966
    %1081 = vmatprep.subr.mxu0 %v971
    %1082 = vmatpush1.msra.mxu0 %v970
    %1083 = vmatprep.subr.mxu0 %v975
    %1084 = vmatpush1.msra.mxu0 %v974
    %1085 = vmatprep.subr.mxu0 %v979
    %1086 = vmatpush1.msra.mxu0 %v978
    %1087 = vmatprep.subr.mxu0 %v983
    %1088 = vmatpush1.msra.mxu0 %v982
    %1089 = vmatprep.subr.mxu0 %v987
    %1090 = vmatpush1.msra.mxu0 %v986
    %1091 = vmatprep.subr.mxu0 0.0
    %1092 = vmatpush1.msra.mxu0 0.0
    %1093 = vmatprep.subr.mxu0 0.0
    %1094 = vmatpush1.msra.mxu0 0.0
    %1095 = vmatprep.subr.mxu0 0.0
    %1096 = vmatpush1.msra.mxu0 0.0
    %1097 = vmatprep.subr.mxu0 0.0
    %1098 = vmatpush1.msra.mxu0 0.0
    %1099 = vmatprep.subr.mxu0 0.0
    %1100 = vmatpush1.msra.mxu0 0.0
    %1101 = vmatprep.subr.mxu0 0.0
    %1102 = vmatpush1.msra.mxu0 0.0
    %1103 = vmatprep.subr.mxu0 0.0
    %1104 = vmatpush1.msra.mxu0 0.0
    %1105 = vmatprep.subr.mxu0 0.0
    %1106 = vmatpush1.msra.mxu0 0.0
    %1107 = vmatprep.subr.mxu0 0.0
    %1108 = vmatpush1.msra.mxu0 0.0
    %1109 = vmatprep.subr.mxu0 0.0
    %1110 = vmatpush1.msra.mxu0 0.0
    %1111 = vmatprep.subr.mxu0 0.0
    %1112 = vmatpush1.msra.mxu0 0.0
    %1113 = vmatprep.subr.mxu0 0.0
    %1114 = vmatpush1.msra.mxu0 0.0
    %1115 = vmatprep.subr.mxu0 0.0
    %1116 = vmatpush1.msra.mxu0 0.0
    %1117 = vmatprep.subr.mxu0 0.0
    %1118 = vmatpush1.msra.mxu0 0.0
    %1119 = vmatprep.subr.mxu0 0.0
    %1120 = vmatpush1.msra.mxu0 0.0
    %1121 = vmatprep.subr.mxu0 0.0
    %1122 = vmatpush1.msra.mxu0 0.0
    %1123 = vmatprep.mubr.f32.mxu0 0.0
    %1124 = vmatmul.mubr.f32.gmra.mrb[0].mxu0 %v914
    %v1125 = vpop.f32.mrb[0].mxu0
    %v1126 = vadd.f32 0.0, %v1125
    %v1127 = vpop.f32.mrb[0].mxu0
    %v1128 = vadd.f32 0.0, %v1127
    %1129 = vdwg.mxu0
    %v1130 = vadd.f32 %v920, %v1055
    %v1131 = vadd.f32 %v921, %v1057
    %v1132 = vadd.f32 %v922, %v1126
    %v1133 = vadd.f32 %v923, %v1128
    %v1134 = vxor.u32 %v1130, 2147483648
    %v1135 = vmul.f32 %v1134, 1.442695
    %v1136 = vpow.pop %v1135
    %v1137 = vadd.f32 %v1136, 1.0
    %v1138 = vrcp.pop %v1137
    %v1139 = vmul.f32 1.0, %v1138
    %v1140 = vxor.u32 %v1131, 2147483648
    %v1141 = vmul.f32 %v1140, 1.442695
    %v1142 = vpow.pop %v1141
    %v1143 = vadd.f32 %v1142, 1.0
    %v1144 = vrcp.pop %v1143
    %v1145 = vmul.f32 1.0, %v1144
    %v1146 = vtanh.pop %v1132
    %v1147 = vxor.u32 %v1133, 2147483648
    %v1148 = vmul.f32 %v1147, 1.442695
    %v1149 = vpow.pop %v1148
    %v1150 = vadd.f32 %v1149, 1.0
    %v1151 = vrcp.pop %v1150
    %v1152 = vmul.f32 1.0, %v1151
    %v1153 = vmul.f32 %v1145, %v912
    %v1154 = vmul.f32 %v1139, %v1146
    %v1155 = vadd.f32 %v1153, %v1154
    %v1156 = vtanh.pop %v1155
    %v1157 = vmul.f32 %v1152, %v1156
    %s1158 = scalar_lea.vmem [#allocation5], 16
    %1159 = vst [vmem:[%s1158] sm:$0xff] %v1157
    %s1160 = smul.u32 3, 4
    %s1161 = smul.addr %s1160, 8
    %s1162 = scalar_lea.vmem [#allocation4], %s1161
    %v1163 = vld [vmem:[%s1162] sm:$0xff]
    %v1164 = vld [vmem:[%s1162 + $0x8] sm:$0xff]
    %v1165 = vld [vmem:[%s1162 + $0x10] sm:$0xff]
    %v1166 = vld [vmem:[%s1162 + $0x18] sm:$0xff]
    %v1167 = vld [vmem:[#allocation6] sm:$0xff]
    %v1168 = vld [vmem:[#allocation6 + $0x8] sm:$0xff]
    %v1169 = vld [vmem:[#allocation6 + $0x10] sm:$0xff]
    %v1170 = vld [vmem:[#allocation6 + $0x18] sm:$0xff]
    %v1171 = vld [vmem:[#allocation6 + $0x20] sm:$0xff]
    %v1172 = vld [vmem:[#allocation6 + $0x28] sm:$0xff]
    %v1173 = vld [vmem:[#allocation6 + $0x30] sm:$0xff]
    %v1174 = vld [vmem:[#allocation6 + $0x38] sm:$0xff]
    %v1175 = vld [vmem:[#allocation6 + $0x40] sm:$0xff]
    %v1176 = vld [vmem:[#allocation6 + $0x48] sm:$0xff]
    %v1177 = vld [vmem:[#allocation6 + $0x50] sm:$0xff]
    %v1178 = vld [vmem:[#allocation6 + $0x58] sm:$0xff]
    %v1179 = vld [vmem:[#allocation6 + $0x60] sm:$0xff]
    %v1180 = vld [vmem:[#allocation6 + $0x68] sm:$0xff]
    %v1181 = vld [vmem:[#allocation6 + $0x70] sm:$0xff]
    %v1182 = vld [vmem:[#allocation6 + $0x78] sm:$0xff]
    %v1183 = vld [vmem:[#allocation6 + $0x80] sm:$0xff]
    %v1184 = vld [vmem:[#allocation6 + $0x88] sm:$0xff]
    %v1185 = vld [vmem:[#allocation6 + $0x90] sm:$0xff]
    %v1186 = vld [vmem:[#allocation6 + $0x98] sm:$0xff]
    %v1187 = vld [vmem:[#allocation6 + $0xa0] sm:$0xff]
    %v1188 = vld [vmem:[#allocation6 + $0xa8] sm:$0xff]
    %v1189 = vld [vmem:[#allocation6 + $0xb0] sm:$0xff]
    %v1190 = vld [vmem:[#allocation6 + $0xb8] sm:$0xff]
    %v1191 = vld [vmem:[#allocation6 + $0xc0] sm:$0xff]
    %v1192 = vld [vmem:[#allocation6 + $0xc8] sm:$0xff]
    %v1193 = vld [vmem:[#allocation6 + $0xd0] sm:$0xff]
    %v1194 = vld [vmem:[#allocation6 + $0xd8] sm:$0xff]
    %v1195 = vld [vmem:[#allocation6 + $0xe0] sm:$0xff]
    %v1196 = vld [vmem:[#allocation6 + $0xe8] sm:$0xff]
    %v1197 = vld [vmem:[#allocation6 + $0xf0] sm:$0xff]
    %v1198 = vld [vmem:[#allocation6 + $0xf8] sm:$0xff]
    %v1199 = vld [vmem:[#allocation6 + $0x100] sm:$0xff]
    %v1200 = vld [vmem:[#allocation6 + $0x108] sm:$0xff]
    %v1201 = vld [vmem:[#allocation6 + $0x110] sm:$0xff]
    %v1202 = vld [vmem:[#allocation6 + $0x118] sm:$0xff]
    %v1203 = vld [vmem:[#allocation6 + $0x120] sm:$0xff]
    %v1204 = vld [vmem:[#allocation6 + $0x128] sm:$0xff]
    %v1205 = vld [vmem:[#allocation6 + $0x130] sm:$0xff]
    %v1206 = vld [vmem:[#allocation6 + $0x138] sm:$0xff]
    %v1207 = vld [vmem:[#allocation6 + $0x140] sm:$0xff]
    %v1208 = vld [vmem:[#allocation6 + $0x148] sm:$0xff]
    %v1209 = vld [vmem:[#allocation6 + $0x150] sm:$0xff]
    %v1210 = vld [vmem:[#allocation6 + $0x158] sm:$0xff]
    %v1211 = vld [vmem:[#allocation6 + $0x160] sm:$0xff]
    %v1212 = vld [vmem:[#allocation6 + $0x168] sm:$0xff]
    %v1213 = vld [vmem:[#allocation6 + $0x170] sm:$0xff]
    %v1214 = vld [vmem:[#allocation6 + $0x178] sm:$0xff]
    %v1215 = vld [vmem:[#allocation6 + $0x180] sm:$0xff]
    %v1216 = vld [vmem:[#allocation6 + $0x188] sm:$0xff]
    %v1217 = vld [vmem:[#allocation6 + $0x190] sm:$0xff]
    %v1218 = vld [vmem:[#allocation6 + $0x198] sm:$0xff]
    %v1219 = vld [vmem:[#allocation6 + $0x1a0] sm:$0xff]
    %v1220 = vld [vmem:[#allocation6 + $0x1a8] sm:$0xff]
    %v1221 = vld [vmem:[#allocation6 + $0x1b0] sm:$0xff]
    %v1222 = vld [vmem:[#allocation6 + $0x1b8] sm:$0xff]
    %v1223 = vld [vmem:[#allocation6 + $0x1c0] sm:$0xff]
    %v1224 = vld [vmem:[#allocation6 + $0x1c8] sm:$0xff]
    %v1225 = vld [vmem:[#allocation6 + $0x1d0] sm:$0xff]
    %v1226 = vld [vmem:[#allocation6 + $0x1d8] sm:$0xff]
    %v1227 = vld [vmem:[#allocation6 + $0x1e0] sm:$0xff]
    %v1228 = vld [vmem:[#allocation6 + $0x1e8] sm:$0xff]
    %v1229 = vld [vmem:[#allocation6 + $0x1f0] sm:$0xff]
    %v1230 = vld [vmem:[#allocation6 + $0x1f8] sm:$0xff]
    %1231 = vmatprep.subr.mxu0 %v1168
    %1232 = vmatpush1.msra.mxu0 %v1167
    %1233 = vmatprep.subr.mxu0 %v1172
    %1234 = vmatpush1.msra.mxu0 %v1171
    %1235 = vmatprep.subr.mxu0 %v1176
    %1236 = vmatpush1.msra.mxu0 %v1175
    %1237 = vmatprep.subr.mxu0 %v1180
    %1238 = vmatpush1.msra.mxu0 %v1179
    %1239 = vmatprep.subr.mxu0 %v1184
    %1240 = vmatpush1.msra.mxu0 %v1183
    %1241 = vmatprep.subr.mxu0 %v1188
    %1242 = vmatpush1.msra.mxu0 %v1187
    %1243 = vmatprep.subr.mxu0 %v1192
    %1244 = vmatpush1.msra.mxu0 %v1191
    %1245 = vmatprep.subr.mxu0 %v1196
    %1246 = vmatpush1.msra.mxu0 %v1195
    %1247 = vmatprep.subr.mxu0 %v1200
    %1248 = vmatpush1.msra.mxu0 %v1199
    %1249 = vmatprep.subr.mxu0 %v1204
    %1250 = vmatpush1.msra.mxu0 %v1203
    %1251 = vmatprep.subr.mxu0 %v1208
    %1252 = vmatpush1.msra.mxu0 %v1207
    %1253 = vmatprep.subr.mxu0 %v1212
    %1254 = vmatpush1.msra.mxu0 %v1211
    %1255 = vmatprep.subr.mxu0 %v1216
    %1256 = vmatpush1.msra.mxu0 %v1215
    %1257 = vmatprep.subr.mxu0 %v1220
    %1258 = vmatpush1.msra.mxu0 %v1219
    %1259 = vmatprep.subr.mxu0 %v1224
    %1260 = vmatpush1.msra.mxu0 %v1223
    %1261 = vmatprep.subr.mxu0 %v1228
    %1262 = vmatpush1.msra.mxu0 %v1227
    %1263 = vmatprep.subr.mxu0 0.0
    %1264 = vmatpush1.msra.mxu0 0.0
    %1265 = vmatprep.subr.mxu0 0.0
    %1266 = vmatpush1.msra.mxu0 0.0
    %1267 = vmatprep.subr.mxu0 0.0
    %1268 = vmatpush1.msra.mxu0 0.0
    %1269 = vmatprep.subr.mxu0 0.0
    %1270 = vmatpush1.msra.mxu0 0.0
    %1271 = vmatprep.subr.mxu0 0.0
    %1272 = vmatpush1.msra.mxu0 0.0
    %1273 = vmatprep.subr.mxu0 0.0
    %1274 = vmatpush1.msra.mxu0 0.0
    %1275 = vmatprep.subr.mxu0 0.0
    %1276 = vmatpush1.msra.mxu0 0.0
    %1277 = vmatprep.subr.mxu0 0.0
    %1278 = vmatpush1.msra.mxu0 0.0
    %1279 = vmatprep.subr.mxu0 0.0
    %1280 = vmatpush1.msra.mxu0 0.0
    %1281 = vmatprep.subr.mxu0 0.0
    %1282 = vmatpush1.msra.mxu0 0.0
    %1283 = vmatprep.subr.mxu0 0.0
    %1284 = vmatpush1.msra.mxu0 0.0
    %1285 = vmatprep.subr.mxu0 0.0
    %1286 = vmatpush1.msra.mxu0 0.0
    %1287 = vmatprep.subr.mxu0 0.0
    %1288 = vmatpush1.msra.mxu0 0.0
    %1289 = vmatprep.subr.mxu0 0.0
    %1290 = vmatpush1.msra.mxu0 0.0
    %1291 = vmatprep.subr.mxu0 0.0
    %1292 = vmatpush1.msra.mxu0 0.0
    %1293 = vmatprep.subr.mxu0 0.0
    %1294 = vmatpush1.msra.mxu0 0.0
    %1295 = vmatprep.mubr.f32.mxu0 0.0
    %1296 = vmatmul.mubr.f32.gmra.mrb[0].mxu0 %v1157
    %v1297 = vpop.f32.mrb[0].mxu0
    %v1298 = vadd.f32 0.0, %v1297
    %v1299 = vpop.f32.mrb[0].mxu0
    %v1300 = vadd.f32 0.0, %v1299
    %1301 = vdwg.mxu0
    %1302 = vmatprep.subr.mxu0 %v1170
    %1303 = vmatpush1.msra.mxu0 %v1169
    %1304 = vmatprep.subr.mxu0 %v1174
    %1305 = vmatpush1.msra.mxu0 %v1173
    %1306 = vmatprep.subr.mxu0 %v1178
    %1307 = vmatpush1.msra.mxu0 %v1177
    %1308 = vmatprep.subr.mxu0 %v1182
    %1309 = vmatpush1.msra.mxu0 %v1181
    %1310 = vmatprep.subr.mxu0 %v1186
    %1311 = vmatpush1.msra.mxu0 %v1185
    %1312 = vmatprep.subr.mxu0 %v1190
    %1313 = vmatpush1.msra.mxu0 %v1189
    %1314 = vmatprep.subr.mxu0 %v1194
    %1315 = vmatpush1.msra.mxu0 %v1193
    %1316 = vmatprep.subr.mxu0 %v1198
    %1317 = vmatpush1.msra.mxu0 %v1197
    %1318 = vmatprep.subr.mxu0 %v1202
    %1319 = vmatpush1.msra.mxu0 %v1201
    %1320 = vmatprep.subr.mxu0 %v1206
    %1321 = vmatpush1.msra.mxu0 %v1205
    %1322 = vmatprep.subr.mxu0 %v1210
    %1323 = vmatpush1.msra.mxu0 %v1209
    %1324 = vmatprep.subr.mxu0 %v1214
    %1325 = vmatpush1.msra.mxu0 %v1213
    %1326 = vmatprep.subr.mxu0 %v1218
    %1327 = vmatpush1.msra.mxu0 %v1217
    %1328 = vmatprep.subr.mxu0 %v1222
    %1329 = vmatpush1.msra.mxu0 %v1221
    %1330 = vmatprep.subr.mxu0 %v1226
    %1331 = vmatpush1.msra.mxu0 %v1225
    %1332 = vmatprep.subr.mxu0 %v1230
    %1333 = vmatpush1.msra.mxu0 %v1229
    %1334 = vmatprep.subr.mxu0 0.0
    %1335 = vmatpush1.msra.mxu0 0.0
    %1336 = vmatprep.subr.mxu0 0.0
    %1337 = vmatpush1.msra.mxu0 0.0
    %1338 = vmatprep.subr.mxu0 0.0
    %1339 = vmatpush1.msra.mxu0 0.0
    %1340 = vmatprep.subr.mxu0 0.0
    %1341 = vmatpush1.msra.mxu0 0.0
    %1342 = vmatprep.subr.mxu0 0.0
    %1343 = vmatpush1.msra.mxu0 0.0
    %1344 = vmatprep.subr.mxu0 0.0
    %1345 = vmatpush1.msra.mxu0 0.0
    %1346 = vmatprep.subr.mxu0 0.0
    %1347 = vmatpush1.msra.mxu0 0.0
    %1348 = vmatprep.subr.mxu0 0.0
    %1349 = vmatpush1.msra.mxu0 0.0
    %1350 = vmatprep.subr.mxu0 0.0
    %1351 = vmatpush1.msra.mxu0 0.0
    %1352 = vmatprep.subr.mxu0 0.0
    %1353 = vmatpush1.msra.mxu0 0.0
    %1354 = vmatprep.subr.mxu0 0.0
    %1355 = vmatpush1.msra.mxu0 0.0
    %1356 = vmatprep.subr.mxu0 0.0
    %1357 = vmatpush1.msra.mxu0 0.0
    %1358 = vmatprep.subr.mxu0 0.0
    %1359 = vmatpush1.msra.mxu0 0.0
    %1360 = vmatprep.subr.mxu0 0.0
    %1361 = vmatpush1.msra.mxu0 0.0
    %1362 = vmatprep.subr.mxu0 0.0
    %1363 = vmatpush1.msra.mxu0 0.0
    %1364 = vmatprep.subr.mxu0 0.0
    %1365 = vmatpush1.msra.mxu0 0.0
    %1366 = vmatprep.mubr.f32.mxu0 0.0
    %1367 = vmatmul.mubr.f32.gmra.mrb[0].mxu0 %v1157
    %v1368 = vpop.f32.mrb[0].mxu0
    %v1369 = vadd.f32 0.0, %v1368
    %v1370 = vpop.f32.mrb[0].mxu0
    %v1371 = vadd.f32 0.0, %v1370
    %1372 = vdwg.mxu0
    %v1373 = vadd.f32 %v1163, %v1298
    %v1374 = vadd.f32 %v1164, %v1300
    %v1375 = vadd.f32 %v1165, %v1369
    %v1376 = vadd.f32 %v1166, %v1371
    %v1377 = vxor.u32 %v1373, 2147483648
    %v1378 = vmul.f32 %v1377, 1.442695
    %v1379 = vpow.pop %v1378
    %v1380 = vadd.f32 %v1379, 1.0
    %v1381 = vrcp.pop %v1380
    %v1382 = vmul.f32 1.0, %v1381
    %v1383 = vxor.u32 %v1374, 2147483648
    %v1384 = vmul.f32 %v1383, 1.442695
    %v1385 = vpow.pop %v1384
    %v1386 = vadd.f32 %v1385, 1.0
    %v1387 = vrcp.pop %v1386
    %v1388 = vmul.f32 1.0, %v1387
    %v1389 = vtanh.pop %v1375
    %v1390 = vxor.u32 %v1376, 2147483648
    %v1391 = vmul.f32 %v1390, 1.442695
    %v1392 = vpow.pop %v1391
    %v1393 = vadd.f32 %v1392, 1.0
    %v1394 = vrcp.pop %v1393
    %v1395 = vmul.f32 1.0, %v1394
    %v1396 = vmul.f32 %v1388, %v1155
    %v1397 = vmul.f32 %v1382, %v1389
    %v1398 = vadd.f32 %v1396, %v1397
    %v1399 = vtanh.pop %v1398
    %v1400 = vmul.f32 %v1395, %v1399
    %s1401 = scalar_lea.vmem [#allocation5], 24
    %1402 = vst [vmem:[%s1401] sm:$0xff] %v1400
    %s1403 = smul.u32 4, 4
    %s1404 = smul.addr %s1403, 8
    %s1405 = scalar_lea.vmem [#allocation4], %s1404
    %v1406 = vld [vmem:[%s1405] sm:$0xff]
    %v1407 = vld [vmem:[%s1405 + $0x8] sm:$0xff]
    %v1408 = vld [vmem:[%s1405 + $0x10] sm:$0xff]
    %v1409 = vld [vmem:[%s1405 + $0x18] sm:$0xff]
    %v1410 = vld [vmem:[#allocation6] sm:$0xff]
    %v1411 = vld [vmem:[#allocation6 + $0x8] sm:$0xff]
    %v1412 = vld [vmem:[#allocation6 + $0x10] sm:$0xff]
    %v1413 = vld [vmem:[#allocation6 + $0x18] sm:$0xff]
    %v1414 = vld [vmem:[#allocation6 + $0x20] sm:$0xff]
    %v1415 = vld [vmem:[#allocation6 + $0x28] sm:$0xff]
    %v1416 = vld [vmem:[#allocation6 + $0x30] sm:$0xff]
    %v1417 = vld [vmem:[#allocation6 + $0x38] sm:$0xff]
    %v1418 = vld [vmem:[#allocation6 + $0x40] sm:$0xff]
    %v1419 = vld [vmem:[#allocation6 + $0x48] sm:$0xff]
    %v1420 = vld [vmem:[#allocation6 + $0x50] sm:$0xff]
    %v1421 = vld [vmem:[#allocation6 + $0x58] sm:$0xff]
    %v1422 = vld [vmem:[#allocation6 + $0x60] sm:$0xff]
    %v1423 = vld [vmem:[#allocation6 + $0x68] sm:$0xff]
    %v1424 = vld [vmem:[#allocation6 + $0x70] sm:$0xff]
    %v1425 = vld [vmem:[#allocation6 + $0x78] sm:$0xff]
    %v1426 = vld [vmem:[#allocation6 + $0x80] sm:$0xff]
    %v1427 = vld [vmem:[#allocation6 + $0x88] sm:$0xff]
    %v1428 = vld [vmem:[#allocation6 + $0x90] sm:$0xff]
    %v1429 = vld [vmem:[#allocation6 + $0x98] sm:$0xff]
    %v1430 = vld [vmem:[#allocation6 + $0xa0] sm:$0xff]
    %v1431 = vld [vmem:[#allocation6 + $0xa8] sm:$0xff]
    %v1432 = vld [vmem:[#allocation6 + $0xb0] sm:$0xff]
    %v1433 = vld [vmem:[#allocation6 + $0xb8] sm:$0xff]
    %v1434 = vld [vmem:[#allocation6 + $0xc0] sm:$0xff]
    %v1435 = vld [vmem:[#allocation6 + $0xc8] sm:$0xff]
    %v1436 = vld [vmem:[#allocation6 + $0xd0] sm:$0xff]
    %v1437 = vld [vmem:[#allocation6 + $0xd8] sm:$0xff]
    %v1438 = vld [vmem:[#allocation6 + $0xe0] sm:$0xff]
    %v1439 = vld [vmem:[#allocation6 + $0xe8] sm:$0xff]
    %v1440 = vld [vmem:[#allocation6 + $0xf0] sm:$0xff]
    %v1441 = vld [vmem:[#allocation6 + $0xf8] sm:$0xff]
    %v1442 = vld [vmem:[#allocation6 + $0x100] sm:$0xff]
    %v1443 = vld [vmem:[#allocation6 + $0x108] sm:$0xff]
    %v1444 = vld [vmem:[#allocation6 + $0x110] sm:$0xff]
    %v1445 = vld [vmem:[#allocation6 + $0x118] sm:$0xff]
    %v1446 = vld [vmem:[#allocation6 + $0x120] sm:$0xff]
    %v1447 = vld [vmem:[#allocation6 + $0x128] sm:$0xff]
    %v1448 = vld [vmem:[#allocation6 + $0x130] sm:$0xff]
    %v1449 = vld [vmem:[#allocation6 + $0x138] sm:$0xff]
    %v1450 = vld [vmem:[#allocation6 + $0x140] sm:$0xff]
    %v1451 = vld [vmem:[#allocation6 + $0x148] sm:$0xff]
    %v1452 = vld [vmem:[#allocation6 + $0x150] sm:$0xff]
    %v1453 = vld [vmem:[#allocation6 + $0x158] sm:$0xff]
    %v1454 = vld [vmem:[#allocation6 + $0x160] sm:$0xff]
    %v1455 = vld [vmem:[#allocation6 + $0x168] sm:$0xff]
    %v1456 = vld [vmem:[#allocation6 + $0x170] sm:$0xff]
    %v1457 = vld [vmem:[#allocation6 + $0x178] sm:$0xff]
    %v1458 = vld [vmem:[#allocation6 + $0x180] sm:$0xff]
    %v1459 = vld [vmem:[#allocation6 + $0x188] sm:$0xff]
    %v1460 = vld [vmem:[#allocation6 + $0x190] sm:$0xff]
    %v1461 = vld [vmem:[#allocation6 + $0x198] sm:$0xff]
    %v1462 = vld [vmem:[#allocation6 + $0x1a0] sm:$0xff]
    %v1463 = vld [vmem:[#allocation6 + $0x1a8] sm:$0xff]
    %v1464 = vld [vmem:[#allocation6 + $0x1b0] sm:$0xff]
    %v1465 = vld [vmem:[#allocation6 + $0x1b8] sm:$0xff]
    %v1466 = vld [vmem:[#allocation6 + $0x1c0] sm:$0xff]
    %v1467 = vld [vmem:[#allocation6 + $0x1c8] sm:$0xff]
    %v1468 = vld [vmem:[#allocation6 + $0x1d0] sm:$0xff]
    %v1469 = vld [vmem:[#allocation6 + $0x1d8] sm:$0xff]
    %v1470 = vld [vmem:[#allocation6 + $0x1e0] sm:$0xff]
    %v1471 = vld [vmem:[#allocation6 + $0x1e8] sm:$0xff]
    %v1472 = vld [vmem:[#allocation6 + $0x1f0] sm:$0xff]
    %v1473 = vld [vmem:[#allocation6 + $0x1f8] sm:$0xff]
    %1474 = vmatprep.subr.mxu0 %v1411
    %1475 = vmatpush1.msra.mxu0 %v1410
    %1476 = vmatprep.subr.mxu0 %v1415
    %1477 = vmatpush1.msra.mxu0 %v1414
    %1478 = vmatprep.subr.mxu0 %v1419
    %1479 = vmatpush1.msra.mxu0 %v1418
    %1480 = vmatprep.subr.mxu0 %v1423
    %1481 = vmatpush1.msra.mxu0 %v1422
    %1482 = vmatprep.subr.mxu0 %v1427
    %1483 = vmatpush1.msra.mxu0 %v1426
    %1484 = vmatprep.subr.mxu0 %v1431
    %1485 = vmatpush1.msra.mxu0 %v1430
    %1486 = vmatprep.subr.mxu0 %v1435
    %1487 = vmatpush1.msra.mxu0 %v1434
    %1488 = vmatprep.subr.mxu0 %v1439
    %1489 = vmatpush1.msra.mxu0 %v1438
    %1490 = vmatprep.subr.mxu0 %v1443
    %1491 = vmatpush1.msra.mxu0 %v1442
    %1492 = vmatprep.subr.mxu0 %v1447
    %1493 = vmatpush1.msra.mxu0 %v1446
    %1494 = vmatprep.subr.mxu0 %v1451
    %1495 = vmatpush1.msra.mxu0 %v1450
    %1496 = vmatprep.subr.mxu0 %v1455
    %1497 = vmatpush1.msra.mxu0 %v1454
    %1498 = vmatprep.subr.mxu0 %v1459
    %1499 = vmatpush1.msra.mxu0 %v1458
    %1500 = vmatprep.subr.mxu0 %v1463
    %1501 = vmatpush1.msra.mxu0 %v1462
    %1502 = vmatprep.subr.mxu0 %v1467
    %1503 = vmatpush1.msra.mxu0 %v1466
    %1504 = vmatprep.subr.mxu0 %v1471
    %1505 = vmatpush1.msra.mxu0 %v1470
    %1506 = vmatprep.subr.mxu0 0.0
    %1507 = vmatpush1.msra.mxu0 0.0
    %1508 = vmatprep.subr.mxu0 0.0
    %1509 = vmatpush1.msra.mxu0 0.0
    %1510 = vmatprep.subr.mxu0 0.0
    %1511 = vmatpush1.msra.mxu0 0.0
    %1512 = vmatprep.subr.mxu0 0.0
    %1513 = vmatpush1.msra.mxu0 0.0
    %1514 = vmatprep.subr.mxu0 0.0
    %1515 = vmatpush1.msra.mxu0 0.0
    %1516 = vmatprep.subr.mxu0 0.0
    %1517 = vmatpush1.msra.mxu0 0.0
    %1518 = vmatprep.subr.mxu0 0.0
    %1519 = vmatpush1.msra.mxu0 0.0
    %1520 = vmatprep.subr.mxu0 0.0
    %1521 = vmatpush1.msra.mxu0 0.0
    %1522 = vmatprep.subr.mxu0 0.0
    %1523 = vmatpush1.msra.mxu0 0.0
    %1524 = vmatprep.subr.mxu0 0.0
    %1525 = vmatpush1.msra.mxu0 0.0
    %1526 = vmatprep.subr.mxu0 0.0
    %1527 = vmatpush1.msra.mxu0 0.0
    %1528 = vmatprep.subr.mxu0 0.0
    %1529 = vmatpush1.msra.mxu0 0.0
    %1530 = vmatprep.subr.mxu0 0.0
    %1531 = vmatpush1.msra.mxu0 0.0
    %1532 = vmatprep.subr.mxu0 0.0
    %1533 = vmatpush1.msra.mxu0 0.0
    %1534 = vmatprep.subr.mxu0 0.0
    %1535 = vmatpush1.msra.mxu0 0.0
    %1536 = vmatprep.subr.mxu0 0.0
    %1537 = vmatpush1.msra.mxu0 0.0
    %1538 = vmatprep.mubr.f32.mxu0 0.0
    %1539 = vmatmul.mubr.f32.gmra.mrb[0].mxu0 %v1400
    %v1540 = vpop.f32.mrb[0].mxu0
    %v1541 = vadd.f32 0.0, %v1540
    %v1542 = vpop.f32.mrb[0].mxu0
    %v1543 = vadd.f32 0.0, %v1542
    %1544 = vdwg.mxu0
    %1545 = vmatprep.subr.mxu0 %v1413
    %1546 = vmatpush1.msra.mxu0 %v1412
    %1547 = vmatprep.subr.mxu0 %v1417
    %1548 = vmatpush1.msra.mxu0 %v1416
    %1549 = vmatprep.subr.mxu0 %v1421
    %1550 = vmatpush1.msra.mxu0 %v1420
    %1551 = vmatprep.subr.mxu0 %v1425
    %1552 = vmatpush1.msra.mxu0 %v1424
    %1553 = vmatprep.subr.mxu0 %v1429
    %1554 = vmatpush1.msra.mxu0 %v1428
    %1555 = vmatprep.subr.mxu0 %v1433
    %1556 = vmatpush1.msra.mxu0 %v1432
    %1557 = vmatprep.subr.mxu0 %v1437
    %1558 = vmatpush1.msra.mxu0 %v1436
    %1559 = vmatprep.subr.mxu0 %v1441
    %1560 = vmatpush1.msra.mxu0 %v1440
    %1561 = vmatprep.subr.mxu0 %v1445
    %1562 = vmatpush1.msra.mxu0 %v1444
    %1563 = vmatprep.subr.mxu0 %v1449
    %1564 = vmatpush1.msra.mxu0 %v1448
    %1565 = vmatprep.subr.mxu0 %v1453
    %1566 = vmatpush1.msra.mxu0 %v1452
    %1567 = vmatprep.subr.mxu0 %v1457
    %1568 = vmatpush1.msra.mxu0 %v1456
    %1569 = vmatprep.subr.mxu0 %v1461
    %1570 = vmatpush1.msra.mxu0 %v1460
    %1571 = vmatprep.subr.mxu0 %v1465
    %1572 = vmatpush1.msra.mxu0 %v1464
    %1573 = vmatprep.subr.mxu0 %v1469
    %1574 = vmatpush1.msra.mxu0 %v1468
    %1575 = vmatprep.subr.mxu0 %v1473
    %1576 = vmatpush1.msra.mxu0 %v1472
    %1577 = vmatprep.subr.mxu0 0.0
    %1578 = vmatpush1.msra.mxu0 0.0
    %1579 = vmatprep.subr.mxu0 0.0
    %1580 = vmatpush1.msra.mxu0 0.0
    %1581 = vmatprep.subr.mxu0 0.0
    %1582 = vmatpush1.msra.mxu0 0.0
    %1583 = vmatprep.subr.mxu0 0.0
    %1584 = vmatpush1.msra.mxu0 0.0
    %1585 = vmatprep.subr.mxu0 0.0
    %1586 = vmatpush1.msra.mxu0 0.0
    %1587 = vmatprep.subr.mxu0 0.0
    %1588 = vmatpush1.msra.mxu0 0.0
    %1589 = vmatprep.subr.mxu0 0.0
    %1590 = vmatpush1.msra.mxu0 0.0
    %1591 = vmatprep.subr.mxu0 0.0
    %1592 = vmatpush1.msra.mxu0 0.0
    %1593 = vmatprep.subr.mxu0 0.0
    %1594 = vmatpush1.msra.mxu0 0.0
    %1595 = vmatprep.subr.mxu0 0.0
    %1596 = vmatpush1.msra.mxu0 0.0
    %1597 = vmatprep.subr.mxu0 0.0
    %1598 = vmatpush1.msra.mxu0 0.0
    %1599 = vmatprep.subr.mxu0 0.0
    %1600 = vmatpush1.msra.mxu0 0.0
    %1601 = vmatprep.subr.mxu0 0.0
    %1602 = vmatpush1.msra.mxu0 0.0
    %1603 = vmatprep.subr.mxu0 0.0
    %1604 = vmatpush1.msra.mxu0 0.0
    %1605 = vmatprep.subr.mxu0 0.0
    %1606 = vmatpush1.msra.mxu0 0.0
    %1607 = vmatprep.subr.mxu0 0.0
    %1608 = vmatpush1.msra.mxu0 0.0
    %1609 = vmatprep.mubr.f32.mxu0 0.0
    %1610 = vmatmul.mubr.f32.gmra.mrb[0].mxu0 %v1400
    %v1611 = vpop.f32.mrb[0].mxu0
    %v1612 = vadd.f32 0.0, %v1611
    %v1613 = vpop.f32.mrb[0].mxu0
    %v1614 = vadd.f32 0.0, %v1613
    %1615 = vdwg.mxu0
    %v1616 = vadd.f32 %v1406, %v1541
    %v1617 = vadd.f32 %v1407, %v1543
    %v1618 = vadd.f32 %v1408, %v1612
    %v1619 = vadd.f32 %v1409, %v1614
    %v1620 = vxor.u32 %v1616, 2147483648
    %v1621 = vmul.f32 %v1620, 1.442695
    %v1622 = vpow.pop %v1621
    %v1623 = vadd.f32 %v1622, 1.0
    %v1624 = vrcp.pop %v1623
    %v1625 = vmul.f32 1.0, %v1624
    %v1626 = vxor.u32 %v1617, 2147483648
    %v1627 = vmul.f32 %v1626, 1.442695
    %v1628 = vpow.pop %v1627
    %v1629 = vadd.f32 %v1628, 1.0
    %v1630 = vrcp.pop %v1629
    %v1631 = vmul.f32 1.0, %v1630
    %v1632 = vtanh.pop %v1618
    %v1633 = vxor.u32 %v1619, 2147483648
    %v1634 = vmul.f32 %v1633, 1.442695
    %v1635 = vpow.pop %v1634
    %v1636 = vadd.f32 %v1635, 1.0
    %v1637 = vrcp.pop %v1636
    %v1638 = vmul.f32 1.0, %v1637
    %v1639 = vmul.f32 %v1631, %v1398
    %v1640 = vmul.f32 %v1625, %v1632
    %v1641 = vadd.f32 %v1639, %v1640
    %v1642 = vtanh.pop %v1641
    %v1643 = vmul.f32 %v1638, %v1642
    %s1644 = scalar_lea.vmem [#allocation5], 32
    %1645 = vst [vmem:[%s1644] sm:$0xff] %v1643
    %s1646 = smul.u32 5, 4
    %s1647 = smul.addr %s1646, 8
    %s1648 = scalar_lea.vmem [#allocation4], %s1647
    %v1649 = vld [vmem:[%s1648] sm:$0xff]
    %v1650 = vld [vmem:[%s1648 + $0x8] sm:$0xff]
    %v1651 = vld [vmem:[%s1648 + $0x10] sm:$0xff]
    %v1652 = vld [vmem:[%s1648 + $0x18] sm:$0xff]
    %v1653 = vld [vmem:[#allocation6] sm:$0xff]
    %v1654 = vld [vmem:[#allocation6 + $0x8] sm:$0xff]
    %v1655 = vld [vmem:[#allocation6 + $0x10] sm:$0xff]
    %v1656 = vld [vmem:[#allocation6 + $0x18] sm:$0xff]
    %v1657 = vld [vmem:[#allocation6 + $0x20] sm:$0xff]
    %v1658 = vld [vmem:[#allocation6 + $0x28] sm:$0xff]
    %v1659 = vld [vmem:[#allocation6 + $0x30] sm:$0xff]
    %v1660 = vld [vmem:[#allocation6 + $0x38] sm:$0xff]
    %v1661 = vld [vmem:[#allocation6 + $0x40] sm:$0xff]
    %v1662 = vld [vmem:[#allocation6 + $0x48] sm:$0xff]
    %v1663 = vld [vmem:[#allocation6 + $0x50] sm:$0xff]
    %v1664 = vld [vmem:[#allocation6 + $0x58] sm:$0xff]
    %v1665 = vld [vmem:[#allocation6 + $0x60] sm:$0xff]
    %v1666 = vld [vmem:[#allocation6 + $0x68] sm:$0xff]
    %v1667 = vld [vmem:[#allocation6 + $0x70] sm:$0xff]
    %v1668 = vld [vmem:[#allocation6 + $0x78] sm:$0xff]
    %v1669 = vld [vmem:[#allocation6 + $0x80] sm:$0xff]
    %v1670 = vld [vmem:[#allocation6 + $0x88] sm:$0xff]
    %v1671 = vld [vmem:[#allocation6 + $0x90] sm:$0xff]
    %v1672 = vld [vmem:[#allocation6 + $0x98] sm:$0xff]
    %v1673 = vld [vmem:[#allocation6 + $0xa0] sm:$0xff]
    %v1674 = vld [vmem:[#allocation6 + $0xa8] sm:$0xff]
    %v1675 = vld [vmem:[#allocation6 + $0xb0] sm:$0xff]
    %v1676 = vld [vmem:[#allocation6 + $0xb8] sm:$0xff]
    %v1677 = vld [vmem:[#allocation6 + $0xc0] sm:$0xff]
    %v1678 = vld [vmem:[#allocation6 + $0xc8] sm:$0xff]
    %v1679 = vld [vmem:[#allocation6 + $0xd0] sm:$0xff]
    %v1680 = vld [vmem:[#allocation6 + $0xd8] sm:$0xff]
    %v1681 = vld [vmem:[#allocation6 + $0xe0] sm:$0xff]
    %v1682 = vld [vmem:[#allocation6 + $0xe8] sm:$0xff]
    %v1683 = vld [vmem:[#allocation6 + $0xf0] sm:$0xff]
    %v1684 = vld [vmem:[#allocation6 + $0xf8] sm:$0xff]
    %v1685 = vld [vmem:[#allocation6 + $0x100] sm:$0xff]
    %v1686 = vld [vmem:[#allocation6 + $0x108] sm:$0xff]
    %v1687 = vld [vmem:[#allocation6 + $0x110] sm:$0xff]
    %v1688 = vld [vmem:[#allocation6 + $0x118] sm:$0xff]
    %v1689 = vld [vmem:[#allocation6 + $0x120] sm:$0xff]
    %v1690 = vld [vmem:[#allocation6 + $0x128] sm:$0xff]
    %v1691 = vld [vmem:[#allocation6 + $0x130] sm:$0xff]
    %v1692 = vld [vmem:[#allocation6 + $0x138] sm:$0xff]
    %v1693 = vld [vmem:[#allocation6 + $0x140] sm:$0xff]
    %v1694 = vld [vmem:[#allocation6 + $0x148] sm:$0xff]
    %v1695 = vld [vmem:[#allocation6 + $0x150] sm:$0xff]
    %v1696 = vld [vmem:[#allocation6 + $0x158] sm:$0xff]
    %v1697 = vld [vmem:[#allocation6 + $0x160] sm:$0xff]
    %v1698 = vld [vmem:[#allocation6 + $0x168] sm:$0xff]
    %v1699 = vld [vmem:[#allocation6 + $0x170] sm:$0xff]
    %v1700 = vld [vmem:[#allocation6 + $0x178] sm:$0xff]
    %v1701 = vld [vmem:[#allocation6 + $0x180] sm:$0xff]
    %v1702 = vld [vmem:[#allocation6 + $0x188] sm:$0xff]
    %v1703 = vld [vmem:[#allocation6 + $0x190] sm:$0xff]
    %v1704 = vld [vmem:[#allocation6 + $0x198] sm:$0xff]
    %v1705 = vld [vmem:[#allocation6 + $0x1a0] sm:$0xff]
    %v1706 = vld [vmem:[#allocation6 + $0x1a8] sm:$0xff]
    %v1707 = vld [vmem:[#allocation6 + $0x1b0] sm:$0xff]
    %v1708 = vld [vmem:[#allocation6 + $0x1b8] sm:$0xff]
    %v1709 = vld [vmem:[#allocation6 + $0x1c0] sm:$0xff]
    %v1710 = vld [vmem:[#allocation6 + $0x1c8] sm:$0xff]
    %v1711 = vld [vmem:[#allocation6 + $0x1d0] sm:$0xff]
    %v1712 = vld [vmem:[#allocation6 + $0x1d8] sm:$0xff]
    %v1713 = vld [vmem:[#allocation6 + $0x1e0] sm:$0xff]
    %v1714 = vld [vmem:[#allocation6 + $0x1e8] sm:$0xff]
    %v1715 = vld [vmem:[#allocation6 + $0x1f0] sm:$0xff]
    %v1716 = vld [vmem:[#allocation6 + $0x1f8] sm:$0xff]
    %1717 = vmatprep.subr.mxu0 %v1654
    %1718 = vmatpush1.msra.mxu0 %v1653
    %1719 = vmatprep.subr.mxu0 %v1658
    %1720 = vmatpush1.msra.mxu0 %v1657
    %1721 = vmatprep.subr.mxu0 %v1662
    %1722 = vmatpush1.msra.mxu0 %v1661
    %1723 = vmatprep.subr.mxu0 %v1666
    %1724 = vmatpush1.msra.mxu0 %v1665
    %1725 = vmatprep.subr.mxu0 %v1670
    %1726 = vmatpush1.msra.mxu0 %v1669
    %1727 = vmatprep.subr.mxu0 %v1674
    %1728 = vmatpush1.msra.mxu0 %v1673
    %1729 = vmatprep.subr.mxu0 %v1678
    %1730 = vmatpush1.msra.mxu0 %v1677
    %1731 = vmatprep.subr.mxu0 %v1682
    %1732 = vmatpush1.msra.mxu0 %v1681
    %1733 = vmatprep.subr.mxu0 %v1686
    %1734 = vmatpush1.msra.mxu0 %v1685
    %1735 = vmatprep.subr.mxu0 %v1690
    %1736 = vmatpush1.msra.mxu0 %v1689
    %1737 = vmatprep.subr.mxu0 %v1694
    %1738 = vmatpush1.msra.mxu0 %v1693
    %1739 = vmatprep.subr.mxu0 %v1698
    %1740 = vmatpush1.msra.mxu0 %v1697
    %1741 = vmatprep.subr.mxu0 %v1702
    %1742 = vmatpush1.msra.mxu0 %v1701
    %1743 = vmatprep.subr.mxu0 %v1706
    %1744 = vmatpush1.msra.mxu0 %v1705
    %1745 = vmatprep.subr.mxu0 %v1710
    %1746 = vmatpush1.msra.mxu0 %v1709
    %1747 = vmatprep.subr.mxu0 %v1714
    %1748 = vmatpush1.msra.mxu0 %v1713
    %1749 = vmatprep.subr.mxu0 0.0
    %1750 = vmatpush1.msra.mxu0 0.0
    %1751 = vmatprep.subr.mxu0 0.0
    %1752 = vmatpush1.msra.mxu0 0.0
    %1753 = vmatprep.subr.mxu0 0.0
    %1754 = vmatpush1.msra.mxu0 0.0
    %1755 = vmatprep.subr.mxu0 0.0
    %1756 = vmatpush1.msra.mxu0 0.0
    %1757 = vmatprep.subr.mxu0 0.0
    %1758 = vmatpush1.msra.mxu0 0.0
    %1759 = vmatprep.subr.mxu0 0.0
    %1760 = vmatpush1.msra.mxu0 0.0
    %1761 = vmatprep.subr.mxu0 0.0
    %1762 = vmatpush1.msra.mxu0 0.0
    %1763 = vmatprep.subr.mxu0 0.0
    %1764 = vmatpush1.msra.mxu0 0.0
    %1765 = vmatprep.subr.mxu0 0.0
    %1766 = vmatpush1.msra.mxu0 0.0
    %1767 = vmatprep.subr.mxu0 0.0
    %1768 = vmatpush1.msra.mxu0 0.0
    %1769 = vmatprep.subr.mxu0 0.0
    %1770 = vmatpush1.msra.mxu0 0.0
    %1771 = vmatprep.subr.mxu0 0.0
    %1772 = vmatpush1.msra.mxu0 0.0
    %1773 = vmatprep.subr.mxu0 0.0
    %1774 = vmatpush1.msra.mxu0 0.0
    %1775 = vmatprep.subr.mxu0 0.0
    %1776 = vmatpush1.msra.mxu0 0.0
    %1777 = vmatprep.subr.mxu0 0.0
    %1778 = vmatpush1.msra.mxu0 0.0
    %1779 = vmatprep.subr.mxu0 0.0
    %1780 = vmatpush1.msra.mxu0 0.0
    %1781 = vmatprep.mubr.f32.mxu0 0.0
    %1782 = vmatmul.mubr.f32.gmra.mrb[0].mxu0 %v1643
    %v1783 = vpop.f32.mrb[0].mxu0
    %v1784 = vadd.f32 0.0, %v1783
    %v1785 = vpop.f32.mrb[0].mxu0
    %v1786 = vadd.f32 0.0, %v1785
    %1787 = vdwg.mxu0
    %1788 = vmatprep.subr.mxu0 %v1656
    %1789 = vmatpush1.msra.mxu0 %v1655
    %1790 = vmatprep.subr.mxu0 %v1660
    %1791 = vmatpush1.msra.mxu0 %v1659
    %1792 = vmatprep.subr.mxu0 %v1664
    %1793 = vmatpush1.msra.mxu0 %v1663
    %1794 = vmatprep.subr.mxu0 %v1668
    %1795 = vmatpush1.msra.mxu0 %v1667
    %1796 = vmatprep.subr.mxu0 %v1672
    %1797 = vmatpush1.msra.mxu0 %v1671
    %1798 = vmatprep.subr.mxu0 %v1676
    %1799 = vmatpush1.msra.mxu0 %v1675
    %1800 = vmatprep.subr.mxu0 %v1680
    %1801 = vmatpush1.msra.mxu0 %v1679
    %1802 = vmatprep.subr.mxu0 %v1684
    %1803 = vmatpush1.msra.mxu0 %v1683
    %1804 = vmatprep.subr.mxu0 %v1688
    %1805 = vmatpush1.msra.mxu0 %v1687
    %1806 = vmatprep.subr.mxu0 %v1692
    %1807 = vmatpush1.msra.mxu0 %v1691
    %1808 = vmatprep.subr.mxu0 %v1696
    %1809 = vmatpush1.msra.mxu0 %v1695
    %1810 = vmatprep.subr.mxu0 %v1700
    %1811 = vmatpush1.msra.mxu0 %v1699
    %1812 = vmatprep.subr.mxu0 %v1704
    %1813 = vmatpush1.msra.mxu0 %v1703
    %1814 = vmatprep.subr.mxu0 %v1708
    %1815 = vmatpush1.msra.mxu0 %v1707
    %1816 = vmatprep.subr.mxu0 %v1712
    %1817 = vmatpush1.msra.mxu0 %v1711
    %1818 = vmatprep.subr.mxu0 %v1716
    %1819 = vmatpush1.msra.mxu0 %v1715
    %1820 = vmatprep.subr.mxu0 0.0
    %1821 = vmatpush1.msra.mxu0 0.0
    %1822 = vmatprep.subr.mxu0 0.0
    %1823 = vmatpush1.msra.mxu0 0.0
    %1824 = vmatprep.subr.mxu0 0.0
    %1825 = vmatpush1.msra.mxu0 0.0
    %1826 = vmatprep.subr.mxu0 0.0
    %1827 = vmatpush1.msra.mxu0 0.0
    %1828 = vmatprep.subr.mxu0 0.0
    %1829 = vmatpush1.msra.mxu0 0.0
    %1830 = vmatprep.subr.mxu0 0.0
    %1831 = vmatpush1.msra.mxu0 0.0
    %1832 = vmatprep.subr.mxu0 0.0
    %1833 = vmatpush1.msra.mxu0 0.0
    %1834 = vmatprep.subr.mxu0 0.0
    %1835 = vmatpush1.msra.mxu0 0.0
    %1836 = vmatprep.subr.mxu0 0.0
    %1837 = vmatpush1.msra.mxu0 0.0
    %1838 = vmatprep.subr.mxu0 0.0
    %1839 = vmatpush1.msra.mxu0 0.0
    %1840 = vmatprep.subr.mxu0 0.0
    %1841 = vmatpush1.msra.mxu0 0.0
    %1842 = vmatprep.subr.mxu0 0.0
    %1843 = vmatpush1.msra.mxu0 0.0
    %1844 = vmatprep.subr.mxu0 0.0
    %1845 = vmatpush1.msra.mxu0 0.0
    %1846 = vmatprep.subr.mxu0 0.0
    %1847 = vmatpush1.msra.mxu0 0.0
    %1848 = vmatprep.subr.mxu0 0.0
    %1849 = vmatpush1.msra.mxu0 0.0
    %1850 = vmatprep.subr.mxu0 0.0
    %1851 = vmatpush1.msra.mxu0 0.0
    %1852 = vmatprep.mubr.f32.mxu0 0.0
    %1853 = vmatmul.mubr.f32.gmra.mrb[0].mxu0 %v1643
    %v1854 = vpop.f32.mrb[0].mxu0
    %v1855 = vadd.f32 0.0, %v1854
    %v1856 = vpop.f32.mrb[0].mxu0
    %v1857 = vadd.f32 0.0, %v1856
    %1858 = vdwg.mxu0
    %v1859 = vadd.f32 %v1649, %v1784
    %v1860 = vadd.f32 %v1650, %v1786
    %v1861 = vadd.f32 %v1651, %v1855
    %v1862 = vadd.f32 %v1652, %v1857
    %v1863 = vxor.u32 %v1859, 2147483648
    %v1864 = vmul.f32 %v1863, 1.442695
    %v1865 = vpow.pop %v1864
    %v1866 = vadd.f32 %v1865, 1.0
    %v1867 = vrcp.pop %v1866
    %v1868 = vmul.f32 1.0, %v1867
    %v1869 = vxor.u32 %v1860, 2147483648
    %v1870 = vmul.f32 %v1869, 1.442695
    %v1871 = vpow.pop %v1870
    %v1872 = vadd.f32 %v1871, 1.0
    %v1873 = vrcp.pop %v1872
    %v1874 = vmul.f32 1.0, %v1873
    %v1875 = vtanh.pop %v1861
    %v1876 = vxor.u32 %v1862, 2147483648
    %v1877 = vmul.f32 %v1876, 1.442695
    %v1878 = vpow.pop %v1877
    %v1879 = vadd.f32 %v1878, 1.0
    %v1880 = vrcp.pop %v1879
    %v1881 = vmul.f32 1.0, %v1880
    %v1882 = vmul.f32 %v1874, %v1641
    %v1883 = vmul.f32 %v1868, %v1875
    %v1884 = vadd.f32 %v1882, %v1883
    %v1885 = vtanh.pop %v1884
    %v1886 = vmul.f32 %v1881, %v1885
    %s1887 = scalar_lea.vmem [#allocation5], 40
    %1888 = vst [vmem:[%s1887] sm:$0xff] %v1886
    %s1889 = smul.u32 6, 4
    %s1890 = smul.addr %s1889, 8
    %s1891 = scalar_lea.vmem [#allocation4], %s1890
    %v1892 = vld [vmem:[%s1891] sm:$0xff]
    %v1893 = vld [vmem:[%s1891 + $0x8] sm:$0xff]
    %v1894 = vld [vmem:[%s1891 + $0x10] sm:$0xff]
    %v1895 = vld [vmem:[%s1891 + $0x18] sm:$0xff]
    %v1896 = vld [vmem:[#allocation6] sm:$0xff]
    %v1897 = vld [vmem:[#allocation6 + $0x8] sm:$0xff]
    %v1898 = vld [vmem:[#allocation6 + $0x10] sm:$0xff]
    %v1899 = vld [vmem:[#allocation6 + $0x18] sm:$0xff]
    %v1900 = vld [vmem:[#allocation6 + $0x20] sm:$0xff]
    %v1901 = vld [vmem:[#allocation6 + $0x28] sm:$0xff]
    %v1902 = vld [vmem:[#allocation6 + $0x30] sm:$0xff]
    %v1903 = vld [vmem:[#allocation6 + $0x38] sm:$0xff]
    %v1904 = vld [vmem:[#allocation6 + $0x40] sm:$0xff]
    %v1905 = vld [vmem:[#allocation6 + $0x48] sm:$0xff]
    %v1906 = vld [vmem:[#allocation6 + $0x50] sm:$0xff]
    %v1907 = vld [vmem:[#allocation6 + $0x58] sm:$0xff]
    %v1908 = vld [vmem:[#allocation6 + $0x60] sm:$0xff]
    %v1909 = vld [vmem:[#allocation6 + $0x68] sm:$0xff]
    %v1910 = vld [vmem:[#allocation6 + $0x70] sm:$0xff]
    %v1911 = vld [vmem:[#allocation6 + $0x78] sm:$0xff]
    %v1912 = vld [vmem:[#allocation6 + $0x80] sm:$0xff]
    %v1913 = vld [vmem:[#allocation6 + $0x88] sm:$0xff]
    %v1914 = vld [vmem:[#allocation6 + $0x90] sm:$0xff]
    %v1915 = vld [vmem:[#allocation6 + $0x98] sm:$0xff]
    %v1916 = vld [vmem:[#allocation6 + $0xa0] sm:$0xff]
    %v1917 = vld [vmem:[#allocation6 + $0xa8] sm:$0xff]
    %v1918 = vld [vmem:[#allocation6 + $0xb0] sm:$0xff]
    %v1919 = vld [vmem:[#allocation6 + $0xb8] sm:$0xff]
    %v1920 = vld [vmem:[#allocation6 + $0xc0] sm:$0xff]
    %v1921 = vld [vmem:[#allocation6 + $0xc8] sm:$0xff]
    %v1922 = vld [vmem:[#allocation6 + $0xd0] sm:$0xff]
    %v1923 = vld [vmem:[#allocation6 + $0xd8] sm:$0xff]
    %v1924 = vld [vmem:[#allocation6 + $0xe0] sm:$0xff]
    %v1925 = vld [vmem:[#allocation6 + $0xe8] sm:$0xff]
    %v1926 = vld [vmem:[#allocation6 + $0xf0] sm:$0xff]
    %v1927 = vld [vmem:[#allocation6 + $0xf8] sm:$0xff]
    %v1928 = vld [vmem:[#allocation6 + $0x100] sm:$0xff]
    %v1929 = vld [vmem:[#allocation6 + $0x108] sm:$0xff]
    %v1930 = vld [vmem:[#allocation6 + $0x110] sm:$0xff]
    %v1931 = vld [vmem:[#allocation6 + $0x118] sm:$0xff]
    %v1932 = vld [vmem:[#allocation6 + $0x120] sm:$0xff]
    %v1933 = vld [vmem:[#allocation6 + $0x128] sm:$0xff]
    %v1934 = vld [vmem:[#allocation6 + $0x130] sm:$0xff]
    %v1935 = vld [vmem:[#allocation6 + $0x138] sm:$0xff]
    %v1936 = vld [vmem:[#allocation6 + $0x140] sm:$0xff]
    %v1937 = vld [vmem:[#allocation6 + $0x148] sm:$0xff]
    %v1938 = vld [vmem:[#allocation6 + $0x150] sm:$0xff]
    %v1939 = vld [vmem:[#allocation6 + $0x158] sm:$0xff]
    %v1940 = vld [vmem:[#allocation6 + $0x160] sm:$0xff]
    %v1941 = vld [vmem:[#allocation6 + $0x168] sm:$0xff]
    %v1942 = vld [vmem:[#allocation6 + $0x170] sm:$0xff]
    %v1943 = vld [vmem:[#allocation6 + $0x178] sm:$0xff]
    %v1944 = vld [vmem:[#allocation6 + $0x180] sm:$0xff]
    %v1945 = vld [vmem:[#allocation6 + $0x188] sm:$0xff]
    %v1946 = vld [vmem:[#allocation6 + $0x190] sm:$0xff]
    %v1947 = vld [vmem:[#allocation6 + $0x198] sm:$0xff]
    %v1948 = vld [vmem:[#allocation6 + $0x1a0] sm:$0xff]
    %v1949 = vld [vmem:[#allocation6 + $0x1a8] sm:$0xff]
    %v1950 = vld [vmem:[#allocation6 + $0x1b0] sm:$0xff]
    %v1951 = vld [vmem:[#allocation6 + $0x1b8] sm:$0xff]
    %v1952 = vld [vmem:[#allocation6 + $0x1c0] sm:$0xff]
    %v1953 = vld [vmem:[#allocation6 + $0x1c8] sm:$0xff]
    %v1954 = vld [vmem:[#allocation6 + $0x1d0] sm:$0xff]
    %v1955 = vld [vmem:[#allocation6 + $0x1d8] sm:$0xff]
    %v1956 = vld [vmem:[#allocation6 + $0x1e0] sm:$0xff]
    %v1957 = vld [vmem:[#allocation6 + $0x1e8] sm:$0xff]
    %v1958 = vld [vmem:[#allocation6 + $0x1f0] sm:$0xff]
    %v1959 = vld [vmem:[#allocation6 + $0x1f8] sm:$0xff]
    %1960 = vmatprep.subr.mxu0 %v1897
    %1961 = vmatpush1.msra.mxu0 %v1896
    %1962 = vmatprep.subr.mxu0 %v1901
    %1963 = vmatpush1.msra.mxu0 %v1900
    %1964 = vmatprep.subr.mxu0 %v1905
    %1965 = vmatpush1.msra.mxu0 %v1904
    %1966 = vmatprep.subr.mxu0 %v1909
    %1967 = vmatpush1.msra.mxu0 %v1908
    %1968 = vmatprep.subr.mxu0 %v1913
    %1969 = vmatpush1.msra.mxu0 %v1912
    %1970 = vmatprep.subr.mxu0 %v1917
    %1971 = vmatpush1.msra.mxu0 %v1916
    %1972 = vmatprep.subr.mxu0 %v1921
    %1973 = vmatpush1.msra.mxu0 %v1920
    %1974 = vmatprep.subr.mxu0 %v1925
    %1975 = vmatpush1.msra.mxu0 %v1924
    %1976 = vmatprep.subr.mxu0 %v1929
    %1977 = vmatpush1.msra.mxu0 %v1928
    %1978 = vmatprep.subr.mxu0 %v1933
    %1979 = vmatpush1.msra.mxu0 %v1932
    %1980 = vmatprep.subr.mxu0 %v1937
    %1981 = vmatpush1.msra.mxu0 %v1936
    %1982 = vmatprep.subr.mxu0 %v1941
    %1983 = vmatpush1.msra.mxu0 %v1940
    %1984 = vmatprep.subr.mxu0 %v1945
    %1985 = vmatpush1.msra.mxu0 %v1944
    %1986 = vmatprep.subr.mxu0 %v1949
    %1987 = vmatpush1.msra.mxu0 %v1948
    %1988 = vmatprep.subr.mxu0 %v1953
    %1989 = vmatpush1.msra.mxu0 %v1952
    %1990 = vmatprep.subr.mxu0 %v1957
    %1991 = vmatpush1.msra.mxu0 %v1956
    %1992 = vmatprep.subr.mxu0 0.0
    %1993 = vmatpush1.msra.mxu0 0.0
    %1994 = vmatprep.subr.mxu0 0.0
    %1995 = vmatpush1.msra.mxu0 0.0
    %1996 = vmatprep.subr.mxu0 0.0
    %1997 = vmatpush1.msra.mxu0 0.0
    %1998 = vmatprep.subr.mxu0 0.0
    %1999 = vmatpush1.msra.mxu0 0.0
    %2000 = vmatprep.subr.mxu0 0.0
    %2001 = vmatpush1.msra.mxu0 0.0
    %2002 = vmatprep.subr.mxu0 0.0
    %2003 = vmatpush1.msra.mxu0 0.0
    %2004 = vmatprep.subr.mxu0 0.0
    %2005 = vmatpush1.msra.mxu0 0.0
    %2006 = vmatprep.subr.mxu0 0.0
    %2007 = vmatpush1.msra.mxu0 0.0
    %2008 = vmatprep.subr.mxu0 0.0
    %2009 = vmatpush1.msra.mxu0 0.0
    %2010 = vmatprep.subr.mxu0 0.0
    %2011 = vmatpush1.msra.mxu0 0.0
    %2012 = vmatprep.subr.mxu0 0.0
    %2013 = vmatpush1.msra.mxu0 0.0
    %2014 = vmatprep.subr.mxu0 0.0
    %2015 = vmatpush1.msra.mxu0 0.0
    %2016 = vmatprep.subr.mxu0 0.0
    %2017 = vmatpush1.msra.mxu0 0.0
    %2018 = vmatprep.subr.mxu0 0.0
    %2019 = vmatpush1.msra.mxu0 0.0
    %2020 = vmatprep.subr.mxu0 0.0
    %2021 = vmatpush1.msra.mxu0 0.0
    %2022 = vmatprep.subr.mxu0 0.0
    %2023 = vmatpush1.msra.mxu0 0.0
    %2024 = vmatprep.mubr.f32.mxu0 0.0
    %2025 = vmatmul.mubr.f32.gmra.mrb[0].mxu0 %v1886
    %v2026 = vpop.f32.mrb[0].mxu0
    %v2027 = vadd.f32 0.0, %v2026
    %v2028 = vpop.f32.mrb[0].mxu0
    %v2029 = vadd.f32 0.0, %v2028
    %2030 = vdwg.mxu0
    %2031 = vmatprep.subr.mxu0 %v1899
    %2032 = vmatpush1.msra.mxu0 %v1898
    %2033 = vmatprep.subr.mxu0 %v1903
    %2034 = vmatpush1.msra.mxu0 %v1902
    %2035 = vmatprep.subr.mxu0 %v1907
    %2036 = vmatpush1.msra.mxu0 %v1906
    %2037 = vmatprep.subr.mxu0 %v1911
    %2038 = vmatpush1.msra.mxu0 %v1910
    %2039 = vmatprep.subr.mxu0 %v1915
    %2040 = vmatpush1.msra.mxu0 %v1914
    %2041 = vmatprep.subr.mxu0 %v1919
    %2042 = vmatpush1.msra.mxu0 %v1918
    %2043 = vmatprep.subr.mxu0 %v1923
    %2044 = vmatpush1.msra.mxu0 %v1922
    %2045 = vmatprep.subr.mxu0 %v1927
    %2046 = vmatpush1.msra.mxu0 %v1926
    %2047 = vmatprep.subr.mxu0 %v1931
    %2048 = vmatpush1.msra.mxu0 %v1930
    %2049 = vmatprep.subr.mxu0 %v1935
    %2050 = vmatpush1.msra.mxu0 %v1934
    %2051 = vmatprep.subr.mxu0 %v1939
    %2052 = vmatpush1.msra.mxu0 %v1938
    %2053 = vmatprep.subr.mxu0 %v1943
    %2054 = vmatpush1.msra.mxu0 %v1942
    %2055 = vmatprep.subr.mxu0 %v1947
    %2056 = vmatpush1.msra.mxu0 %v1946
    %2057 = vmatprep.subr.mxu0 %v1951
    %2058 = vmatpush1.msra.mxu0 %v1950
    %2059 = vmatprep.subr.mxu0 %v1955
    %2060 = vmatpush1.msra.mxu0 %v1954
    %2061 = vmatprep.subr.mxu0 %v1959
    %2062 = vmatpush1.msra.mxu0 %v1958
    %2063 = vmatprep.subr.mxu0 0.0
    %2064 = vmatpush1.msra.mxu0 0.0
    %2065 = vmatprep.subr.mxu0 0.0
    %2066 = vmatpush1.msra.mxu0 0.0
    %2067 = vmatprep.subr.mxu0 0.0
    %2068 = vmatpush1.msra.mxu0 0.0
    %2069 = vmatprep.subr.mxu0 0.0
    %2070 = vmatpush1.msra.mxu0 0.0
    %2071 = vmatprep.subr.mxu0 0.0
    %2072 = vmatpush1.msra.mxu0 0.0
    %2073 = vmatprep.subr.mxu0 0.0
    %2074 = vmatpush1.msra.mxu0 0.0
    %2075 = vmatprep.subr.mxu0 0.0
    %2076 = vmatpush1.msra.mxu0 0.0
    %2077 = vmatprep.subr.mxu0 0.0
    %2078 = vmatpush1.msra.mxu0 0.0
    %2079 = vmatprep.subr.mxu0 0.0
    %2080 = vmatpush1.msra.mxu0 0.0
    %2081 = vmatprep.subr.mxu0 0.0
    %2082 = vmatpush1.msra.mxu0 0.0
    %2083 = vmatprep.subr.mxu0 0.0
    %2084 = vmatpush1.msra.mxu0 0.0
    %2085 = vmatprep.subr.mxu0 0.0
    %2086 = vmatpush1.msra.mxu0 0.0
    %2087 = vmatprep.subr.mxu0 0.0
    %2088 = vmatpush1.msra.mxu0 0.0
    %2089 = vmatprep.subr.mxu0 0.0
    %2090 = vmatpush1.msra.mxu0 0.0
    %2091 = vmatprep.subr.mxu0 0.0
    %2092 = vmatpush1.msra.mxu0 0.0
    %2093 = vmatprep.subr.mxu0 0.0
    %2094 = vmatpush1.msra.mxu0 0.0
    %2095 = vmatprep.mubr.f32.mxu0 0.0
    %2096 = vmatmul.mubr.f32.gmra.mrb[0].mxu0 %v1886
    %v2097 = vpop.f32.mrb[0].mxu0
    %v2098 = vadd.f32 0.0, %v2097
    %v2099 = vpop.f32.mrb[0].mxu0
    %v2100 = vadd.f32 0.0, %v2099
    %2101 = vdwg.mxu0
    %v2102 = vadd.f32 %v1892, %v2027
    %v2103 = vadd.f32 %v1893, %v2029
    %v2104 = vadd.f32 %v1894, %v2098
    %v2105 = vadd.f32 %v1895, %v2100
    %v2106 = vxor.u32 %v2102, 2147483648
    %v2107 = vmul.f32 %v2106, 1.442695
    %v2108 = vpow.pop %v2107
    %v2109 = vadd.f32 %v2108, 1.0
    %v2110 = vrcp.pop %v2109
    %v2111 = vmul.f32 1.0, %v2110
    %v2112 = vxor.u32 %v2103, 2147483648
    %v2113 = vmul.f32 %v2112, 1.442695
    %v2114 = vpow.pop %v2113
    %v2115 = vadd.f32 %v2114, 1.0
    %v2116 = vrcp.pop %v2115
    %v2117 = vmul.f32 1.0, %v2116
    %v2118 = vtanh.pop %v2104
    %v2119 = vxor.u32 %v2105, 2147483648
    %v2120 = vmul.f32 %v2119, 1.442695
    %v2121 = vpow.pop %v2120
    %v2122 = vadd.f32 %v2121, 1.0
    %v2123 = vrcp.pop %v2122
    %v2124 = vmul.f32 1.0, %v2123
    %v2125 = vmul.f32 %v2117, %v1884
    %v2126 = vmul.f32 %v2111, %v2118
    %v2127 = vadd.f32 %v2125, %v2126
    %v2128 = vtanh.pop %v2127
    %v2129 = vmul.f32 %v2124, %v2128
    %s2130 = scalar_lea.vmem [#allocation5], 48
    %2131 = vst [vmem:[%s2130] sm:$0xff] %v2129
    %s2132 = smul.u32 7, 4
    %s2133 = smul.addr %s2132, 8
    %s2134 = scalar_lea.vmem [#allocation4], %s2133
    %v2135 = vld [vmem:[%s2134] sm:$0xff]
    %v2136 = vld [vmem:[%s2134 + $0x8] sm:$0xff]
    %v2137 = vld [vmem:[%s2134 + $0x10] sm:$0xff]
    %v2138 = vld [vmem:[%s2134 + $0x18] sm:$0xff]
    %v2139 = vld [vmem:[#allocation6] sm:$0xff]
    %v2140 = vld [vmem:[#allocation6 + $0x8] sm:$0xff]
    %v2141 = vld [vmem:[#allocation6 + $0x10] sm:$0xff]
    %v2142 = vld [vmem:[#allocation6 + $0x18] sm:$0xff]
    %v2143 = vld [vmem:[#allocation6 + $0x20] sm:$0xff]
    %v2144 = vld [vmem:[#allocation6 + $0x28] sm:$0xff]
    %v2145 = vld [vmem:[#allocation6 + $0x30] sm:$0xff]
    %v2146 = vld [vmem:[#allocation6 + $0x38] sm:$0xff]
    %v2147 = vld [vmem:[#allocation6 + $0x40] sm:$0xff]
    %v2148 = vld [vmem:[#allocation6 + $0x48] sm:$0xff]
    %v2149 = vld [vmem:[#allocation6 + $0x50] sm:$0xff]
    %v2150 = vld [vmem:[#allocation6 + $0x58] sm:$0xff]
    %v2151 = vld [vmem:[#allocation6 + $0x60] sm:$0xff]
    %v2152 = vld [vmem:[#allocation6 + $0x68] sm:$0xff]
    %v2153 = vld [vmem:[#allocation6 + $0x70] sm:$0xff]
    %v2154 = vld [vmem:[#allocation6 + $0x78] sm:$0xff]
    %v2155 = vld [vmem:[#allocation6 + $0x80] sm:$0xff]
    %v2156 = vld [vmem:[#allocation6 + $0x88] sm:$0xff]
    %v2157 = vld [vmem:[#allocation6 + $0x90] sm:$0xff]
    %v2158 = vld [vmem:[#allocation6 + $0x98] sm:$0xff]
    %v2159 = vld [vmem:[#allocation6 + $0xa0] sm:$0xff]
    %v2160 = vld [vmem:[#allocation6 + $0xa8] sm:$0xff]
    %v2161 = vld [vmem:[#allocation6 + $0xb0] sm:$0xff]
    %v2162 = vld [vmem:[#allocation6 + $0xb8] sm:$0xff]
    %v2163 = vld [vmem:[#allocation6 + $0xc0] sm:$0xff]
    %v2164 = vld [vmem:[#allocation6 + $0xc8] sm:$0xff]
    %v2165 = vld [vmem:[#allocation6 + $0xd0] sm:$0xff]
    %v2166 = vld [vmem:[#allocation6 + $0xd8] sm:$0xff]
    %v2167 = vld [vmem:[#allocation6 + $0xe0] sm:$0xff]
    %v2168 = vld [vmem:[#allocation6 + $0xe8] sm:$0xff]
    %v2169 = vld [vmem:[#allocation6 + $0xf0] sm:$0xff]
    %v2170 = vld [vmem:[#allocation6 + $0xf8] sm:$0xff]
    %v2171 = vld [vmem:[#allocation6 + $0x100] sm:$0xff]
    %v2172 = vld [vmem:[#allocation6 + $0x108] sm:$0xff]
    %v2173 = vld [vmem:[#allocation6 + $0x110] sm:$0xff]
    %v2174 = vld [vmem:[#allocation6 + $0x118] sm:$0xff]
    %v2175 = vld [vmem:[#allocation6 + $0x120] sm:$0xff]
    %v2176 = vld [vmem:[#allocation6 + $0x128] sm:$0xff]
    %v2177 = vld [vmem:[#allocation6 + $0x130] sm:$0xff]
    %v2178 = vld [vmem:[#allocation6 + $0x138] sm:$0xff]
    %v2179 = vld [vmem:[#allocation6 + $0x140] sm:$0xff]
    %v2180 = vld [vmem:[#allocation6 + $0x148] sm:$0xff]
    %v2181 = vld [vmem:[#allocation6 + $0x150] sm:$0xff]
    %v2182 = vld [vmem:[#allocation6 + $0x158] sm:$0xff]
    %v2183 = vld [vmem:[#allocation6 + $0x160] sm:$0xff]
    %v2184 = vld [vmem:[#allocation6 + $0x168] sm:$0xff]
    %v2185 = vld [vmem:[#allocation6 + $0x170] sm:$0xff]
    %v2186 = vld [vmem:[#allocation6 + $0x178] sm:$0xff]
    %v2187 = vld [vmem:[#allocation6 + $0x180] sm:$0xff]
    %v2188 = vld [vmem:[#allocation6 + $0x188] sm:$0xff]
    %v2189 = vld [vmem:[#allocation6 + $0x190] sm:$0xff]
    %v2190 = vld [vmem:[#allocation6 + $0x198] sm:$0xff]
    %v2191 = vld [vmem:[#allocation6 + $0x1a0] sm:$0xff]
    %v2192 = vld [vmem:[#allocation6 + $0x1a8] sm:$0xff]
    %v2193 = vld [vmem:[#allocation6 + $0x1b0] sm:$0xff]
    %v2194 = vld [vmem:[#allocation6 + $0x1b8] sm:$0xff]
    %v2195 = vld [vmem:[#allocation6 + $0x1c0] sm:$0xff]
    %v2196 = vld [vmem:[#allocation6 + $0x1c8] sm:$0xff]
    %v2197 = vld [vmem:[#allocation6 + $0x1d0] sm:$0xff]
    %v2198 = vld [vmem:[#allocation6 + $0x1d8] sm:$0xff]
    %v2199 = vld [vmem:[#allocation6 + $0x1e0] sm:$0xff]
    %v2200 = vld [vmem:[#allocation6 + $0x1e8] sm:$0xff]
    %v2201 = vld [vmem:[#allocation6 + $0x1f0] sm:$0xff]
    %v2202 = vld [vmem:[#allocation6 + $0x1f8] sm:$0xff]
    %2203 = vmatprep.subr.mxu0 %v2140
    %2204 = vmatpush1.msra.mxu0 %v2139
    %2205 = vmatprep.subr.mxu0 %v2144
    %2206 = vmatpush1.msra.mxu0 %v2143
    %2207 = vmatprep.subr.mxu0 %v2148
    %2208 = vmatpush1.msra.mxu0 %v2147
    %2209 = vmatprep.subr.mxu0 %v2152
    %2210 = vmatpush1.msra.mxu0 %v2151
    %2211 = vmatprep.subr.mxu0 %v2156
    %2212 = vmatpush1.msra.mxu0 %v2155
    %2213 = vmatprep.subr.mxu0 %v2160
    %2214 = vmatpush1.msra.mxu0 %v2159
    %2215 = vmatprep.subr.mxu0 %v2164
    %2216 = vmatpush1.msra.mxu0 %v2163
    %2217 = vmatprep.subr.mxu0 %v2168
    %2218 = vmatpush1.msra.mxu0 %v2167
    %2219 = vmatprep.subr.mxu0 %v2172
    %2220 = vmatpush1.msra.mxu0 %v2171
    %2221 = vmatprep.subr.mxu0 %v2176
    %2222 = vmatpush1.msra.mxu0 %v2175
    %2223 = vmatprep.subr.mxu0 %v2180
    %2224 = vmatpush1.msra.mxu0 %v2179
    %2225 = vmatprep.subr.mxu0 %v2184
    %2226 = vmatpush1.msra.mxu0 %v2183
    %2227 = vmatprep.subr.mxu0 %v2188
    %2228 = vmatpush1.msra.mxu0 %v2187
    %2229 = vmatprep.subr.mxu0 %v2192
    %2230 = vmatpush1.msra.mxu0 %v2191
    %2231 = vmatprep.subr.mxu0 %v2196
    %2232 = vmatpush1.msra.mxu0 %v2195
    %2233 = vmatprep.subr.mxu0 %v2200
    %2234 = vmatpush1.msra.mxu0 %v2199
    %2235 = vmatprep.subr.mxu0 0.0
    %2236 = vmatpush1.msra.mxu0 0.0
    %2237 = vmatprep.subr.mxu0 0.0
    %2238 = vmatpush1.msra.mxu0 0.0
    %2239 = vmatprep.subr.mxu0 0.0
    %2240 = vmatpush1.msra.mxu0 0.0
    %2241 = vmatprep.subr.mxu0 0.0
    %2242 = vmatpush1.msra.mxu0 0.0
    %2243 = vmatprep.subr.mxu0 0.0
    %2244 = vmatpush1.msra.mxu0 0.0
    %2245 = vmatprep.subr.mxu0 0.0
    %2246 = vmatpush1.msra.mxu0 0.0
    %2247 = vmatprep.subr.mxu0 0.0
    %2248 = vmatpush1.msra.mxu0 0.0
    %2249 = vmatprep.subr.mxu0 0.0
    %2250 = vmatpush1.msra.mxu0 0.0
    %2251 = vmatprep.subr.mxu0 0.0
    %2252 = vmatpush1.msra.mxu0 0.0
    %2253 = vmatprep.subr.mxu0 0.0
    %2254 = vmatpush1.msra.mxu0 0.0
    %2255 = vmatprep.subr.mxu0 0.0
    %2256 = vmatpush1.msra.mxu0 0.0
    %2257 = vmatprep.subr.mxu0 0.0
    %2258 = vmatpush1.msra.mxu0 0.0
    %2259 = vmatprep.subr.mxu0 0.0
    %2260 = vmatpush1.msra.mxu0 0.0
    %2261 = vmatprep.subr.mxu0 0.0
    %2262 = vmatpush1.msra.mxu0 0.0
    %2263 = vmatprep.subr.mxu0 0.0
    %2264 = vmatpush1.msra.mxu0 0.0
    %2265 = vmatprep.subr.mxu0 0.0
    %2266 = vmatpush1.msra.mxu0 0.0
    %2267 = vmatprep.mubr.f32.mxu0 0.0
    %2268 = vmatmul.mubr.f32.gmra.mrb[0].mxu0 %v2129
    %v2269 = vpop.f32.mrb[0].mxu0
    %v2270 = vadd.f32 0.0, %v2269
    %v2271 = vpop.f32.mrb[0].mxu0
    %v2272 = vadd.f32 0.0, %v2271
    %2273 = vdwg.mxu0
    %2274 = vmatprep.subr.mxu0 %v2142
    %2275 = vmatpush1.msra.mxu0 %v2141
    %2276 = vmatprep.subr.mxu0 %v2146
    %2277 = vmatpush1.msra.mxu0 %v2145
    %2278 = vmatprep.subr.mxu0 %v2150
    %2279 = vmatpush1.msra.mxu0 %v2149
    %2280 = vmatprep.subr.mxu0 %v2154
    %2281 = vmatpush1.msra.mxu0 %v2153
    %2282 = vmatprep.subr.mxu0 %v2158
    %2283 = vmatpush1.msra.mxu0 %v2157
    %2284 = vmatprep.subr.mxu0 %v2162
    %2285 = vmatpush1.msra.mxu0 %v2161
    %2286 = vmatprep.subr.mxu0 %v2166
    %2287 = vmatpush1.msra.mxu0 %v2165
    %2288 = vmatprep.subr.mxu0 %v2170
    %2289 = vmatpush1.msra.mxu0 %v2169
    %2290 = vmatprep.subr.mxu0 %v2174
    %2291 = vmatpush1.msra.mxu0 %v2173
    %2292 = vmatprep.subr.mxu0 %v2178
    %2293 = vmatpush1.msra.mxu0 %v2177
    %2294 = vmatprep.subr.mxu0 %v2182
    %2295 = vmatpush1.msra.mxu0 %v2181
    %2296 = vmatprep.subr.mxu0 %v2186
    %2297 = vmatpush1.msra.mxu0 %v2185
    %2298 = vmatprep.subr.mxu0 %v2190
    %2299 = vmatpush1.msra.mxu0 %v2189
    %2300 = vmatprep.subr.mxu0 %v2194
    %2301 = vmatpush1.msra.mxu0 %v2193
    %2302 = vmatprep.subr.mxu0 %v2198
    %2303 = vmatpush1.msra.mxu0 %v2197
    %2304 = vmatprep.subr.mxu0 %v2202
    %2305 = vmatpush1.msra.mxu0 %v2201
    %2306 = vmatprep.subr.mxu0 0.0
    %2307 = vmatpush1.msra.mxu0 0.0
    %2308 = vmatprep.subr.mxu0 0.0
    %2309 = vmatpush1.msra.mxu0 0.0
    %2310 = vmatprep.subr.mxu0 0.0
    %2311 = vmatpush1.msra.mxu0 0.0
    %2312 = vmatprep.subr.mxu0 0.0
    %2313 = vmatpush1.msra.mxu0 0.0
    %2314 = vmatprep.subr.mxu0 0.0
    %2315 = vmatpush1.msra.mxu0 0.0
    %2316 = vmatprep.subr.mxu0 0.0
    %2317 = vmatpush1.msra.mxu0 0.0
    %2318 = vmatprep.subr.mxu0 0.0
    %2319 = vmatpush1.msra.mxu0 0.0
    %2320 = vmatprep.subr.mxu0 0.0
    %2321 = vmatpush1.msra.mxu0 0.0
    %2322 = vmatprep.subr.mxu0 0.0
    %2323 = vmatpush1.msra.mxu0 0.0
    %2324 = vmatprep.subr.mxu0 0.0
    %2325 = vmatpush1.msra.mxu0 0.0
    %2326 = vmatprep.subr.mxu0 0.0
    %2327 = vmatpush1.msra.mxu0 0.0
    %2328 = vmatprep.subr.mxu0 0.0
    %2329 = vmatpush1.msra.mxu0 0.0
    %2330 = vmatprep.subr.mxu0 0.0
    %2331 = vmatpush1.msra.mxu0 0.0
    %2332 = vmatprep.subr.mxu0 0.0
    %2333 = vmatpush1.msra.mxu0 0.0
    %2334 = vmatprep.subr.mxu0 0.0
    %2335 = vmatpush1.msra.mxu0 0.0
    %2336 = vmatprep.subr.mxu0 0.0
    %2337 = vmatpush1.msra.mxu0 0.0
    %2338 = vmatprep.mubr.f32.mxu0 0.0
    %2339 = vmatmul.mubr.f32.gmra.mrb[0].mxu0 %v2129
    %v2340 = vpop.f32.mrb[0].mxu0
    %v2341 = vadd.f32 0.0, %v2340
    %v2342 = vpop.f32.mrb[0].mxu0
    %v2343 = vadd.f32 0.0, %v2342
    %2344 = vdwg.mxu0
    %v2345 = vadd.f32 %v2135, %v2270
    %v2346 = vadd.f32 %v2136, %v2272
    %v2347 = vadd.f32 %v2137, %v2341
    %v2348 = vadd.f32 %v2138, %v2343
    %v2349 = vxor.u32 %v2345, 2147483648
    %v2350 = vmul.f32 %v2349, 1.442695
    %v2351 = vpow.pop %v2350
    %v2352 = vadd.f32 %v2351, 1.0
    %v2353 = vrcp.pop %v2352
    %v2354 = vmul.f32 1.0, %v2353
    %v2355 = vxor.u32 %v2346, 2147483648
    %v2356 = vmul.f32 %v2355, 1.442695
    %v2357 = vpow.pop %v2356
    %v2358 = vadd.f32 %v2357, 1.0
    %v2359 = vrcp.pop %v2358
    %v2360 = vmul.f32 1.0, %v2359
    %v2361 = vtanh.pop %v2347
    %v2362 = vxor.u32 %v2348, 2147483648
    %v2363 = vmul.f32 %v2362, 1.442695
    %v2364 = vpow.pop %v2363
    %v2365 = vadd.f32 %v2364, 1.0
    %v2366 = vrcp.pop %v2365
    %v2367 = vmul.f32 1.0, %v2366
    %v2368 = vmul.f32 %v2360, %v2127
    %v2369 = vmul.f32 %v2354, %v2361
    %v2370 = vadd.f32 %v2368, %v2369
    %v2371 = vtanh.pop %v2370
    %v2372 = vmul.f32 %v2367, %v2371
    %s2373 = scalar_lea.vmem [#allocation5], 56
    %2374 = vst [vmem:[%s2373] sm:$0xff] %v2372
    %2375 = vst [vmem:[#allocation2] sm:$0xff] %v2372
    %2376 = vst [vmem:[#allocation3] sm:$0xff] %v2370
    %2377 = vst [vmem:[#allocation15] sm:$0xff] %v2372
    %2378 = vst [vmem:[#allocation17] sm:$0xff] %v2370
    %v2379 = vld [vmem:[#allocation5] sm:$0xff]
    %v2380 = vld [vmem:[#allocation5 + $0x8] sm:$0xff]
    %v2381 = vld [vmem:[#allocation5 + $0x10] sm:$0xff]
    %v2382 = vld [vmem:[#allocation5 + $0x18] sm:$0xff]
    %v2383 = vld [vmem:[#allocation5 + $0x20] sm:$0xff]
    %v2384 = vld [vmem:[#allocation5 + $0x28] sm:$0xff]
    %v2385 = vld [vmem:[#allocation5 + $0x30] sm:$0xff]
    %v2386 = vld [vmem:[#allocation5 + $0x38] sm:$0xff]
    %v2387 = vld [vmem:[#allocation9] sm:$0xff]
    %v2388 = vld [vmem:[#allocation9 + $0x8] sm:$0xff]
    %v2389 = vld [vmem:[#allocation9 + $0x10] sm:$0xff]
    %v2390 = vld [vmem:[#allocation9 + $0x18] sm:$0xff]
    %v2391 = vld [vmem:[#allocation9 + $0x20] sm:$0xff]
    %v2392 = vld [vmem:[#allocation9 + $0x28] sm:$0xff]
    %v2393 = vld [vmem:[#allocation9 + $0x30] sm:$0xff]
    %v2394 = vld [vmem:[#allocation9 + $0x38] sm:$0xff]
    %v2395 = vld [vmem:[#allocation9 + $0x40] sm:$0xff]
    %v2396 = vld [vmem:[#allocation9 + $0x48] sm:$0xff]
    %v2397 = vld [vmem:[#allocation9 + $0x50] sm:$0xff]
    %v2398 = vld [vmem:[#allocation9 + $0x58] sm:$0xff]
    %v2399 = vld [vmem:[#allocation9 + $0x60] sm:$0xff]
    %v2400 = vld [vmem:[#allocation9 + $0x68] sm:$0xff]
    %v2401 = vld [vmem:[#allocation9 + $0x70] sm:$0xff]
    %v2402 = vld [vmem:[#allocation9 + $0x78] sm:$0xff]
    %v2403 = vld [vmem:[#allocation9 + $0x80] sm:$0xff]
    %v2404 = vld [vmem:[#allocation9 + $0x88] sm:$0xff]
    %v2405 = vld [vmem:[#allocation9 + $0x90] sm:$0xff]
    %v2406 = vld [vmem:[#allocation9 + $0x98] sm:$0xff]
    %v2407 = vld [vmem:[#allocation9 + $0xa0] sm:$0xff]
    %v2408 = vld [vmem:[#allocation9 + $0xa8] sm:$0xff]
    %v2409 = vld [vmem:[#allocation9 + $0xb0] sm:$0xff]
    %v2410 = vld [vmem:[#allocation9 + $0xb8] sm:$0xff]
    %v2411 = vld [vmem:[#allocation9 + $0xc0] sm:$0xff]
    %v2412 = vld [vmem:[#allocation9 + $0xc8] sm:$0xff]
    %v2413 = vld [vmem:[#allocation9 + $0xd0] sm:$0xff]
    %v2414 = vld [vmem:[#allocation9 + $0xd8] sm:$0xff]
    %v2415 = vld [vmem:[#allocation9 + $0xe0] sm:$0xff]
    %v2416 = vld [vmem:[#allocation9 + $0xe8] sm:$0xff]
    %v2417 = vld [vmem:[#allocation9 + $0xf0] sm:$0xff]
    %v2418 = vld [vmem:[#allocation9 + $0xf8] sm:$0xff]
    %v2419 = vld [vmem:[%s7] sm:$0x3]
    %v2421 = vlaneseq
    %v2422 = vshrl.u32 %v2421, 7
    %v2423 = vsub.s32 0, %v2422
    %v2424 = vrot.slane %v2419, %v2423
    %v2425 = vlaneseq
    %v2426 = vshrl.u32 %v2425, 7
    %v2427 = vsub.s32 1, %v2426
    %v2428 = vrot.slane %v2419, %v2427
    %2431 = vmatprep.subr.mxu0 %v2388
    %2432 = vmatpush1.msra.mxu0 %v2387
    %2433 = vmatprep.subr.mxu0 %v2390
    %2434 = vmatpush1.msra.mxu0 %v2389
    %2435 = vmatprep.subr.mxu0 %v2392
    %2436 = vmatpush1.msra.mxu0 %v2391
    %2437 = vmatprep.subr.mxu0 %v2394
    %2438 = vmatpush1.msra.mxu0 %v2393
    %2439 = vmatprep.subr.mxu0 %v2396
    %2440 = vmatpush1.msra.mxu0 %v2395
    %2441 = vmatprep.subr.mxu0 %v2398
    %2442 = vmatpush1.msra.mxu0 %v2397
    %2443 = vmatprep.subr.mxu0 %v2400
    %2444 = vmatpush1.msra.mxu0 %v2399
    %2445 = vmatprep.subr.mxu0 %v2402
    %2446 = vmatpush1.msra.mxu0 %v2401
    %2447 = vmatprep.subr.mxu0 %v2404
    %2448 = vmatpush1.msra.mxu0 %v2403
    %2449 = vmatprep.subr.mxu0 %v2406
    %2450 = vmatpush1.msra.mxu0 %v2405
    %2451 = vmatprep.subr.mxu0 %v2408
    %2452 = vmatpush1.msra.mxu0 %v2407
    %2453 = vmatprep.subr.mxu0 %v2410
    %2454 = vmatpush1.msra.mxu0 %v2409
    %2455 = vmatprep.subr.mxu0 %v2412
    %2456 = vmatpush1.msra.mxu0 %v2411
    %2457 = vmatprep.subr.mxu0 %v2414
    %2458 = vmatpush1.msra.mxu0 %v2413
    %2459 = vmatprep.subr.mxu0 %v2416
    %2460 = vmatpush1.msra.mxu0 %v2415
    %2461 = vmatprep.subr.mxu0 %v2418
    %2462 = vmatpush1.msra.mxu0 %v2417
    %2463 = vmatprep.subr.mxu0 0.0
    %2464 = vmatpush1.msra.mxu0 0.0
    %2465 = vmatprep.subr.mxu0 0.0
    %2466 = vmatpush1.msra.mxu0 0.0
    %2467 = vmatprep.subr.mxu0 0.0
    %2468 = vmatpush1.msra.mxu0 0.0
    %2469 = vmatprep.subr.mxu0 0.0
    %2470 = vmatpush1.msra.mxu0 0.0
    %2471 = vmatprep.subr.mxu0 0.0
    %2472 = vmatpush1.msra.mxu0 0.0
    %2473 = vmatprep.subr.mxu0 0.0
    %2474 = vmatpush1.msra.mxu0 0.0
    %2475 = vmatprep.subr.mxu0 0.0
    %2476 = vmatpush1.msra.mxu0 0.0
    %2477 = vmatprep.subr.mxu0 0.0
    %2478 = vmatpush1.msra.mxu0 0.0
    %2479 = vmatprep.subr.mxu0 0.0
    %2480 = vmatpush1.msra.mxu0 0.0
    %2481 = vmatprep.subr.mxu0 0.0
    %2482 = vmatpush1.msra.mxu0 0.0
    %2483 = vmatprep.subr.mxu0 0.0
    %2484 = vmatpush1.msra.mxu0 0.0
    %2485 = vmatprep.subr.mxu0 0.0
    %2486 = vmatpush1.msra.mxu0 0.0
    %2487 = vmatprep.subr.mxu0 0.0
    %2488 = vmatpush1.msra.mxu0 0.0
    %2489 = vmatprep.subr.mxu0 0.0
    %2490 = vmatpush1.msra.mxu0 0.0
    %2491 = vmatprep.subr.mxu0 0.0
    %2492 = vmatpush1.msra.mxu0 0.0
    %2493 = vmatprep.subr.mxu0 0.0
    %2494 = vmatpush1.msra.mxu0 0.0
    %2495 = vmatprep.mubr.f32.mxu0 0.0
    %2496 = vmatmul.mubr.f32.gmra.mrb[0].mxu0 %v2379
    %v2497 = vpop.f32.mrb[0].mxu0
    %v2498 = vadd.f32 %v2424, %v2497
    %v2499 = vpop.f32.mrb[0].mxu0
    %v2500 = vadd.f32 %v2428, %v2499
    %2501 = vmatprep.mubr.f32.mxu0 0.0
    %2502 = vmatmul.mubr.f32.gmra.mrb[0].mxu0 %v2380
    %v2503 = vpop.f32.mrb[0].mxu0
    %v2504 = vadd.f32 %v2424, %v2503
    %v2505 = vpop.f32.mrb[0].mxu0
    %v2506 = vadd.f32 %v2428, %v2505
    %2507 = vmatprep.mubr.f32.mxu0 0.0
    %2508 = vmatmul.mubr.f32.gmra.mrb[0].mxu0 %v2381
    %v2509 = vpop.f32.mrb[0].mxu0
    %v2510 = vadd.f32 %v2424, %v2509
    %v2511 = vpop.f32.mrb[0].mxu0
    %v2512 = vadd.f32 %v2428, %v2511
    %2513 = vmatprep.mubr.f32.mxu0 0.0
    %2514 = vmatmul.mubr.f32.gmra.mrb[0].mxu0 %v2382
    %v2515 = vpop.f32.mrb[0].mxu0
    %v2516 = vadd.f32 %v2424, %v2515
    %v2517 = vpop.f32.mrb[0].mxu0
    %v2518 = vadd.f32 %v2428, %v2517
    %2519 = vmatprep.mubr.f32.mxu0 0.0
    %2520 = vmatmul.mubr.f32.gmra.mrb[0].mxu0 %v2383
    %v2521 = vpop.f32.mrb[0].mxu0
    %v2522 = vadd.f32 %v2424, %v2521
    %v2523 = vpop.f32.mrb[0].mxu0
    %v2524 = vadd.f32 %v2428, %v2523
    %2525 = vmatprep.mubr.f32.mxu0 0.0
    %2526 = vmatmul.mubr.f32.gmra.mrb[0].mxu0 %v2384
    %v2527 = vpop.f32.mrb[0].mxu0
    %v2528 = vadd.f32 %v2424, %v2527
    %v2529 = vpop.f32.mrb[0].mxu0
    %v2530 = vadd.f32 %v2428, %v2529
    %2531 = vmatprep.mubr.f32.mxu0 0.0
    %2532 = vmatmul.mubr.f32.gmra.mrb[0].mxu0 %v2385
    %v2533 = vpop.f32.mrb[0].mxu0
    %v2534 = vadd.f32 %v2424, %v2533
    %v2535 = vpop.f32.mrb[0].mxu0
    %v2536 = vadd.f32 %v2428, %v2535
    %2537 = vmatprep.mubr.f32.mxu0 0.0
    %2538 = vmatmul.mubr.f32.gmra.mrb[0].mxu0 %v2386
    %v2539 = vpop.f32.mrb[0].mxu0
    %v2540 = vadd.f32 %v2424, %v2539
    %v2541 = vpop.f32.mrb[0].mxu0
    %v2542 = vadd.f32 %v2428, %v2541
    %2543 = vdwg.mxu0
    %v2544 = vmax.f32 %v2498, 0.0
    %v2545 = vmax.f32 %v2500, 0.0
    %v2546 = vmax.f32 %v2504, 0.0
    %v2547 = vmax.f32 %v2506, 0.0
    %v2548 = vmax.f32 %v2510, 0.0
    %v2549 = vmax.f32 %v2512, 0.0
    %v2550 = vmax.f32 %v2516, 0.0
    %v2551 = vmax.f32 %v2518, 0.0
    %v2552 = vmax.f32 %v2522, 0.0
    %v2553 = vmax.f32 %v2524, 0.0
    %v2554 = vmax.f32 %v2528, 0.0
    %v2555 = vmax.f32 %v2530, 0.0
    %v2556 = vmax.f32 %v2534, 0.0
    %v2557 = vmax.f32 %v2536, 0.0
    %v2558 = vmax.f32 %v2540, 0.0
    %v2559 = vmax.f32 %v2542, 0.0
    %v2560 = vld [vmem:[#allocation11] sm:$0xff]
    %v2561 = vld [vmem:[#allocation11 + $0x8] sm:$0xff]
    %v2562 = vld [vmem:[#allocation11 + $0x10] sm:$0xff]
    %v2563 = vld [vmem:[#allocation11 + $0x18] sm:$0xff]
    %v2564 = vld [vmem:[#allocation11 + $0x20] sm:$0xff]
    %v2565 = vld [vmem:[#allocation11 + $0x28] sm:$0xff]
    %v2566 = vld [vmem:[#allocation11 + $0x30] sm:$0xff]
    %v2567 = vld [vmem:[#allocation11 + $0x38] sm:$0xff]
    %v2568 = vld [vmem:[#allocation11 + $0x40] sm:$0xff]
    %v2569 = vld [vmem:[#allocation11 + $0x48] sm:$0xff]
    %v2570 = vld [vmem:[#allocation11 + $0x50] sm:$0xff]
    %v2571 = vld [vmem:[#allocation11 + $0x58] sm:$0xff]
    %v2572 = vld [vmem:[#allocation11 + $0x60] sm:$0xff]
    %v2573 = vld [vmem:[#allocation11 + $0x68] sm:$0xff]
    %v2574 = vld [vmem:[#allocation11 + $0x70] sm:$0xff]
    %v2575 = vld [vmem:[#allocation11 + $0x78] sm:$0xff]
    %v2576 = vld [vmem:[#allocation11 + $0x80] sm:$0xff]
    %v2577 = vld [vmem:[#allocation11 + $0x88] sm:$0xff]
    %v2578 = vld [vmem:[#allocation11 + $0x90] sm:$0xff]
    %v2579 = vld [vmem:[#allocation11 + $0x98] sm:$0xff]
    %v2580 = vld [vmem:[#allocation11 + $0xa0] sm:$0xff]
    %v2581 = vld [vmem:[#allocation11 + $0xa8] sm:$0xff]
    %v2582 = vld [vmem:[#allocation11 + $0xb0] sm:$0xff]
    %v2583 = vld [vmem:[#allocation11 + $0xb8] sm:$0xff]
    %v2584 = vld [vmem:[#allocation11 + $0xc0] sm:$0xff]
    %v2585 = vld [vmem:[#allocation11 + $0xc8] sm:$0xff]
    %v2586 = vld [vmem:[#allocation11 + $0xd0] sm:$0xff]
    %v2587 = vld [vmem:[#allocation11 + $0xd8] sm:$0xff]
    %v2588 = vld [vmem:[#allocation11 + $0xe0] sm:$0xff]
    %v2589 = vld [vmem:[#allocation11 + $0xe8] sm:$0xff]
    %v2590 = vld [vmem:[#allocation11 + $0xf0] sm:$0xff]
    %v2591 = vld [vmem:[#allocation11 + $0xf8] sm:$0xff]
    %v2592 = vld [vmem:[#allocation11 + $0x100] sm:$0xff]
    %v2593 = vld [vmem:[#allocation11 + $0x108] sm:$0xff]
    %v2594 = vld [vmem:[#allocation11 + $0x110] sm:$0xff]
    %v2595 = vld [vmem:[#allocation11 + $0x118] sm:$0xff]
    %v2596 = vld [vmem:[#allocation11 + $0x120] sm:$0xff]
    %v2597 = vld [vmem:[#allocation11 + $0x128] sm:$0xff]
    %v2598 = vld [vmem:[#allocation11 + $0x130] sm:$0xff]
    %v2599 = vld [vmem:[#allocation11 + $0x138] sm:$0xff]
    %v2600 = vld [vmem:[#allocation11 + $0x140] sm:$0xff]
    %v2601 = vld [vmem:[#allocation11 + $0x148] sm:$0xff]
    %v2602 = vld [vmem:[#allocation11 + $0x150] sm:$0xff]
    %v2603 = vld [vmem:[#allocation11 + $0x158] sm:$0xff]
    %v2604 = vld [vmem:[#allocation11 + $0x160] sm:$0xff]
    %v2605 = vld [vmem:[#allocation11 + $0x168] sm:$0xff]
    %v2606 = vld [vmem:[#allocation11 + $0x170] sm:$0xff]
    %v2607 = vld [vmem:[#allocation11 + $0x178] sm:$0xff]
    %v2608 = vld [vmem:[#allocation11 + $0x180] sm:$0xff]
    %v2609 = vld [vmem:[#allocation11 + $0x188] sm:$0xff]
    %v2610 = vld [vmem:[#allocation11 + $0x190] sm:$0xff]
    %v2611 = vld [vmem:[#allocation11 + $0x198] sm:$0xff]
    %v2612 = vld [vmem:[#allocation11 + $0x1a0] sm:$0xff]
    %v2613 = vld [vmem:[#allocation11 + $0x1a8] sm:$0xff]
    %v2614 = vld [vmem:[#allocation11 + $0x1b0] sm:$0xff]
    %v2615 = vld [vmem:[#allocation11 + $0x1b8] sm:$0xff]
    %v2616 = vld [vmem:[#allocation11 + $0x1c0] sm:$0xff]
    %v2617 = vld [vmem:[#allocation11 + $0x1c8] sm:$0xff]
    %v2618 = vld [vmem:[#allocation11 + $0x1d0] sm:$0xff]
    %v2619 = vld [vmem:[#allocation11 + $0x1d8] sm:$0xff]
    %v2620 = vld [vmem:[#allocation11 + $0x1e0] sm:$0xff]
    %v2621 = vld [vmem:[#allocation11 + $0x1e8] sm:$0xff]
    %v2622 = vld [vmem:[#allocation11 + $0x1f0] sm:$0xff]
    %v2623 = vld [vmem:[#allocation11 + $0x1f8] sm:$0xff]
    %v2624 = vld [vmem:[%s9] sm:$0x3]
    %v2626 = vlaneseq
    %v2627 = vshrl.u32 %v2626, 7
    %v2628 = vsub.s32 0, %v2627
    %v2629 = vrot.slane %v2624, %v2628
    %v2630 = vlaneseq
    %v2631 = vshrl.u32 %v2630, 7
    %v2632 = vsub.s32 1, %v2631
    %v2633 = vrot.slane %v2624, %v2632
    %2636 = vmatprep.subr.mxu0 %v2561
    %2637 = vmatpush1.msra.mxu0 %v2560
    %2638 = vmatprep.subr.mxu0 %v2563
    %2639 = vmatpush1.msra.mxu0 %v2562
    %2640 = vmatprep.subr.mxu0 %v2565
    %2641 = vmatpush1.msra.mxu0 %v2564
    %2642 = vmatprep.subr.mxu0 %v2567
    %2643 = vmatpush1.msra.mxu0 %v2566
    %2644 = vmatprep.subr.mxu0 %v2569
    %2645 = vmatpush1.msra.mxu0 %v2568
    %2646 = vmatprep.subr.mxu0 %v2571
    %2647 = vmatpush1.msra.mxu0 %v2570
    %2648 = vmatprep.subr.mxu0 %v2573
    %2649 = vmatpush1.msra.mxu0 %v2572
    %2650 = vmatprep.subr.mxu0 %v2575
    %2651 = vmatpush1.msra.mxu0 %v2574
    %2652 = vmatprep.subr.mxu0 %v2577
    %2653 = vmatpush1.msra.mxu0 %v2576
    %2654 = vmatprep.subr.mxu0 %v2579
    %2655 = vmatpush1.msra.mxu0 %v2578
    %2656 = vmatprep.subr.mxu0 %v2581
    %2657 = vmatpush1.msra.mxu0 %v2580
    %2658 = vmatprep.subr.mxu0 %v2583
    %2659 = vmatpush1.msra.mxu0 %v2582
    %2660 = vmatprep.subr.mxu0 %v2585
    %2661 = vmatpush1.msra.mxu0 %v2584
    %2662 = vmatprep.subr.mxu0 %v2587
    %2663 = vmatpush1.msra.mxu0 %v2586
    %2664 = vmatprep.subr.mxu0 %v2589
    %2665 = vmatpush1.msra.mxu0 %v2588
    %2666 = vmatprep.subr.mxu0 %v2591
    %2667 = vmatpush1.msra.mxu0 %v2590
    %2668 = vmatprep.subr.mxu0 %v2593
    %2669 = vmatpush1.msra.mxu0 %v2592
    %2670 = vmatprep.subr.mxu0 %v2595
    %2671 = vmatpush1.msra.mxu0 %v2594
    %2672 = vmatprep.subr.mxu0 %v2597
    %2673 = vmatpush1.msra.mxu0 %v2596
    %2674 = vmatprep.subr.mxu0 %v2599
    %2675 = vmatpush1.msra.mxu0 %v2598
    %2676 = vmatprep.subr.mxu0 %v2601
    %2677 = vmatpush1.msra.mxu0 %v2600
    %2678 = vmatprep.subr.mxu0 %v2603
    %2679 = vmatpush1.msra.mxu0 %v2602
    %2680 = vmatprep.subr.mxu0 %v2605
    %2681 = vmatpush1.msra.mxu0 %v2604
    %2682 = vmatprep.subr.mxu0 %v2607
    %2683 = vmatpush1.msra.mxu0 %v2606
    %2684 = vmatprep.subr.mxu0 %v2609
    %2685 = vmatpush1.msra.mxu0 %v2608
    %2686 = vmatprep.subr.mxu0 %v2611
    %2687 = vmatpush1.msra.mxu0 %v2610
    %2688 = vmatprep.subr.mxu0 %v2613
    %2689 = vmatpush1.msra.mxu0 %v2612
    %2690 = vmatprep.subr.mxu0 %v2615
    %2691 = vmatpush1.msra.mxu0 %v2614
    %2692 = vmatprep.subr.mxu0 %v2617
    %2693 = vmatpush1.msra.mxu0 %v2616
    %2694 = vmatprep.subr.mxu0 %v2619
    %2695 = vmatpush1.msra.mxu0 %v2618
    %2696 = vmatprep.subr.mxu0 %v2621
    %2697 = vmatpush1.msra.mxu0 %v2620
    %2698 = vmatprep.subr.mxu0 %v2623
    %2699 = vmatpush1.msra.mxu0 %v2622
    %2700 = vmatprep.mubr.f32.mxu0 %v2545
    %2701 = vmatmul.mubr.f32.gmra.mrb[0].mxu0 %v2544
    %v2702 = vpop.f32.mrb[0].mxu0
    %v2703 = vadd.f32 %v2629, %v2702
    %v2704 = vpop.f32.mrb[0].mxu0
    %v2705 = vadd.f32 %v2633, %v2704
    %2706 = vmatprep.mubr.f32.mxu0 %v2547
    %2707 = vmatmul.mubr.f32.gmra.mrb[0].mxu0 %v2546
    %v2708 = vpop.f32.mrb[0].mxu0
    %v2709 = vadd.f32 %v2629, %v2708
    %v2710 = vpop.f32.mrb[0].mxu0
    %v2711 = vadd.f32 %v2633, %v2710
    %2712 = vmatprep.mubr.f32.mxu0 %v2549
    %2713 = vmatmul.mubr.f32.gmra.mrb[0].mxu0 %v2548
    %v2714 = vpop.f32.mrb[0].mxu0
    %v2715 = vadd.f32 %v2629, %v2714
    %v2716 = vpop.f32.mrb[0].mxu0
    %v2717 = vadd.f32 %v2633, %v2716
    %2718 = vmatprep.mubr.f32.mxu0 %v2551
    %2719 = vmatmul.mubr.f32.gmra.mrb[0].mxu0 %v2550
    %v2720 = vpop.f32.mrb[0].mxu0
    %v2721 = vadd.f32 %v2629, %v2720
    %v2722 = vpop.f32.mrb[0].mxu0
    %v2723 = vadd.f32 %v2633, %v2722
    %2724 = vmatprep.mubr.f32.mxu0 %v2553
    %2725 = vmatmul.mubr.f32.gmra.mrb[0].mxu0 %v2552
    %v2726 = vpop.f32.mrb[0].mxu0
    %v2727 = vadd.f32 %v2629, %v2726
    %v2728 = vpop.f32.mrb[0].mxu0
    %v2729 = vadd.f32 %v2633, %v2728
    %2730 = vmatprep.mubr.f32.mxu0 %v2555
    %2731 = vmatmul.mubr.f32.gmra.mrb[0].mxu0 %v2554
    %v2732 = vpop.f32.mrb[0].mxu0
    %v2733 = vadd.f32 %v2629, %v2732
    %v2734 = vpop.f32.mrb[0].mxu0
    %v2735 = vadd.f32 %v2633, %v2734
    %2736 = vmatprep.mubr.f32.mxu0 %v2557
    %2737 = vmatmul.mubr.f32.gmra.mrb[0].mxu0 %v2556
    %v2738 = vpop.f32.mrb[0].mxu0
    %v2739 = vadd.f32 %v2629, %v2738
    %v2740 = vpop.f32.mrb[0].mxu0
    %v2741 = vadd.f32 %v2633, %v2740
    %2742 = vmatprep.mubr.f32.mxu0 %v2559
    %2743 = vmatmul.mubr.f32.gmra.mrb[0].mxu0 %v2558
    %v2744 = vpop.f32.mrb[0].mxu0
    %v2745 = vadd.f32 %v2629, %v2744
    %v2746 = vpop.f32.mrb[0].mxu0
    %v2747 = vadd.f32 %v2633, %v2746
    %2748 = vdwg.mxu0
    %v2749 = vmax.f32 %v2703, 0.0
    %v2750 = vmax.f32 %v2705, 0.0
    %v2751 = vmax.f32 %v2709, 0.0
    %v2752 = vmax.f32 %v2711, 0.0
    %v2753 = vmax.f32 %v2715, 0.0
    %v2754 = vmax.f32 %v2717, 0.0
    %v2755 = vmax.f32 %v2721, 0.0
    %v2756 = vmax.f32 %v2723, 0.0
    %v2757 = vmax.f32 %v2727, 0.0
    %v2758 = vmax.f32 %v2729, 0.0
    %v2759 = vmax.f32 %v2733, 0.0
    %v2760 = vmax.f32 %v2735, 0.0
    %v2761 = vmax.f32 %v2739, 0.0
    %v2762 = vmax.f32 %v2741, 0.0
    %v2763 = vmax.f32 %v2745, 0.0
    %v2764 = vmax.f32 %v2747, 0.0
    %v2765 = vld [vmem:[#allocation12] sm:$0xff]
    %v2766 = vld [vmem:[#allocation12 + $0x8] sm:$0xff]
    %v2767 = vld [vmem:[#allocation12 + $0x10] sm:$0xff]
    %v2768 = vld [vmem:[#allocation12 + $0x18] sm:$0xff]
    %v2769 = vld [vmem:[#allocation12 + $0x20] sm:$0xff]
    %v2770 = vld [vmem:[#allocation12 + $0x28] sm:$0xff]
    %v2771 = vld [vmem:[#allocation12 + $0x30] sm:$0xff]
    %v2772 = vld [vmem:[#allocation12 + $0x38] sm:$0xff]
    %v2773 = vld [vmem:[#allocation12 + $0x40] sm:$0xff]
    %v2774 = vld [vmem:[#allocation12 + $0x48] sm:$0xff]
    %v2775 = vld [vmem:[#allocation12 + $0x50] sm:$0xff]
    %v2776 = vld [vmem:[#allocation12 + $0x58] sm:$0xff]
    %v2777 = vld [vmem:[#allocation12 + $0x60] sm:$0xff]
    %v2778 = vld [vmem:[#allocation12 + $0x68] sm:$0xff]
    %v2779 = vld [vmem:[#allocation12 + $0x70] sm:$0xff]
    %v2780 = vld [vmem:[#allocation12 + $0x78] sm:$0xff]
    %v2781 = vld [vmem:[#allocation12 + $0x80] sm:$0xff]
    %v2782 = vld [vmem:[#allocation12 + $0x88] sm:$0xff]
    %v2783 = vld [vmem:[#allocation12 + $0x90] sm:$0xff]
    %v2784 = vld [vmem:[#allocation12 + $0x98] sm:$0xff]
    %v2785 = vld [vmem:[#allocation12 + $0xa0] sm:$0xff]
    %v2786 = vld [vmem:[#allocation12 + $0xa8] sm:$0xff]
    %v2787 = vld [vmem:[#allocation12 + $0xb0] sm:$0xff]
    %v2788 = vld [vmem:[#allocation12 + $0xb8] sm:$0xff]
    %v2789 = vld [vmem:[#allocation12 + $0xc0] sm:$0xff]
    %v2790 = vld [vmem:[#allocation12 + $0xc8] sm:$0xff]
    %v2791 = vld [vmem:[#allocation12 + $0xd0] sm:$0xff]
    %v2792 = vld [vmem:[#allocation12 + $0xd8] sm:$0xff]
    %v2793 = vld [vmem:[#allocation12 + $0xe0] sm:$0xff]
    %v2794 = vld [vmem:[#allocation12 + $0xe8] sm:$0xff]
    %v2795 = vld [vmem:[#allocation12 + $0xf0] sm:$0xff]
    %v2796 = vld [vmem:[#allocation12 + $0xf8] sm:$0xff]
    %v2797 = vld [vmem:[%s11] sm:$0x1]
    %v2799 = vlaneseq
    %v2800 = vshrl.u32 %v2799, 7
    %v2801 = vsub.s32 0, %v2800
    %v2802 = vrot.slane %v2797, %v2801
    %2804 = vmatprep.subr.mxu0 0.0
    %2805 = vmatpush1.msra.mxu0 %v2765
    %2806 = vmatprep.subr.mxu0 0.0
    %2807 = vmatpush1.msra.mxu0 %v2766
    %2808 = vmatprep.subr.mxu0 0.0
    %2809 = vmatpush1.msra.mxu0 %v2767
    %2810 = vmatprep.subr.mxu0 0.0
    %2811 = vmatpush1.msra.mxu0 %v2768
    %2812 = vmatprep.subr.mxu0 0.0
    %2813 = vmatpush1.msra.mxu0 %v2769
    %2814 = vmatprep.subr.mxu0 0.0
    %2815 = vmatpush1.msra.mxu0 %v2770
    %2816 = vmatprep.subr.mxu0 0.0
    %2817 = vmatpush1.msra.mxu0 %v2771
    %2818 = vmatprep.subr.mxu0 0.0
    %2819 = vmatpush1.msra.mxu0 %v2772
    %2820 = vmatprep.subr.mxu0 0.0
    %2821 = vmatpush1.msra.mxu0 %v2773
    %2822 = vmatprep.subr.mxu0 0.0
    %2823 = vmatpush1.msra.mxu0 %v2774
    %2824 = vmatprep.subr.mxu0 0.0
    %2825 = vmatpush1.msra.mxu0 %v2775
    %2826 = vmatprep.subr.mxu0 0.0
    %2827 = vmatpush1.msra.mxu0 %v2776
    %2828 = vmatprep.subr.mxu0 0.0
    %2829 = vmatpush1.msra.mxu0 %v2777
    %2830 = vmatprep.subr.mxu0 0.0
    %2831 = vmatpush1.msra.mxu0 %v2778
    %2832 = vmatprep.subr.mxu0 0.0
    %2833 = vmatpush1.msra.mxu0 %v2779
    %2834 = vmatprep.subr.mxu0 0.0
    %2835 = vmatpush1.msra.mxu0 %v2780
    %2836 = vmatprep.subr.mxu0 0.0
    %2837 = vmatpush1.msra.mxu0 %v2781
    %2838 = vmatprep.subr.mxu0 0.0
    %2839 = vmatpush1.msra.mxu0 %v2782
    %2840 = vmatprep.subr.mxu0 0.0
    %2841 = vmatpush1.msra.mxu0 %v2783
    %2842 = vmatprep.subr.mxu0 0.0
    %2843 = vmatpush1.msra.mxu0 %v2784
    %2844 = vmatprep.subr.mxu0 0.0
    %2845 = vmatpush1.msra.mxu0 %v2785
    %2846 = vmatprep.subr.mxu0 0.0
    %2847 = vmatpush1.msra.mxu0 %v2786
    %2848 = vmatprep.subr.mxu0 0.0
    %2849 = vmatpush1.msra.mxu0 %v2787
    %2850 = vmatprep.subr.mxu0 0.0
    %2851 = vmatpush1.msra.mxu0 %v2788
    %2852 = vmatprep.subr.mxu0 0.0
    %2853 = vmatpush1.msra.mxu0 %v2789
    %2854 = vmatprep.subr.mxu0 0.0
    %2855 = vmatpush1.msra.mxu0 %v2790
    %2856 = vmatprep.subr.mxu0 0.0
    %2857 = vmatpush1.msra.mxu0 %v2791
    %2858 = vmatprep.subr.mxu0 0.0
    %2859 = vmatpush1.msra.mxu0 %v2792
    %2860 = vmatprep.subr.mxu0 0.0
    %2861 = vmatpush1.msra.mxu0 %v2793
    %2862 = vmatprep.subr.mxu0 0.0
    %2863 = vmatpush1.msra.mxu0 %v2794
    %2864 = vmatprep.subr.mxu0 0.0
    %2865 = vmatpush1.msra.mxu0 %v2795
    %2866 = vmatprep.subr.mxu0 0.0
    %2867 = vmatpush1.msra.mxu0 %v2796
    %2868 = vmatprep.mubr.f32.mxu0 %v2750
    %2869 = vmatmul.mubr.f32.gmra.mrb[0].mxu0 %v2749
    %v2870 = vpop.f32.mrb[0].mxu0
    %v2871 = vadd.f32 %v2802, %v2870
    %v2872 = vpop.f32.mrb[0].mxu0
    %2873 = vmatprep.mubr.f32.mxu0 %v2752
    %2874 = vmatmul.mubr.f32.gmra.mrb[0].mxu0 %v2751
    %v2875 = vpop.f32.mrb[0].mxu0
    %v2876 = vadd.f32 %v2802, %v2875
    %v2877 = vpop.f32.mrb[0].mxu0
    %2878 = vmatprep.mubr.f32.mxu0 %v2754
    %2879 = vmatmul.mubr.f32.gmra.mrb[0].mxu0 %v2753
    %v2880 = vpop.f32.mrb[0].mxu0
    %v2881 = vadd.f32 %v2802, %v2880
    %v2882 = vpop.f32.mrb[0].mxu0
    %2883 = vmatprep.mubr.f32.mxu0 %v2756
    %2884 = vmatmul.mubr.f32.gmra.mrb[0].mxu0 %v2755
    %v2885 = vpop.f32.mrb[0].mxu0
    %v2886 = vadd.f32 %v2802, %v2885
    %v2887 = vpop.f32.mrb[0].mxu0
    %2888 = vmatprep.mubr.f32.mxu0 %v2758
    %2889 = vmatmul.mubr.f32.gmra.mrb[0].mxu0 %v2757
    %v2890 = vpop.f32.mrb[0].mxu0
    %v2891 = vadd.f32 %v2802, %v2890
    %v2892 = vpop.f32.mrb[0].mxu0
    %2893 = vmatprep.mubr.f32.mxu0 %v2760
    %2894 = vmatmul.mubr.f32.gmra.mrb[0].mxu0 %v2759
    %v2895 = vpop.f32.mrb[0].mxu0
    %v2896 = vadd.f32 %v2802, %v2895
    %v2897 = vpop.f32.mrb[0].mxu0
    %2898 = vmatprep.mubr.f32.mxu0 %v2762
    %2899 = vmatmul.mubr.f32.gmra.mrb[0].mxu0 %v2761
    %v2900 = vpop.f32.mrb[0].mxu0
    %v2901 = vadd.f32 %v2802, %v2900
    %v2902 = vpop.f32.mrb[0].mxu0
    %2903 = vmatprep.mubr.f32.mxu0 %v2764
    %2904 = vmatmul.mubr.f32.gmra.mrb[0].mxu0 %v2763
    %v2905 = vpop.f32.mrb[0].mxu0
    %v2906 = vadd.f32 %v2802, %v2905
    %v2907 = vpop.f32.mrb[0].mxu0
    %2908 = vdwg.mxu0
    %2909 = vst [vmem:[#allocation14] sm:$0xff] %v2871
    %2910 = vst [vmem:[#allocation14 + $0x8] sm:$0xff] %v2876
    %2911 = vst [vmem:[#allocation14 + $0x10] sm:$0xff] %v2881
    %2912 = vst [vmem:[#allocation14 + $0x18] sm:$0xff] %v2886
    %2913 = vst [vmem:[#allocation14 + $0x20] sm:$0xff] %v2891
    %2914 = vst [vmem:[#allocation14 + $0x28] sm:$0xff] %v2896
    %2915 = vst [vmem:[#allocation14 + $0x30] sm:$0xff] %v2901
    %2916 = vst [vmem:[#allocation14 + $0x38] sm:$0xff] %v2906
    // Predicated region
    $region70: #{tpu_custom_call.1} parent=1 // pred_check
      _
    $region71: #{tpu_custom_call.1} parent=1 // pred_check_branch
      %2918 = sbr.rel (0) target = $region73
    $region72: #{tpu_custom_call.1} parent=1 // pred_region
      %s2920 = ssub.s32 1024, 1024
      %2921 = vsyncadd [#allocation8], %s2920
      %s2922 = sshll.u32 [#allocation14], 4
      %s2923 = int_to_ptr.vmem [resolvable:$true] %s2922
      %2928 = dma.vmem_to_hbm [thread:$0]  %s2923, 1024, %s12, [#allocation8], 128, 128, 8
    $region73: #{tpu_custom_call.1} parent=1 // pred_fallthru
      _
    // Predicated region
    $region74: #{tpu_custom_call.1} parent=1 // pred_check
      _
    $region75: #{tpu_custom_call.1} parent=1 // pred_check_branch
      %2930 = sbr.rel (0) target = $region77
    $region76: #{tpu_custom_call.1} parent=1 // pred_region
      %s2932 = ssub.s32 128, 128
      %2933 = vsyncadd [#allocation16], %s2932
      %s2935 = sshll.u32 [#allocation15], 4
      %s2936 = int_to_ptr.vmem [resolvable:$true] %s2935
      %2938 = dma.vmem_to_hbm [thread:$0]  %s2936, 128, %s13, [#allocation16]
    $region77: #{tpu_custom_call.1} parent=1 // pred_fallthru
      _
    // Predicated region
    $region78: #{tpu_custom_call.1} parent=1 // pred_check
      _
    $region79: #{tpu_custom_call.1} parent=1 // pred_check_branch
      %2940 = sbr.rel (0) target = $region81
    $region80: #{tpu_custom_call.1} parent=1 // pred_region
      %s2942 = ssub.s32 128, 128
      %2943 = vsyncadd [#allocation16], %s2942
      %s2945 = sshll.u32 [#allocation17], 4
      %s2946 = int_to_ptr.vmem [resolvable:$true] %s2945
      %2948 = dma.vmem_to_hbm [thread:$0]  %s2946, 128, %s14, [#allocation16]
    $region81: #{tpu_custom_call.1} parent=1 // pred_fallthru
      _
    // Predicated region
    $region82: #{tpu_custom_call.1} parent=1 // pred_check
      _
    $region83: #{tpu_custom_call.1} parent=1 // pred_check_branch
      %2950 = sbr.rel (0) target = $region85
    $region84: #{tpu_custom_call.1} parent=1 // pred_region
      %2951 = dma.done [#allocation8], 1024
    $region85: #{tpu_custom_call.1} parent=1 // pred_fallthru
      _
    // Predicated region
    $region86: #{tpu_custom_call.1} parent=1 // pred_check
      _
    $region87: #{tpu_custom_call.1} parent=1 // pred_check_branch
      %2953 = sbr.rel (0) target = $region89
    $region88: #{tpu_custom_call.1} parent=1 // pred_region
      %2954 = dma.done [#allocation16], 128
    $region89: #{tpu_custom_call.1} parent=1 // pred_fallthru
      _
    // Predicated region
    $region90: #{tpu_custom_call.1} parent=1 // pred_check
      _
    $region91: #{tpu_custom_call.1} parent=1 // pred_check_branch
      %2956 = sbr.rel (0) target = $region93
    $region92: #{tpu_custom_call.1} parent=1 // pred_region
      %2957 = dma.done [#allocation16], 128
    $region93: #{tpu_custom_call.1} parent=1 // pred_fallthru
      _
    %2958 = vsyncpa [#allocation7], 1
    %2959 = vsyncpa [#allocation10], 1
    %2960 = vsyncpa [#allocation13], 1
    %2961 = vsyncpa [#allocation8], 1
    %2962 = vsyncpa [#allocation16], 1

</llo_original>
